<compile_context>
chip_gen: v7x
topology: tpu7x:2x2x1
jax: 0.10.0
libtpu: 0.0.40
codegen_flags: <defaults>
</compile_context>

<pallas_src>
import functools
import math

import jax
import jax.numpy as jnp
from jax.experimental import pallas as pl
from jax.experimental.pallas import tpu as pltpu


# --------------------------------------------------------------------------------------
# Fused DiT block kernel (one batch element per grid step; all tensors live in VMEM).
# --------------------------------------------------------------------------------------
def _dit1d_block_kernel(c_ref, x_ref, w_ada_ref, b_ada_ref,
                        w_qkv_ref, b_qkv_ref, w_out_ref, b_out_ref,
                        w1_ref, b1_ref, w2_ref, b2_ref,
                        o_ref, *, num_heads, eps):
    T, D = x_ref.shape
    dh = D // num_heads
    f32 = jnp.float32

    x = x_ref[...].astype(f32)          # (T, D)
    c = c_ref[...].astype(f32)          # (1, D)

    # ---- adaLN-Zero modulation: Linear(SiLU(c)) -> six (1, D) vectors ----
    silu_c = c * jax.nn.sigmoid(c)
    mod = jnp.dot(silu_c, w_ada_ref[...], preferred_element_type=f32) + b_ada_ref[...]  # (1, 6D)
    shift_msa = mod[:, 0 * D:1 * D]
    scale_msa = mod[:, 1 * D:2 * D]
    gate_msa = mod[:, 2 * D:3 * D]
    shift_mlp = mod[:, 3 * D:4 * D]
    scale_mlp = mod[:, 4 * D:5 * D]
    gate_mlp = mod[:, 5 * D:6 * D]

    def layer_norm(t):
        mu = jnp.mean(t, axis=-1, keepdims=True)
        var = jnp.mean(jnp.square(t - mu), axis=-1, keepdims=True)
        return (t - mu) * jax.lax.rsqrt(var + eps)

    # ---- attention branch ----
    h1 = layer_norm(x) * (1.0 + scale_msa) + shift_msa                                   # (T, D)
    qkv = jnp.dot(h1, w_qkv_ref[...], preferred_element_type=f32) + b_qkv_ref[...]       # (T, 3D)
    q = qkv[:, 0 * D:1 * D]
    k = qkv[:, 1 * D:2 * D]
    v = qkv[:, 2 * D:3 * D]

    inv_sqrt_dh = 1.0 / math.sqrt(dh)
    attn_out = jnp.zeros((T, D), f32)
    for h in range(num_heads):                       # static unroll over heads
        qh = q[:, h * dh:(h + 1) * dh] * inv_sqrt_dh
        kh = k[:, h * dh:(h + 1) * dh]
        vh = v[:, h * dh:(h + 1) * dh]
        # scores = qh @ kh^T  (contract the head dim directly, no explicit transpose)
        s = jax.lax.dot_general(qh, kh, (((1,), (1,)), ((), ())),
                                preferred_element_type=f32)                               # (T, T)
        s = s - jnp.max(s, axis=-1, keepdims=True)
        p = jnp.exp(s)
        p = p / jnp.sum(p, axis=-1, keepdims=True)
        ctx_h = jnp.dot(p, vh, preferred_element_type=f32)                                # (T, dh)
        # Fold the output projection into the per-head loop (avoids a lane-dim concat).
        attn_out = attn_out + jnp.dot(ctx_h, w_out_ref[h * dh:(h + 1) * dh, :],
                                      preferred_element_type=f32)
    attn_out = attn_out + b_out_ref[...]
    x = x + gate_msa * attn_out

    # ---- MLP branch ----
    h2 = layer_norm(x) * (1.0 + scale_mlp) + shift_mlp                                    # (T, D)
    m = jnp.dot(h2, w1_ref[...], preferred_element_type=f32) + b1_ref[...]                # (T, H)
    m = 0.5 * m * (1.0 + jnp.tanh(math.sqrt(2.0 / math.pi) * (m + 0.044715 * m * m * m)))  # GELU(tanh)
    m = jnp.dot(m, w2_ref[...], preferred_element_type=f32) + b2_ref[...]                 # (T, D)
    x = x + gate_mlp * m

    o_ref[...] = x.astype(o_ref.dtype)


# --------------------------------------------------------------------------------------
# Wrapper: builds BlockSpecs and calls the fused kernel.
# Weights are stored pre-transposed so every in-kernel matmul is (rows, K) @ (K, cols);
# biases are (1, N) so they broadcast over the sequence axis.
# --------------------------------------------------------------------------------------
def dit1d_block(x, c, params, *, num_heads, eps=1e-6):
    B, T, D = x.shape
    assert c.shape == (B, D)
    assert D % num_heads == 0

    kernel = functools.partial(_dit1d_block_kernel, num_heads=num_heads, eps=eps)

    def full_spec(a):
        nd = a.ndim
        return pl.BlockSpec(a.shape, lambda b, _nd=nd: (0,) * _nd)   # constant block -> DMA'd once

    weights = (params["w_ada"], params["b_ada"], params["w_qkv"], params["b_qkv"],
               params["w_out"], params["b_out"], params["w1"], params["b1"],
               params["w2"], params["b2"])

    # Reshape c to (B, 1, D) so its block's last-two-dims equal the full array dims
    # (keeps the (8,128) block-divisibility rule satisfied for any B).
    c3 = c.reshape(B, 1, D)

    in_specs = [
        pl.BlockSpec((None, 1, D), lambda b: (b, 0, 0)),   # c: one conditioning row per step
        pl.BlockSpec((None, T, D), lambda b: (b, 0, 0)),   # x: one batch element per step
    ] + [full_spec(w) for w in weights]

    return pl.pallas_call(
        kernel,
        out_shape=jax.ShapeDtypeStruct((B, T, D), x.dtype),
        grid_spec=pltpu.PrefetchScalarGridSpec(
            num_scalar_prefetch=0,
            grid=(B,),
            in_specs=in_specs,
            out_specs=pl.BlockSpec((None, T, D), lambda b: (b, 0, 0)),
        ),
        compiler_params=pltpu.CompilerParams(
            dimension_semantics=("parallel",),   # batch axis: shardable across v7x TensorCores
        ),
    )(c3, x, *weights)


# --------------------------------------------------------------------------------------
# Pure-JAX reference (PyTorch semantics: LayerNorm eps=1e-6 no affine, MHA eval mode,
# GELU tanh approx, adaLN-Zero gating).
# --------------------------------------------------------------------------------------
def _dit1d_block_reference(x, c, params, *, num_heads, eps=1e-6):
    P = jax.lax.Precision.HIGHEST
    B, T, D = x.shape
    dh = D // num_heads

    mod = jnp.dot(jax.nn.silu(c), params["w_ada"], precision=P) + params["b_ada"]
    shift_msa, scale_msa, gate_msa, shift_mlp, scale_mlp, gate_mlp = jnp.split(mod, 6, axis=-1)

    def ln(t):
        mu = t.mean(-1, keepdims=True)
        var = ((t - mu) ** 2).mean(-1, keepdims=True)
        return (t - mu) / jnp.sqrt(var + eps)

    def modulate(t, shift, scale):
        return t * (1.0 + scale[:, None, :]) + shift[:, None, :]

    h1 = modulate(ln(x), shift_msa, scale_msa)
    qkv = jnp.einsum("btd,de->bte", h1, params["w_qkv"], precision=P) + params["b_qkv"]
    q, k, v = jnp.split(qkv, 3, axis=-1)
    q = q.reshape(B, T, num_heads, dh).transpose(0, 2, 1, 3)
    k = k.reshape(B, T, num_heads, dh).transpose(0, 2, 1, 3)
    v = v.reshape(B, T, num_heads, dh).transpose(0, 2, 1, 3)
    s = jnp.einsum("bhqd,bhkd->bhqk", q, k, precision=P) / math.sqrt(dh)
    p = jax.nn.softmax(s, axis=-1)
    ctx = jnp.einsum("bhqk,bhkd->bhqd", p, v, precision=P)
    ctx = ctx.transpose(0, 2, 1, 3).reshape(B, T, D)
    attn_out = jnp.einsum("btd,de->bte", ctx, params["w_out"], precision=P) + params["b_out"]
    x = x + gate_msa[:, None, :] * attn_out

    h2 = modulate(ln(x), shift_mlp, scale_mlp)
    m = jnp.einsum("btd,dh->bth", h2, params["w1"], precision=P) + params["b1"]
    m = 0.5 * m * (1.0 + jnp.tanh(math.sqrt(2.0 / math.pi) * (m + 0.044715 * m ** 3)))
    m = jnp.einsum("bth,hd->btd", m, params["w2"], precision=P) + params["b2"]
    return x + gate_mlp[:, None, :] * m


if __name__ == "__main__":
    # Small but lane-dense shapes: hidden=128 (multiple of 128), seq=16 (multiple of 8).
    B, T, D = 2, 16, 128
    NUM_HEADS = 4          # head_dim = 32
    MLP_RATIO = 4.0
    H = int(D * MLP_RATIO)

    key = jax.random.PRNGKey(0)
    ks = jax.random.split(key, 12)

    def w_init(k, shape, fan_in):
        return jax.random.normal(k, shape, jnp.float32) / math.sqrt(fan_in)

    x = jax.random.normal(ks[0], (B, T, D), jnp.float32)
    c = jax.random.normal(ks[1], (B, D), jnp.float32)

    params = dict(
        w_ada=w_init(ks[2], (D, 6 * D), D),
        b_ada=0.02 * jax.random.normal(ks[3], (1, 6 * D), jnp.float32),
        w_qkv=w_init(ks[4], (D, 3 * D), D),
        b_qkv=0.02 * jax.random.normal(ks[5], (1, 3 * D), jnp.float32),
        w_out=w_init(ks[6], (D, D), D),
        b_out=0.02 * jax.random.normal(ks[7], (1, D), jnp.float32),
        w1=w_init(ks[8], (D, H), D),
        b1=0.02 * jax.random.normal(ks[9], (1, H), jnp.float32),
        w2=w_init(ks[10], (H, D), H),
        b2=0.02 * jax.random.normal(ks[11], (1, D), jnp.float32),
    )

    out = dit1d_block(x, c, params, num_heads=NUM_HEADS)
    out = jax.block_until_ready(out)

    ref = jax.block_until_ready(_dit1d_block_reference(x, c, params, num_heads=NUM_HEADS))

    assert out.shape == (B, T, D)
    max_err = float(jnp.max(jnp.abs(out - ref)))
    assert jnp.allclose(out, ref, atol=2e-3, rtol=2e-3), f"mismatch vs reference: max abs err {max_err}"

    print("KERNEL_OK")
</pallas_src>

<mosaic_0001>
module attributes {stable_mosaic.version = 11 : i64} {
  func.func @_dit1d_block_kernel(%arg0: i32, %arg1: memref<1x1x128xf32, #tpu.memory_space<vmem>>, %arg2: memref<1x16x128xf32, #tpu.memory_space<vmem>>, %arg3: memref<128x768xf32, #tpu.memory_space<vmem>>, %arg4: memref<1x768xf32, #tpu.memory_space<vmem>>, %arg5: memref<128x384xf32, #tpu.memory_space<vmem>>, %arg6: memref<1x384xf32, #tpu.memory_space<vmem>>, %arg7: memref<128x128xf32, #tpu.memory_space<vmem>>, %arg8: memref<1x128xf32, #tpu.memory_space<vmem>>, %arg9: memref<128x512xf32, #tpu.memory_space<vmem>>, %arg10: memref<1x512xf32, #tpu.memory_space<vmem>>, %arg11: memref<512x128xf32, #tpu.memory_space<vmem>>, %arg12: memref<1x128xf32, #tpu.memory_space<vmem>>, %arg13: memref<1x16x128xf32, #tpu.memory_space<vmem>>) attributes {dimension_semantics = [#tpu.dimension_semantics<parallel>], iteration_bounds = array<i64: 2>, scalar_prefetch = 0 : i64, scratch_operands = 0 : i64, tpu.core_type = #tpu.core_type<tc>, window_params = [{transform_indices = @transform_0, window_bounds = array<i64: 1, 1, 128>}, {transform_indices = @transform_1, window_bounds = array<i64: 1, 16, 128>}, {pipeline_mode = #tpu.pipeline_mode<synchronous>, transform_indices = @transform_2, window_bounds = array<i64: 128, 768>}, {pipeline_mode = #tpu.pipeline_mode<synchronous>, transform_indices = @transform_3, window_bounds = array<i64: 1, 768>}, {pipeline_mode = #tpu.pipeline_mode<synchronous>, transform_indices = @transform_4, window_bounds = array<i64: 128, 384>}, {pipeline_mode = #tpu.pipeline_mode<synchronous>, transform_indices = @transform_5, window_bounds = array<i64: 1, 384>}, {pipeline_mode = #tpu.pipeline_mode<synchronous>, transform_indices = @transform_6, window_bounds = array<i64: 128, 128>}, {pipeline_mode = #tpu.pipeline_mode<synchronous>, transform_indices = @transform_7, window_bounds = array<i64: 1, 128>}, {pipeline_mode = #tpu.pipeline_mode<synchronous>, transform_indices = @transform_8, window_bounds = array<i64: 128, 512>}, {pipeline_mode = #tpu.pipeline_mode<synchronous>, transform_indices = @transform_9, window_bounds = array<i64: 1, 512>}, {pipeline_mode = #tpu.pipeline_mode<synchronous>, transform_indices = @transform_10, window_bounds = array<i64: 512, 128>}, {pipeline_mode = #tpu.pipeline_mode<synchronous>, transform_indices = @transform_11, window_bounds = array<i64: 1, 128>}, {transform_indices = @transform_12, window_bounds = array<i64: 1, 16, 128>}]} {
    %c0 = arith.constant 0 : index
    %c0_0 = arith.constant 0 : index
    %c0_1 = arith.constant 0 : index
    %0 = vector.load %arg2[%c0, %c0_0, %c0_1] : memref<1x16x128xf32, #tpu.memory_space<vmem>>, vector<1x16x128xf32>
    %1 = vector.shape_cast %0 : vector<1x16x128xf32> to vector<16x128xf32>
    %c0_2 = arith.constant 0 : index
    %c0_3 = arith.constant 0 : index
    %c0_4 = arith.constant 0 : index
    %2 = vector.load %arg1[%c0_2, %c0_3, %c0_4] : memref<1x1x128xf32, #tpu.memory_space<vmem>>, vector<1x1x128xf32>
    %3 = vector.shape_cast %2 : vector<1x1x128xf32> to vector<1x128xf32>
    %4 = arith.negf %3 : vector<1x128xf32>
    %5 = math.exp %4 : vector<1x128xf32>
    %cst = arith.constant 1.000000e+00 : f32
    %6 = vector.broadcast %cst : f32 to vector<1x128xf32>
    %7 = arith.addf %6, %5 : vector<1x128xf32>
    %8 = arith.divf %6, %7 : vector<1x128xf32>
    %9 = arith.mulf %3, %8 : vector<1x128xf32>
    %c0_5 = arith.constant 0 : index
    %c0_6 = arith.constant 0 : index
    %10 = vector.load %arg3[%c0_5, %c0_6] : memref<128x768xf32, #tpu.memory_space<vmem>>, vector<128x768xf32>
    %cst_7 = arith.constant dense<0.000000e+00> : vector<1x768xf32>
    %11 = tpu.matmul %9, %10, %cst_7 {dimension_numbers = #tpu.dot_dimension_numbers<[1], [0], [0], [1], [0, 0, 1, 1], [], []>} : vector<1x128xf32>, vector<128x768xf32>, vector<1x768xf32> -> vector<1x768xf32>
    %c0_8 = arith.constant 0 : index
    %c0_9 = arith.constant 0 : index
    %12 = vector.load %arg4[%c0_8, %c0_9] : memref<1x768xf32, #tpu.memory_space<vmem>>, vector<1x768xf32>
    %13 = arith.addf %11, %12 : vector<1x768xf32>
    %14 = vector.extract_strided_slice %13 {offsets = [0, 0], sizes = [1, 128], strides = [1, 1]} : vector<1x768xf32> to vector<1x128xf32>
    %15 = vector.extract_strided_slice %13 {offsets = [0, 128], sizes = [1, 128], strides = [1, 1]} : vector<1x768xf32> to vector<1x128xf32>
    %16 = vector.extract_strided_slice %13 {offsets = [0, 256], sizes = [1, 128], strides = [1, 1]} : vector<1x768xf32> to vector<1x128xf32>
    %17 = vector.extract_strided_slice %13 {offsets = [0, 384], sizes = [1, 128], strides = [1, 1]} : vector<1x768xf32> to vector<1x128xf32>
    %18 = vector.extract_strided_slice %13 {offsets = [0, 512], sizes = [1, 128], strides = [1, 1]} : vector<1x768xf32> to vector<1x128xf32>
    %19 = vector.extract_strided_slice %13 {offsets = [0, 640], sizes = [1, 128], strides = [1, 1]} : vector<1x768xf32> to vector<1x128xf32>
    %cst_10 = arith.constant dense<0.000000e+00> : vector<16xf32>
    %20 = vector.multi_reduction <add>, %1, %cst_10 [1] : vector<16x128xf32> to vector<16xf32>
    %21 = vector.shape_cast %20 : vector<16xf32> to vector<16x1xf32>
    %cst_11 = arith.constant 1.280000e+02 : f32
    %22 = vector.broadcast %cst_11 : f32 to vector<16x1xf32>
    %23 = arith.divf %21, %22 : vector<16x1xf32>
    %24 = vector.broadcast %23 : vector<16x1xf32> to vector<16x128xf32>
    %25 = arith.subf %1, %24 : vector<16x128xf32>
    %26 = arith.mulf %25, %25 : vector<16x128xf32>
    %cst_12 = arith.constant dense<0.000000e+00> : vector<16xf32>
    %27 = vector.multi_reduction <add>, %26, %cst_12 [1] : vector<16x128xf32> to vector<16xf32>
    %28 = vector.shape_cast %27 : vector<16xf32> to vector<16x1xf32>
    %cst_13 = arith.constant 1.280000e+02 : f32
    %29 = vector.broadcast %cst_13 : f32 to vector<16x1xf32>
    %30 = arith.divf %28, %29 : vector<16x1xf32>
    %31 = vector.broadcast %23 : vector<16x1xf32> to vector<16x128xf32>
    %32 = arith.subf %1, %31 : vector<16x128xf32>
    %cst_14 = arith.constant 9.99999997E-7 : f32
    %33 = vector.broadcast %cst_14 : f32 to vector<16x1xf32>
    %34 = arith.addf %30, %33 : vector<16x1xf32>
    %35 = math.rsqrt %34 : vector<16x1xf32>
    %36 = vector.broadcast %35 : vector<16x1xf32> to vector<16x128xf32>
    %37 = arith.mulf %32, %36 : vector<16x128xf32>
    %cst_15 = arith.constant 1.000000e+00 : f32
    %38 = vector.broadcast %cst_15 : f32 to vector<1x128xf32>
    %39 = arith.addf %38, %15 : vector<1x128xf32>
    %40 = vector.broadcast %39 : vector<1x128xf32> to vector<16x128xf32>
    %41 = arith.mulf %37, %40 : vector<16x128xf32>
    %42 = vector.broadcast %14 : vector<1x128xf32> to vector<16x128xf32>
    %43 = arith.addf %41, %42 : vector<16x128xf32>
    %c0_16 = arith.constant 0 : index
    %c0_17 = arith.constant 0 : index
    %44 = vector.load %arg5[%c0_16, %c0_17] : memref<128x384xf32, #tpu.memory_space<vmem>>, vector<128x384xf32>
    %cst_18 = arith.constant dense<0.000000e+00> : vector<16x384xf32>
    %45 = tpu.matmul %43, %44, %cst_18 {dimension_numbers = #tpu.dot_dimension_numbers<[1], [0], [0], [1], [0, 0, 1, 1], [], []>} : vector<16x128xf32>, vector<128x384xf32>, vector<16x384xf32> -> vector<16x384xf32>
    %c0_19 = arith.constant 0 : index
    %c0_20 = arith.constant 0 : index
    %46 = vector.load %arg6[%c0_19, %c0_20] : memref<1x384xf32, #tpu.memory_space<vmem>>, vector<1x384xf32>
    %47 = vector.broadcast %46 : vector<1x384xf32> to vector<16x384xf32>
    %48 = arith.addf %45, %47 : vector<16x384xf32>
    %49 = vector.extract_strided_slice %48 {offsets = [0, 0], sizes = [16, 128], strides = [1, 1]} : vector<16x384xf32> to vector<16x128xf32>
    %50 = vector.extract_strided_slice %48 {offsets = [0, 128], sizes = [16, 128], strides = [1, 1]} : vector<16x384xf32> to vector<16x128xf32>
    %51 = vector.extract_strided_slice %48 {offsets = [0, 256], sizes = [16, 128], strides = [1, 1]} : vector<16x384xf32> to vector<16x128xf32>
    %cst_21 = arith.constant 0.000000e+00 : f32
    %52 = vector.broadcast %cst_21 : f32 to vector<16x128xf32>
    %53 = vector.extract_strided_slice %49 {offsets = [0, 0], sizes = [16, 32], strides = [1, 1]} : vector<16x128xf32> to vector<16x32xf32>
    %cst_22 = arith.constant 0.176776692 : f32
    %54 = vector.broadcast %cst_22 : f32 to vector<16x32xf32>
    %55 = arith.mulf %53, %54 : vector<16x32xf32>
    %56 = vector.extract_strided_slice %50 {offsets = [0, 0], sizes = [16, 32], strides = [1, 1]} : vector<16x128xf32> to vector<16x32xf32>
    %57 = vector.extract_strided_slice %51 {offsets = [0, 0], sizes = [16, 32], strides = [1, 1]} : vector<16x128xf32> to vector<16x32xf32>
    %cst_23 = arith.constant dense<0.000000e+00> : vector<16x16xf32>
    %58 = tpu.matmul %55, %56, %cst_23 {dimension_numbers = #tpu.dot_dimension_numbers<[1], [1], [0], [0], [0, 0, 1, 0], [], []>} : vector<16x32xf32>, vector<16x32xf32>, vector<16x16xf32> -> vector<16x16xf32>
    %cst_24 = arith.constant dense<0xFF800000> : vector<16xf32>
    %59 = vector.multi_reduction <maximumf>, %58, %cst_24 [1] : vector<16x16xf32> to vector<16xf32>
    %60 = vector.shape_cast %59 : vector<16xf32> to vector<16x1xf32>
    %61 = vector.broadcast %60 : vector<16x1xf32> to vector<16x16xf32>
    %62 = arith.subf %58, %61 : vector<16x16xf32>
    %63 = math.exp %62 : vector<16x16xf32>
    %cst_25 = arith.constant dense<0.000000e+00> : vector<16xf32>
    %64 = vector.multi_reduction <add>, %63, %cst_25 [1] : vector<16x16xf32> to vector<16xf32>
    %65 = vector.shape_cast %64 : vector<16xf32> to vector<16x1xf32>
    %66 = vector.broadcast %65 : vector<16x1xf32> to vector<16x16xf32>
    %67 = arith.divf %63, %66 : vector<16x16xf32>
    %cst_26 = arith.constant dense<0.000000e+00> : vector<16x32xf32>
    %68 = tpu.matmul %67, %57, %cst_26 {dimension_numbers = #tpu.dot_dimension_numbers<[1], [0], [0], [1], [0, 0, 1, 1], [], []>} : vector<16x16xf32>, vector<16x32xf32>, vector<16x32xf32> -> vector<16x32xf32>
    %c0_27 = arith.constant 0 : index
    %c0_28 = arith.constant 0 : index
    %69 = vector.load %arg7[%c0_27, %c0_28] : memref<128x128xf32, #tpu.memory_space<vmem>>, vector<32x128xf32>
    %cst_29 = arith.constant dense<0.000000e+00> : vector<16x128xf32>
    %70 = tpu.matmul %68, %69, %cst_29 {dimension_numbers = #tpu.dot_dimension_numbers<[1], [0], [0], [1], [0, 0, 1, 1], [], []>} : vector<16x32xf32>, vector<32x128xf32>, vector<16x128xf32> -> vector<16x128xf32>
    %71 = arith.addf %52, %70 : vector<16x128xf32>
    %72 = vector.extract_strided_slice %49 {offsets = [0, 32], sizes = [16, 32], strides = [1, 1]} : vector<16x128xf32> to vector<16x32xf32>
    %cst_30 = arith.constant 0.176776692 : f32
    %73 = vector.broadcast %cst_30 : f32 to vector<16x32xf32>
    %74 = arith.mulf %72, %73 : vector<16x32xf32>
    %75 = vector.extract_strided_slice %50 {offsets = [0, 32], sizes = [16, 32], strides = [1, 1]} : vector<16x128xf32> to vector<16x32xf32>
    %76 = vector.extract_strided_slice %51 {offsets = [0, 32], sizes = [16, 32], strides = [1, 1]} : vector<16x128xf32> to vector<16x32xf32>
    %cst_31 = arith.constant dense<0.000000e+00> : vector<16x16xf32>
    %77 = tpu.matmul %74, %75, %cst_31 {dimension_numbers = #tpu.dot_dimension_numbers<[1], [1], [0], [0], [0, 0, 1, 0], [], []>} : vector<16x32xf32>, vector<16x32xf32>, vector<16x16xf32> -> vector<16x16xf32>
    %cst_32 = arith.constant dense<0xFF800000> : vector<16xf32>
    %78 = vector.multi_reduction <maximumf>, %77, %cst_32 [1] : vector<16x16xf32> to vector<16xf32>
    %79 = vector.shape_cast %78 : vector<16xf32> to vector<16x1xf32>
    %80 = vector.broadcast %79 : vector<16x1xf32> to vector<16x16xf32>
    %81 = arith.subf %77, %80 : vector<16x16xf32>
    %82 = math.exp %81 : vector<16x16xf32>
    %cst_33 = arith.constant dense<0.000000e+00> : vector<16xf32>
    %83 = vector.multi_reduction <add>, %82, %cst_33 [1] : vector<16x16xf32> to vector<16xf32>
    %84 = vector.shape_cast %83 : vector<16xf32> to vector<16x1xf32>
    %85 = vector.broadcast %84 : vector<16x1xf32> to vector<16x16xf32>
    %86 = arith.divf %82, %85 : vector<16x16xf32>
    %cst_34 = arith.constant dense<0.000000e+00> : vector<16x32xf32>
    %87 = tpu.matmul %86, %76, %cst_34 {dimension_numbers = #tpu.dot_dimension_numbers<[1], [0], [0], [1], [0, 0, 1, 1], [], []>} : vector<16x16xf32>, vector<16x32xf32>, vector<16x32xf32> -> vector<16x32xf32>
    %c32 = arith.constant 32 : index
    %c0_35 = arith.constant 0 : index
    %88 = vector.load %arg7[%c32, %c0_35] : memref<128x128xf32, #tpu.memory_space<vmem>>, vector<32x128xf32>
    %cst_36 = arith.constant dense<0.000000e+00> : vector<16x128xf32>
    %89 = tpu.matmul %87, %88, %cst_36 {dimension_numbers = #tpu.dot_dimension_numbers<[1], [0], [0], [1], [0, 0, 1, 1], [], []>} : vector<16x32xf32>, vector<32x128xf32>, vector<16x128xf32> -> vector<16x128xf32>
    %90 = arith.addf %71, %89 : vector<16x128xf32>
    %91 = vector.extract_strided_slice %49 {offsets = [0, 64], sizes = [16, 32], strides = [1, 1]} : vector<16x128xf32> to vector<16x32xf32>
    %cst_37 = arith.constant 0.176776692 : f32
    %92 = vector.broadcast %cst_37 : f32 to vector<16x32xf32>
    %93 = arith.mulf %91, %92 : vector<16x32xf32>
    %94 = vector.extract_strided_slice %50 {offsets = [0, 64], sizes = [16, 32], strides = [1, 1]} : vector<16x128xf32> to vector<16x32xf32>
    %95 = vector.extract_strided_slice %51 {offsets = [0, 64], sizes = [16, 32], strides = [1, 1]} : vector<16x128xf32> to vector<16x32xf32>
    %cst_38 = arith.constant dense<0.000000e+00> : vector<16x16xf32>
    %96 = tpu.matmul %93, %94, %cst_38 {dimension_numbers = #tpu.dot_dimension_numbers<[1], [1], [0], [0], [0, 0, 1, 0], [], []>} : vector<16x32xf32>, vector<16x32xf32>, vector<16x16xf32> -> vector<16x16xf32>
    %cst_39 = arith.constant dense<0xFF800000> : vector<16xf32>
    %97 = vector.multi_reduction <maximumf>, %96, %cst_39 [1] : vector<16x16xf32> to vector<16xf32>
    %98 = vector.shape_cast %97 : vector<16xf32> to vector<16x1xf32>
    %99 = vector.broadcast %98 : vector<16x1xf32> to vector<16x16xf32>
    %100 = arith.subf %96, %99 : vector<16x16xf32>
    %101 = math.exp %100 : vector<16x16xf32>
    %cst_40 = arith.constant dense<0.000000e+00> : vector<16xf32>
    %102 = vector.multi_reduction <add>, %101, %cst_40 [1] : vector<16x16xf32> to vector<16xf32>
    %103 = vector.shape_cast %102 : vector<16xf32> to vector<16x1xf32>
    %104 = vector.broadcast %103 : vector<16x1xf32> to vector<16x16xf32>
    %105 = arith.divf %101, %104 : vector<16x16xf32>
    %cst_41 = arith.constant dense<0.000000e+00> : vector<16x32xf32>
    %106 = tpu.matmul %105, %95, %cst_41 {dimension_numbers = #tpu.dot_dimension_numbers<[1], [0], [0], [1], [0, 0, 1, 1], [], []>} : vector<16x16xf32>, vector<16x32xf32>, vector<16x32xf32> -> vector<16x32xf32>
    %c64 = arith.constant 64 : index
    %c0_42 = arith.constant 0 : index
    %107 = vector.load %arg7[%c64, %c0_42] : memref<128x128xf32, #tpu.memory_space<vmem>>, vector<32x128xf32>
    %cst_43 = arith.constant dense<0.000000e+00> : vector<16x128xf32>
    %108 = tpu.matmul %106, %107, %cst_43 {dimension_numbers = #tpu.dot_dimension_numbers<[1], [0], [0], [1], [0, 0, 1, 1], [], []>} : vector<16x32xf32>, vector<32x128xf32>, vector<16x128xf32> -> vector<16x128xf32>
    %109 = arith.addf %90, %108 : vector<16x128xf32>
    %110 = vector.extract_strided_slice %49 {offsets = [0, 96], sizes = [16, 32], strides = [1, 1]} : vector<16x128xf32> to vector<16x32xf32>
    %cst_44 = arith.constant 0.176776692 : f32
    %111 = vector.broadcast %cst_44 : f32 to vector<16x32xf32>
    %112 = arith.mulf %110, %111 : vector<16x32xf32>
    %113 = vector.extract_strided_slice %50 {offsets = [0, 96], sizes = [16, 32], strides = [1, 1]} : vector<16x128xf32> to vector<16x32xf32>
    %114 = vector.extract_strided_slice %51 {offsets = [0, 96], sizes = [16, 32], strides = [1, 1]} : vector<16x128xf32> to vector<16x32xf32>
    %cst_45 = arith.constant dense<0.000000e+00> : vector<16x16xf32>
    %115 = tpu.matmul %112, %113, %cst_45 {dimension_numbers = #tpu.dot_dimension_numbers<[1], [1], [0], [0], [0, 0, 1, 0], [], []>} : vector<16x32xf32>, vector<16x32xf32>, vector<16x16xf32> -> vector<16x16xf32>
    %cst_46 = arith.constant dense<0xFF800000> : vector<16xf32>
    %116 = vector.multi_reduction <maximumf>, %115, %cst_46 [1] : vector<16x16xf32> to vector<16xf32>
    %117 = vector.shape_cast %116 : vector<16xf32> to vector<16x1xf32>
    %118 = vector.broadcast %117 : vector<16x1xf32> to vector<16x16xf32>
    %119 = arith.subf %115, %118 : vector<16x16xf32>
    %120 = math.exp %119 : vector<16x16xf32>
    %cst_47 = arith.constant dense<0.000000e+00> : vector<16xf32>
    %121 = vector.multi_reduction <add>, %120, %cst_47 [1] : vector<16x16xf32> to vector<16xf32>
    %122 = vector.shape_cast %121 : vector<16xf32> to vector<16x1xf32>
    %123 = vector.broadcast %122 : vector<16x1xf32> to vector<16x16xf32>
    %124 = arith.divf %120, %123 : vector<16x16xf32>
    %cst_48 = arith.constant dense<0.000000e+00> : vector<16x32xf32>
    %125 = tpu.matmul %124, %114, %cst_48 {dimension_numbers = #tpu.dot_dimension_numbers<[1], [0], [0], [1], [0, 0, 1, 1], [], []>} : vector<16x16xf32>, vector<16x32xf32>, vector<16x32xf32> -> vector<16x32xf32>
    %c96 = arith.constant 96 : index
    %c0_49 = arith.constant 0 : index
    %126 = vector.load %arg7[%c96, %c0_49] : memref<128x128xf32, #tpu.memory_space<vmem>>, vector<32x128xf32>
    %cst_50 = arith.constant dense<0.000000e+00> : vector<16x128xf32>
    %127 = tpu.matmul %125, %126, %cst_50 {dimension_numbers = #tpu.dot_dimension_numbers<[1], [0], [0], [1], [0, 0, 1, 1], [], []>} : vector<16x32xf32>, vector<32x128xf32>, vector<16x128xf32> -> vector<16x128xf32>
    %128 = arith.addf %109, %127 : vector<16x128xf32>
    %c0_51 = arith.constant 0 : index
    %c0_52 = arith.constant 0 : index
    %129 = vector.load %arg8[%c0_51, %c0_52] : memref<1x128xf32, #tpu.memory_space<vmem>>, vector<1x128xf32>
    %130 = vector.broadcast %129 : vector<1x128xf32> to vector<16x128xf32>
    %131 = arith.addf %128, %130 : vector<16x128xf32>
    %132 = vector.broadcast %16 : vector<1x128xf32> to vector<16x128xf32>
    %133 = arith.mulf %132, %131 : vector<16x128xf32>
    %134 = arith.addf %1, %133 : vector<16x128xf32>
    %cst_53 = arith.constant dense<0.000000e+00> : vector<16xf32>
    %135 = vector.multi_reduction <add>, %134, %cst_53 [1] : vector<16x128xf32> to vector<16xf32>
    %136 = vector.shape_cast %135 : vector<16xf32> to vector<16x1xf32>
    %cst_54 = arith.constant 1.280000e+02 : f32
    %137 = vector.broadcast %cst_54 : f32 to vector<16x1xf32>
    %138 = arith.divf %136, %137 : vector<16x1xf32>
    %139 = vector.broadcast %138 : vector<16x1xf32> to vector<16x128xf32>
    %140 = arith.subf %134, %139 : vector<16x128xf32>
    %141 = arith.mulf %140, %140 : vector<16x128xf32>
    %cst_55 = arith.constant dense<0.000000e+00> : vector<16xf32>
    %142 = vector.multi_reduction <add>, %141, %cst_55 [1] : vector<16x128xf32> to vector<16xf32>
    %143 = vector.shape_cast %142 : vector<16xf32> to vector<16x1xf32>
    %cst_56 = arith.constant 1.280000e+02 : f32
    %144 = vector.broadcast %cst_56 : f32 to vector<16x1xf32>
    %145 = arith.divf %143, %144 : vector<16x1xf32>
    %146 = vector.broadcast %138 : vector<16x1xf32> to vector<16x128xf32>
    %147 = arith.subf %134, %146 : vector<16x128xf32>
    %cst_57 = arith.constant 9.99999997E-7 : f32
    %148 = vector.broadcast %cst_57 : f32 to vector<16x1xf32>
    %149 = arith.addf %145, %148 : vector<16x1xf32>
    %150 = math.rsqrt %149 : vector<16x1xf32>
    %151 = vector.broadcast %150 : vector<16x1xf32> to vector<16x128xf32>
    %152 = arith.mulf %147, %151 : vector<16x128xf32>
    %cst_58 = arith.constant 1.000000e+00 : f32
    %153 = vector.broadcast %cst_58 : f32 to vector<1x128xf32>
    %154 = arith.addf %153, %18 : vector<1x128xf32>
    %155 = vector.broadcast %154 : vector<1x128xf32> to vector<16x128xf32>
    %156 = arith.mulf %152, %155 : vector<16x128xf32>
    %157 = vector.broadcast %17 : vector<1x128xf32> to vector<16x128xf32>
    %158 = arith.addf %156, %157 : vector<16x128xf32>
    %c0_59 = arith.constant 0 : index
    %c0_60 = arith.constant 0 : index
    %159 = vector.load %arg9[%c0_59, %c0_60] : memref<128x512xf32, #tpu.memory_space<vmem>>, vector<128x512xf32>
    %cst_61 = arith.constant dense<0.000000e+00> : vector<16x512xf32>
    %160 = tpu.matmul %158, %159, %cst_61 {dimension_numbers = #tpu.dot_dimension_numbers<[1], [0], [0], [1], [0, 0, 1, 1], [], []>} : vector<16x128xf32>, vector<128x512xf32>, vector<16x512xf32> -> vector<16x512xf32>
    %c0_62 = arith.constant 0 : index
    %c0_63 = arith.constant 0 : index
    %161 = vector.load %arg10[%c0_62, %c0_63] : memref<1x512xf32, #tpu.memory_space<vmem>>, vector<1x512xf32>
    %162 = vector.broadcast %161 : vector<1x512xf32> to vector<16x512xf32>
    %163 = arith.addf %160, %162 : vector<16x512xf32>
    %cst_64 = arith.constant 5.000000e-01 : f32
    %164 = vector.broadcast %cst_64 : f32 to vector<16x512xf32>
    %165 = arith.mulf %164, %163 : vector<16x512xf32>
    %cst_65 = arith.constant 4.471500e-02 : f32
    %166 = vector.broadcast %cst_65 : f32 to vector<16x512xf32>
    %167 = arith.mulf %166, %163 : vector<16x512xf32>
    %168 = arith.mulf %167, %163 : vector<16x512xf32>
    %169 = arith.mulf %168, %163 : vector<16x512xf32>
    %170 = arith.addf %163, %169 : vector<16x512xf32>
    %cst_66 = arith.constant 0.797884583 : f32
    %171 = vector.broadcast %cst_66 : f32 to vector<16x512xf32>
    %172 = arith.mulf %171, %170 : vector<16x512xf32>
    %173 = math.tanh %172 : vector<16x512xf32>
    %cst_67 = arith.constant 1.000000e+00 : f32
    %174 = vector.broadcast %cst_67 : f32 to vector<16x512xf32>
    %175 = arith.addf %174, %173 : vector<16x512xf32>
    %176 = arith.mulf %165, %175 : vector<16x512xf32>
    %c0_68 = arith.constant 0 : index
    %c0_69 = arith.constant 0 : index
    %177 = vector.load %arg11[%c0_68, %c0_69] : memref<512x128xf32, #tpu.memory_space<vmem>>, vector<512x128xf32>
    %cst_70 = arith.constant dense<0.000000e+00> : vector<16x128xf32>
    %178 = tpu.matmul %176, %177, %cst_70 {dimension_numbers = #tpu.dot_dimension_numbers<[1], [0], [0], [1], [0, 0, 1, 1], [], []>} : vector<16x512xf32>, vector<512x128xf32>, vector<16x128xf32> -> vector<16x128xf32>
    %c0_71 = arith.constant 0 : index
    %c0_72 = arith.constant 0 : index
    %179 = vector.load %arg12[%c0_71, %c0_72] : memref<1x128xf32, #tpu.memory_space<vmem>>, vector<1x128xf32>
    %180 = vector.broadcast %179 : vector<1x128xf32> to vector<16x128xf32>
    %181 = arith.addf %178, %180 : vector<16x128xf32>
    %182 = vector.broadcast %19 : vector<1x128xf32> to vector<16x128xf32>
    %183 = arith.mulf %182, %181 : vector<16x128xf32>
    %184 = arith.addf %134, %183 : vector<16x128xf32>
    %c0_73 = arith.constant 0 : index
    %c0_74 = arith.constant 0 : index
    %c0_75 = arith.constant 0 : index
    %185 = vector.load %arg13[%c0_73, %c0_74, %c0_75] : memref<1x16x128xf32, #tpu.memory_space<vmem>>, vector<1x16x128xf32>
    %186 = vector.shape_cast %185 : vector<1x16x128xf32> to vector<16x128xf32>
    %187 = vector.shape_cast %184 : vector<16x128xf32> to vector<1x16x128xf32>
    tpu.vector_store %arg13[%c0_73, %c0_74, %c0_75], %187 {strides = array<i32>} : memref<1x16x128xf32, #tpu.memory_space<vmem>>, vector<1x16x128xf32>,
    return
  }
  func.func @transform_0(%arg0: i32) -> (i32, i32, i32) {
    %c0_i32 = arith.constant 0 : i32
    %c0_i32_0 = arith.constant 0 : i32
    %c0_i32_1 = arith.constant 0 : i32
    return %arg0, %c0_i32, %c0_i32_0 : i32, i32, i32
  }
  func.func @transform_1(%arg0: i32) -> (i32, i32, i32) {
    %c0_i32 = arith.constant 0 : i32
    %c0_i32_0 = arith.constant 0 : i32
    %c0_i32_1 = arith.constant 0 : i32
    return %arg0, %c0_i32, %c0_i32_0 : i32, i32, i32
  }
  func.func @transform_2(%arg0: i32) -> (i32, i32) {
    %c0_i32 = arith.constant 0 : i32
    %c0_i32_0 = arith.constant 0 : i32
    %c0_i32_1 = arith.constant 0 : i32
    return %c0_i32, %c0_i32_0 : i32, i32
  }
  func.func @transform_3(%arg0: i32) -> (i32, i32) {
    %c0_i32 = arith.constant 0 : i32
    %c0_i32_0 = arith.constant 0 : i32
    %c0_i32_1 = arith.constant 0 : i32
    return %c0_i32, %c0_i32_0 : i32, i32
  }
  func.func @transform_4(%arg0: i32) -> (i32, i32) {
    %c0_i32 = arith.constant 0 : i32
    %c0_i32_0 = arith.constant 0 : i32
    %c0_i32_1 = arith.constant 0 : i32
    return %c0_i32, %c0_i32_0 : i32, i32
  }
  func.func @transform_5(%arg0: i32) -> (i32, i32) {
    %c0_i32 = arith.constant 0 : i32
    %c0_i32_0 = arith.constant 0 : i32
    %c0_i32_1 = arith.constant 0 : i32
    return %c0_i32, %c0_i32_0 : i32, i32
  }
  func.func @transform_6(%arg0: i32) -> (i32, i32) {
    %c0_i32 = arith.constant 0 : i32
    %c0_i32_0 = arith.constant 0 : i32
    %c0_i32_1 = arith.constant 0 : i32
    return %c0_i32, %c0_i32_0 : i32, i32
  }
  func.func @transform_7(%arg0: i32) -> (i32, i32) {
    %c0_i32 = arith.constant 0 : i32
    %c0_i32_0 = arith.constant 0 : i32
    %c0_i32_1 = arith.constant 0 : i32
    return %c0_i32, %c0_i32_0 : i32, i32
  }
  func.func @transform_8(%arg0: i32) -> (i32, i32) {
    %c0_i32 = arith.constant 0 : i32
    %c0_i32_0 = arith.constant 0 : i32
    %c0_i32_1 = arith.constant 0 : i32
    return %c0_i32, %c0_i32_0 : i32, i32
  }
  func.func @transform_9(%arg0: i32) -> (i32, i32) {
    %c0_i32 = arith.constant 0 : i32
    %c0_i32_0 = arith.constant 0 : i32
    %c0_i32_1 = arith.constant 0 : i32
    return %c0_i32, %c0_i32_0 : i32, i32
  }
  func.func @transform_10(%arg0: i32) -> (i32, i32) {
    %c0_i32 = arith.constant 0 : i32
    %c0_i32_0 = arith.constant 0 : i32
    %c0_i32_1 = arith.constant 0 : i32
    return %c0_i32, %c0_i32_0 : i32, i32
  }
  func.func @transform_11(%arg0: i32) -> (i32, i32) {
    %c0_i32 = arith.constant 0 : i32
    %c0_i32_0 = arith.constant 0 : i32
    %c0_i32_1 = arith.constant 0 : i32
    return %c0_i32, %c0_i32_0 : i32, i32
  }
  func.func @transform_12(%arg0: i32) -> (i32, i32, i32) {
    %c0_i32 = arith.constant 0 : i32
    %c0_i32_0 = arith.constant 0 : i32
    %c0_i32_1 = arith.constant 0 : i32
    return %arg0, %c0_i32, %c0_i32_0 : i32, i32, i32
  }
}

</mosaic_0001>

<llo_original>
// kernel: tpu_custom_call.1
$region0: #{tpu_custom_call.1}
  #allocation0 [shape = 'u32[]', space=smem, size = 0x4, offset = 0x4, fixed_abs, tag = 'smem constant byte address 0x4 - core index']
  #allocation1 [shape = 'u32[144,128]{1,0:T(1,128)}', space=vmem, size = 0x12000, scoped, tag = 'internal scratch']
  %s0 = inlined_call_operand.hbm [shape: f32[2,1,128], index: 0, kind: input, shape index: {}]
  %s1 = inlined_call_operand.hbm [shape: f32[2,16,128], index: 1, kind: input, shape index: {}]
  %s2 = inlined_call_operand.hbm [shape: f32[128,768], index: 2, kind: input, shape index: {}]
  %s3 = inlined_call_operand.vmem [shape: f32[1,768], index: 3, kind: input, shape index: {}]
  %s4 = inlined_call_operand.hbm [shape: f32[128,384], index: 4, kind: input, shape index: {}]
  %s5 = inlined_call_operand.vmem [shape: f32[1,384], index: 5, kind: input, shape index: {}]
  %s6 = inlined_call_operand.hbm [shape: f32[128,128], index: 6, kind: input, shape index: {}]
  %s7 = inlined_call_operand.vmem [shape: f32[1,128], index: 7, kind: input, shape index: {}]
  %s8 = inlined_call_operand.hbm [shape: f32[128,512], index: 8, kind: input, shape index: {}]
  %s9 = inlined_call_operand.vmem [shape: f32[1,512], index: 9, kind: input, shape index: {}]
  %s10 = inlined_call_operand.hbm [shape: f32[512,128], index: 10, kind: input, shape index: {}]
  %s11 = inlined_call_operand.vmem [shape: f32[1,128], index: 11, kind: input, shape index: {}]
  %s12 = inlined_call_operand.hbm [shape: f32[2,16,128], index: 12, kind: output, shape index: {}]
  %s13 = sld [smem:[#allocation0]]
  $region109: #{tpu_custom_call.1} parent=0
    _
  %s15 = ssub.s32 1, %s13
  %s16 = scalar_select 0, %s15, %s13
  $region1: #{tpu_custom_call.1} parent=0
    #allocation2 [shape = 'u8[1024]{0}', space=vmem, size = 0x400, scoped, tag = 'input window, operand 0']
    #allocation3 [shape = 's32[2]{0}', space=sflag, size = 0x8, scoped, tag = 'scoped memory for tpu_custom_call.1']
    #allocation4 [shape = 's32[2]{0}', space=sflag, size = 0x8, scoped, tag = 'scoped memory for tpu_custom_call.1']
    #allocation5 [shape = 'u8[16384]{0}', space=vmem, size = 0x4000, scoped, tag = 'input window, operand 1']
    #allocation6 [shape = 's32[2]{0}', space=sflag, size = 0x8, scoped, tag = 'scoped memory for tpu_custom_call.1']
    #allocation7 [shape = 'u8[393216]{0}', space=vmem, size = 0x60000, scoped, tag = 'input window, operand 2, single buffered']
    #allocation8 [shape = 'u8[196608]{0}', space=vmem, size = 0x30000, scoped, tag = 'input window, operand 4, single buffered']
    #allocation9 [shape = 's32[1]{0}', space=sflag, size = 0x4, scoped, tag = 'scoped memory for tpu_custom_call.1']
    #allocation10 [shape = 'u8[65536]{0}', space=vmem, size = 0x10000, scoped, tag = 'input window, operand 6, single buffered']
    #allocation11 [shape = 'u8[262144]{0}', space=vmem, size = 0x40000, scoped, tag = 'input window, operand 8, single buffered']
    #allocation12 [shape = 's32[1]{0}', space=sflag, size = 0x4, scoped, tag = 'scoped memory for tpu_custom_call.1']
    #allocation13 [shape = 'u8[262144]{0}', space=vmem, size = 0x40000, scoped, tag = 'input window, operand 10, single buffered']
    #allocation14 [shape = 'u8[16384]{0}', space=vmem, size = 0x4000, scoped, tag = 'output window, operand 0']
    %17 = vsyncpa [#allocation3], 0
    %s18 = scalar_lea.sflag [#allocation3], 1
    %19 = vsyncpa %s18, 0
    %20 = vsyncpa [#allocation6], 0
    %s21 = scalar_lea.sflag [#allocation6], 1
    %22 = vsyncpa %s21, 0
    %23 = vsyncpa [#allocation9], 0
    %24 = vsyncpa [#allocation12], 0
    %25 = vsyncpa [#allocation4], 0
    %s26 = scalar_lea.sflag [#allocation4], 1
    %27 = vsyncpa %s26, 0
    loop: start=0, step=1, limit=4
    $region2: #{tpu_custom_call.1} parent=1 // loop_pre_header
      _
    $region3: #{tpu_custom_call.1} parent=1 // loop_header
      %s29 = sphi 0, %s33
      %p30 = scmp.ge.s32.totalorder %s29, 4
      %s39 = sphi 0, %s41
      %s42 = sphi 0, %s39
      %s43 = sphi 0, %s42
      %s59 = sphi 0, %s43
      %s65 = sphi 0, %s67
      %s68 = sphi 0, %s65
      %s69 = sphi 0, %s68
      %s85 = sphi 0, %s69
      %s89 = sphi 0, %s89
      %s91 = sphi 0, %s89
      %s92 = sphi 0, %s91
      %s106 = sphi 0, %s92
      %s110 = sphi 0, %s110
      %s112 = sphi 0, %s110
      %s113 = sphi 0, %s112
      %s127 = sphi 0, %s113
      %s131 = sphi 0, %s131
      %s133 = sphi 0, %s131
      %s134 = sphi 0, %s133
      %s148 = sphi 0, %s134
      %s152 = sphi 0, %s152
      %s154 = sphi 0, %s152
      %s155 = sphi 0, %s154
      %s169 = sphi 0, %s155
      %s173 = sphi 0, %s173
      %s175 = sphi 0, %s173
      %s176 = sphi 0, %s175
      %s190 = sphi 0, %s176
      %s194 = sphi 0, %s194
      %s196 = sphi 0, %s194
      %s197 = sphi 0, %s196
      %s211 = sphi 0, %s197
      %s215 = sphi 0, %s215
      %s217 = sphi 0, %s215
      %s218 = sphi 0, %s217
      %s232 = sphi 0, %s218
      %s236 = sphi 0, %s236
      %s238 = sphi 0, %s236
      %s239 = sphi 0, %s238
      %s253 = sphi 0, %s239
      %s257 = sphi 0, %s257
      %s259 = sphi 0, %s257
      %s260 = sphi 0, %s259
      %s274 = sphi 0, %s260
      %s278 = sphi 0, %s278
      %s280 = sphi 0, %s278
      %s281 = sphi 0, %s280
      %s295 = sphi 0, %s281
      %s301 = sphi 0, %s303
      %s304 = sphi 0, %s301
      %s305 = sphi 0, %s304
      %s321 = sphi 0, %s305
    $region4: #{tpu_custom_call.1} parent=1 // loop_header_branch
      %32 = sbr.rel (%p30) target = $region8
    $region5: #{tpu_custom_call.1} parent=1 // loop_body
      %s34 = ssub.s32 %s29, 1
      %s35 = ssub.s32 %s29, 2
      %s36 = sadd.s32 %s29, 1
      %s37 = ssub.s32 %s29, %s36
      %p38 = scmp.eq.s32.totalorder %s37, 0
      %s40 = sadd.s32 %s39, 1
      %s41 = scalar_select %p38, %s39, %s40
      %p44 = pneg %p38
      %p45 = scmp.eq.s32.totalorder %s29, 1
      %p46 = por %p44, %p45
      %p47 = scmp.ne.s32.totalorder %s39, %s42
      %p48 = scmp.eq.s32.totalorder %s29, 0
      %p49 = por %p47, %p48
      %p50 = scmp.ne.s32.totalorder %s39, %s42
      %p51 = scmp.eq.s32.totalorder %s34, 1
      %p52 = por %p50, %p51
      %p53 = scmp.ne.s32.totalorder %s42, %s43
      %p54 = scmp.eq.s32.totalorder %s34, 0
      %p55 = por %p53, %p54
      %p56 = scmp.ne.s32.totalorder %s42, %s43
      %p57 = scmp.eq.s32.totalorder %s35, 1
      %p58 = por %p56, %p57
      %p60 = scmp.ne.s32.totalorder %s43, %s59
      %p61 = scmp.eq.s32.totalorder %s35, 0
      %p62 = por %p60, %p61
      %s63 = ssub.s32 %s29, %s36
      %p64 = scmp.eq.s32.totalorder %s63, 0
      %s66 = sadd.s32 %s65, 1
      %s67 = scalar_select %p64, %s65, %s66
      %p70 = pneg %p64
      %p71 = scmp.eq.s32.totalorder %s29, 1
      %p72 = por %p70, %p71
      %p73 = scmp.ne.s32.totalorder %s65, %s68
      %p74 = scmp.eq.s32.totalorder %s29, 0
      %p75 = por %p73, %p74
      %p76 = scmp.ne.s32.totalorder %s65, %s68
      %p77 = scmp.eq.s32.totalorder %s34, 1
      %p78 = por %p76, %p77
      %p79 = scmp.ne.s32.totalorder %s68, %s69
      %p80 = scmp.eq.s32.totalorder %s34, 0
      %p81 = por %p79, %p80
      %p82 = scmp.ne.s32.totalorder %s68, %s69
      %p83 = scmp.eq.s32.totalorder %s35, 1
      %p84 = por %p82, %p83
      %p86 = scmp.ne.s32.totalorder %s69, %s85
      %p87 = scmp.eq.s32.totalorder %s35, 0
      %p88 = por %p86, %p87
      %s90 = sadd.s32 %s89, 1
      %p93 = scmp.eq.s32.totalorder %s29, 1
      %p94 = scmp.ne.s32.totalorder %s89, %s91
      %p95 = scmp.eq.s32.totalorder %s29, 0
      %p96 = por %p94, %p95
      %p97 = scmp.ne.s32.totalorder %s89, %s91
      %p98 = scmp.eq.s32.totalorder %s34, 1
      %p99 = por %p97, %p98
      %p100 = scmp.ne.s32.totalorder %s91, %s92
      %p101 = scmp.eq.s32.totalorder %s34, 0
      %p102 = por %p100, %p101
      %p103 = scmp.ne.s32.totalorder %s91, %s92
      %p104 = scmp.eq.s32.totalorder %s35, 1
      %p105 = por %p103, %p104
      %p107 = scmp.ne.s32.totalorder %s92, %s106
      %p108 = scmp.eq.s32.totalorder %s35, 0
      %p109 = por %p107, %p108
      %s111 = sadd.s32 %s110, 1
      %p114 = scmp.eq.s32.totalorder %s29, 1
      %p115 = scmp.ne.s32.totalorder %s110, %s112
      %p116 = scmp.eq.s32.totalorder %s29, 0
      %p117 = por %p115, %p116
      %p118 = scmp.ne.s32.totalorder %s110, %s112
      %p119 = scmp.eq.s32.totalorder %s34, 1
      %p120 = por %p118, %p119
      %p121 = scmp.ne.s32.totalorder %s112, %s113
      %p122 = scmp.eq.s32.totalorder %s34, 0
      %p123 = por %p121, %p122
      %p124 = scmp.ne.s32.totalorder %s112, %s113
      %p125 = scmp.eq.s32.totalorder %s35, 1
      %p126 = por %p124, %p125
      %p128 = scmp.ne.s32.totalorder %s113, %s127
      %p129 = scmp.eq.s32.totalorder %s35, 0
      %p130 = por %p128, %p129
      %s132 = sadd.s32 %s131, 1
      %p135 = scmp.eq.s32.totalorder %s29, 1
      %p136 = scmp.ne.s32.totalorder %s131, %s133
      %p137 = scmp.eq.s32.totalorder %s29, 0
      %p138 = por %p136, %p137
      %p139 = scmp.ne.s32.totalorder %s131, %s133
      %p140 = scmp.eq.s32.totalorder %s34, 1
      %p141 = por %p139, %p140
      %p142 = scmp.ne.s32.totalorder %s133, %s134
      %p143 = scmp.eq.s32.totalorder %s34, 0
      %p144 = por %p142, %p143
      %p145 = scmp.ne.s32.totalorder %s133, %s134
      %p146 = scmp.eq.s32.totalorder %s35, 1
      %p147 = por %p145, %p146
      %p149 = scmp.ne.s32.totalorder %s134, %s148
      %p150 = scmp.eq.s32.totalorder %s35, 0
      %p151 = por %p149, %p150
      %s153 = sadd.s32 %s152, 1
      %p156 = scmp.eq.s32.totalorder %s29, 1
      %p157 = scmp.ne.s32.totalorder %s152, %s154
      %p158 = scmp.eq.s32.totalorder %s29, 0
      %p159 = por %p157, %p158
      %p160 = scmp.ne.s32.totalorder %s152, %s154
      %p161 = scmp.eq.s32.totalorder %s34, 1
      %p162 = por %p160, %p161
      %p163 = scmp.ne.s32.totalorder %s154, %s155
      %p164 = scmp.eq.s32.totalorder %s34, 0
      %p165 = por %p163, %p164
      %p166 = scmp.ne.s32.totalorder %s154, %s155
      %p167 = scmp.eq.s32.totalorder %s35, 1
      %p168 = por %p166, %p167
      %p170 = scmp.ne.s32.totalorder %s155, %s169
      %p171 = scmp.eq.s32.totalorder %s35, 0
      %p172 = por %p170, %p171
      %s174 = sadd.s32 %s173, 1
      %p177 = scmp.eq.s32.totalorder %s29, 1
      %p178 = scmp.ne.s32.totalorder %s173, %s175
      %p179 = scmp.eq.s32.totalorder %s29, 0
      %p180 = por %p178, %p179
      %p181 = scmp.ne.s32.totalorder %s173, %s175
      %p182 = scmp.eq.s32.totalorder %s34, 1
      %p183 = por %p181, %p182
      %p184 = scmp.ne.s32.totalorder %s175, %s176
      %p185 = scmp.eq.s32.totalorder %s34, 0
      %p186 = por %p184, %p185
      %p187 = scmp.ne.s32.totalorder %s175, %s176
      %p188 = scmp.eq.s32.totalorder %s35, 1
      %p189 = por %p187, %p188
      %p191 = scmp.ne.s32.totalorder %s176, %s190
      %p192 = scmp.eq.s32.totalorder %s35, 0
      %p193 = por %p191, %p192
      %s195 = sadd.s32 %s194, 1
      %p198 = scmp.eq.s32.totalorder %s29, 1
      %p199 = scmp.ne.s32.totalorder %s194, %s196
      %p200 = scmp.eq.s32.totalorder %s29, 0
      %p201 = por %p199, %p200
      %p202 = scmp.ne.s32.totalorder %s194, %s196
      %p203 = scmp.eq.s32.totalorder %s34, 1
      %p204 = por %p202, %p203
      %p205 = scmp.ne.s32.totalorder %s196, %s197
      %p206 = scmp.eq.s32.totalorder %s34, 0
      %p207 = por %p205, %p206
      %p208 = scmp.ne.s32.totalorder %s196, %s197
      %p209 = scmp.eq.s32.totalorder %s35, 1
      %p210 = por %p208, %p209
      %p212 = scmp.ne.s32.totalorder %s197, %s211
      %p213 = scmp.eq.s32.totalorder %s35, 0
      %p214 = por %p212, %p213
      %s216 = sadd.s32 %s215, 1
      %p219 = scmp.eq.s32.totalorder %s29, 1
      %p220 = scmp.ne.s32.totalorder %s215, %s217
      %p221 = scmp.eq.s32.totalorder %s29, 0
      %p222 = por %p220, %p221
      %p223 = scmp.ne.s32.totalorder %s215, %s217
      %p224 = scmp.eq.s32.totalorder %s34, 1
      %p225 = por %p223, %p224
      %p226 = scmp.ne.s32.totalorder %s217, %s218
      %p227 = scmp.eq.s32.totalorder %s34, 0
      %p228 = por %p226, %p227
      %p229 = scmp.ne.s32.totalorder %s217, %s218
      %p230 = scmp.eq.s32.totalorder %s35, 1
      %p231 = por %p229, %p230
      %p233 = scmp.ne.s32.totalorder %s218, %s232
      %p234 = scmp.eq.s32.totalorder %s35, 0
      %p235 = por %p233, %p234
      %s237 = sadd.s32 %s236, 1
      %p240 = scmp.eq.s32.totalorder %s29, 1
      %p241 = scmp.ne.s32.totalorder %s236, %s238
      %p242 = scmp.eq.s32.totalorder %s29, 0
      %p243 = por %p241, %p242
      %p244 = scmp.ne.s32.totalorder %s236, %s238
      %p245 = scmp.eq.s32.totalorder %s34, 1
      %p246 = por %p244, %p245
      %p247 = scmp.ne.s32.totalorder %s238, %s239
      %p248 = scmp.eq.s32.totalorder %s34, 0
      %p249 = por %p247, %p248
      %p250 = scmp.ne.s32.totalorder %s238, %s239
      %p251 = scmp.eq.s32.totalorder %s35, 1
      %p252 = por %p250, %p251
      %p254 = scmp.ne.s32.totalorder %s239, %s253
      %p255 = scmp.eq.s32.totalorder %s35, 0
      %p256 = por %p254, %p255
      %s258 = sadd.s32 %s257, 1
      %p261 = scmp.eq.s32.totalorder %s29, 1
      %p262 = scmp.ne.s32.totalorder %s257, %s259
      %p263 = scmp.eq.s32.totalorder %s29, 0
      %p264 = por %p262, %p263
      %p265 = scmp.ne.s32.totalorder %s257, %s259
      %p266 = scmp.eq.s32.totalorder %s34, 1
      %p267 = por %p265, %p266
      %p268 = scmp.ne.s32.totalorder %s259, %s260
      %p269 = scmp.eq.s32.totalorder %s34, 0
      %p270 = por %p268, %p269
      %p271 = scmp.ne.s32.totalorder %s259, %s260
      %p272 = scmp.eq.s32.totalorder %s35, 1
      %p273 = por %p271, %p272
      %p275 = scmp.ne.s32.totalorder %s260, %s274
      %p276 = scmp.eq.s32.totalorder %s35, 0
      %p277 = por %p275, %p276
      %s279 = sadd.s32 %s278, 1
      %p282 = scmp.eq.s32.totalorder %s29, 1
      %p283 = scmp.ne.s32.totalorder %s278, %s280
      %p284 = scmp.eq.s32.totalorder %s29, 0
      %p285 = por %p283, %p284
      %p286 = scmp.ne.s32.totalorder %s278, %s280
      %p287 = scmp.eq.s32.totalorder %s34, 1
      %p288 = por %p286, %p287
      %p289 = scmp.ne.s32.totalorder %s280, %s281
      %p290 = scmp.eq.s32.totalorder %s34, 0
      %p291 = por %p289, %p290
      %p292 = scmp.ne.s32.totalorder %s280, %s281
      %p293 = scmp.eq.s32.totalorder %s35, 1
      %p294 = por %p292, %p293
      %p296 = scmp.ne.s32.totalorder %s281, %s295
      %p297 = scmp.eq.s32.totalorder %s35, 0
      %p298 = por %p296, %p297
      %s299 = ssub.s32 %s29, %s36
      %p300 = scmp.eq.s32.totalorder %s299, 0
      %s302 = sadd.s32 %s301, 1
      %s303 = scalar_select %p300, %s301, %s302
      %p306 = pneg %p300
      %p307 = scmp.eq.s32.totalorder %s29, 1
      %p308 = por %p306, %p307
      %p309 = scmp.ne.s32.totalorder %s301, %s304
      %p310 = scmp.eq.s32.totalorder %s29, 0
      %p311 = por %p309, %p310
      %p312 = scmp.ne.s32.totalorder %s301, %s304
      %p313 = scmp.eq.s32.totalorder %s34, 1
      %p314 = por %p312, %p313
      %p315 = scmp.ne.s32.totalorder %s304, %s305
      %p316 = scmp.eq.s32.totalorder %s34, 0
      %p317 = por %p315, %p316
      %p318 = scmp.ne.s32.totalorder %s304, %s305
      %p319 = scmp.eq.s32.totalorder %s35, 1
      %p320 = por %p318, %p319
      %p322 = scmp.ne.s32.totalorder %s305, %s321
      %p323 = scmp.eq.s32.totalorder %s35, 0
      %p324 = por %p322, %p323
      %p325 = scmp.le.s32.totalorder 1, %s29
      %p326 = scmp.lt.s32.totalorder %s29, 3
      %p327 = pnand %p325, %p326
      %p328 = pneg %p327
      // Predicated region
      $region9: #{tpu_custom_call.1} parent=5 // pred_check
        _
      $region10: #{tpu_custom_call.1} parent=5 // pred_check_branch
        %330 = sbr.rel (%p327) target = $region12
      $region11: #{tpu_custom_call.1} parent=5 // pred_region
        %s331 = ssub.s32 %s29, 1
        // Predicated region
        $region13: #{tpu_custom_call.1} parent=11 // pred_check
          %p332 = pneg %p102
        $region14: #{tpu_custom_call.1} parent=11 // pred_check_branch
          %334 = sbr.rel (%p332) target = $region16
        $region15: #{tpu_custom_call.1} parent=11 // pred_region
          %s336 = ssub.s32 12288, 12288
          %337 = vsyncadd [#allocation6], %s336
          %s338 = sshll.u32 [#allocation7], 4
          %s339 = int_to_ptr.vmem [resolvable:$true] %s338
          %344 = dma.hbm_to_vmem [thread:$0]  %s2, 12288, %s339, [#allocation6], 768, 768, 48
        $region16: #{tpu_custom_call.1} parent=11 // pred_fallthru
          _
        // Predicated region
        $region17: #{tpu_custom_call.1} parent=11 // pred_check
          %p345 = pneg %p123
        $region18: #{tpu_custom_call.1} parent=11 // pred_check_branch
          %347 = sbr.rel (%p345) target = $region20
        $region19: #{tpu_custom_call.1} parent=11 // pred_region
          _
        $region20: #{tpu_custom_call.1} parent=11 // pred_fallthru
          _
        // Predicated region
        $region21: #{tpu_custom_call.1} parent=11 // pred_check
          %p348 = pneg %p144
        $region22: #{tpu_custom_call.1} parent=11 // pred_check_branch
          %350 = sbr.rel (%p348) target = $region24
        $region23: #{tpu_custom_call.1} parent=11 // pred_region
          %s352 = ssub.s32 6144, 6144
          %353 = vsyncadd [#allocation9], %s352
          %s354 = sshll.u32 [#allocation8], 4
          %s355 = int_to_ptr.vmem [resolvable:$true] %s354
          %360 = dma.hbm_to_vmem [thread:$0]  %s4, 6144, %s355, [#allocation9], 384, 384, 24
        $region24: #{tpu_custom_call.1} parent=11 // pred_fallthru
          _
        // Predicated region
        $region25: #{tpu_custom_call.1} parent=11 // pred_check
          %p361 = pneg %p165
        $region26: #{tpu_custom_call.1} parent=11 // pred_check_branch
          %363 = sbr.rel (%p361) target = $region28
        $region27: #{tpu_custom_call.1} parent=11 // pred_region
          _
        $region28: #{tpu_custom_call.1} parent=11 // pred_fallthru
          _
        // Predicated region
        $region29: #{tpu_custom_call.1} parent=11 // pred_check
          %p364 = pneg %p186
        $region30: #{tpu_custom_call.1} parent=11 // pred_check_branch
          %366 = sbr.rel (%p364) target = $region32
        $region31: #{tpu_custom_call.1} parent=11 // pred_region
          %s368 = ssub.s32 2048, 2048
          %369 = vsyncadd [#allocation9], %s368
          %s370 = sshll.u32 [#allocation10], 4
          %s371 = int_to_ptr.vmem [resolvable:$true] %s370
          %376 = dma.hbm_to_vmem [thread:$0]  %s6, 2048, %s371, [#allocation9], 128, 128, 8
        $region32: #{tpu_custom_call.1} parent=11 // pred_fallthru
          _
        // Predicated region
        $region33: #{tpu_custom_call.1} parent=11 // pred_check
          %p377 = pneg %p207
        $region34: #{tpu_custom_call.1} parent=11 // pred_check_branch
          %379 = sbr.rel (%p377) target = $region36
        $region35: #{tpu_custom_call.1} parent=11 // pred_region
          _
        $region36: #{tpu_custom_call.1} parent=11 // pred_fallthru
          _
        // Predicated region
        $region37: #{tpu_custom_call.1} parent=11 // pred_check
          %p380 = pneg %p228
        $region38: #{tpu_custom_call.1} parent=11 // pred_check_branch
          %382 = sbr.rel (%p380) target = $region40
        $region39: #{tpu_custom_call.1} parent=11 // pred_region
          %s384 = ssub.s32 8192, 8192
          %385 = vsyncadd [#allocation12], %s384
          %s386 = sshll.u32 [#allocation11], 4
          %s387 = int_to_ptr.vmem [resolvable:$true] %s386
          %392 = dma.hbm_to_vmem [thread:$0]  %s8, 8192, %s387, [#allocation12], 512, 512, 32
        $region40: #{tpu_custom_call.1} parent=11 // pred_fallthru
          _
        // Predicated region
        $region41: #{tpu_custom_call.1} parent=11 // pred_check
          %p393 = pneg %p249
        $region42: #{tpu_custom_call.1} parent=11 // pred_check_branch
          %395 = sbr.rel (%p393) target = $region44
        $region43: #{tpu_custom_call.1} parent=11 // pred_region
          _
        $region44: #{tpu_custom_call.1} parent=11 // pred_fallthru
          _
        // Predicated region
        $region45: #{tpu_custom_call.1} parent=11 // pred_check
          %p396 = pneg %p270
        $region46: #{tpu_custom_call.1} parent=11 // pred_check_branch
          %398 = sbr.rel (%p396) target = $region48
        $region47: #{tpu_custom_call.1} parent=11 // pred_region
          %s400 = ssub.s32 8192, 8192
          %401 = vsyncadd [#allocation12], %s400
          %s402 = sshll.u32 [#allocation13], 4
          %s403 = int_to_ptr.vmem [resolvable:$true] %s402
          %408 = dma.hbm_to_vmem [thread:$0]  %s10, 8192, %s403, [#allocation12], 128, 128, 8
        $region48: #{tpu_custom_call.1} parent=11 // pred_fallthru
          _
        // Predicated region
        $region49: #{tpu_custom_call.1} parent=11 // pred_check
          %p409 = pneg %p291
        $region50: #{tpu_custom_call.1} parent=11 // pred_check_branch
          %411 = sbr.rel (%p409) target = $region52
        $region51: #{tpu_custom_call.1} parent=11 // pred_region
          _
        $region52: #{tpu_custom_call.1} parent=11 // pred_fallthru
          _
      $region12: #{tpu_custom_call.1} parent=5 // pred_fallthru
        _
      %p412 = scmp.lt.s32.totalorder %s29, 2
      // Predicated region
      $region53: #{tpu_custom_call.1} parent=5 // pred_check
        %p413 = pneg %p412
      $region54: #{tpu_custom_call.1} parent=5 // pred_check_branch
        %415 = sbr.rel (%p413) target = $region56
      $region55: #{tpu_custom_call.1} parent=5 // pred_region
        // Predicated region
        $region57: #{tpu_custom_call.1} parent=55 // pred_check
          %p416 = pneg %p49
        $region58: #{tpu_custom_call.1} parent=55 // pred_check_branch
          %418 = sbr.rel (%p416) target = $region60
        $region59: #{tpu_custom_call.1} parent=55 // pred_region
          %s419 = sand.u32 %s39, 1
          %s420 = scalar_lea.sflag [#allocation3], %s419
          %s421 = sand.u32 %s39, 1
          %s422 = scalar_lea.vmem [#allocation2], %s421
          %s424 = ssub.s32 16, 16
          %425 = vsyncadd %s420, %s424
          %s426 = smul.addr %s29, 16
          %s427 = scalar_lea.hbm %s0, %s426
          %s429 = sshll.u32 %s422, 4
          %s430 = int_to_ptr.vmem [resolvable:$true] %s429
          %432 = dma.hbm_to_vmem [thread:$0]  %s427, 16, %s430, %s420
        $region60: #{tpu_custom_call.1} parent=55 // pred_fallthru
          _
        // Predicated region
        $region61: #{tpu_custom_call.1} parent=55 // pred_check
          %p433 = pneg %p75
        $region62: #{tpu_custom_call.1} parent=55 // pred_check_branch
          %435 = sbr.rel (%p433) target = $region64
        $region63: #{tpu_custom_call.1} parent=55 // pred_region
          %s436 = sand.u32 %s29, 1
          %s437 = scalar_lea.sflag [#allocation6], %s436
          %s438 = sand.u32 %s65, 1
          %s439 = smul.addr %s438, 16
          %s440 = scalar_lea.vmem [#allocation5], %s439
          %s442 = ssub.s32 256, 256
          %443 = vsyncadd %s437, %s442
          %s444 = smul.addr %s29, 2
          %s445 = smul.addr %s444, 128
          %s446 = scalar_lea.hbm %s1, %s445
          %s447 = sshll.u32 %s440, 4
          %s448 = int_to_ptr.vmem [resolvable:$true] %s447
          %453 = dma.hbm_to_vmem [thread:$0]  %s446, 256, %s448, %s437, 128, 128, 8
        $region64: #{tpu_custom_call.1} parent=55 // pred_fallthru
          _
      $region56: #{tpu_custom_call.1} parent=5 // pred_fallthru
        _
      %p454 = scmp.le.s32.totalorder 1, %s29
      %p455 = scmp.lt.s32.totalorder %s29, 3
      %p456 = pnand %p454, %p455
      %p457 = pneg %p456
      // Predicated region
      $region65: #{tpu_custom_call.1} parent=5 // pred_check
        _
      $region66: #{tpu_custom_call.1} parent=5 // pred_check_branch
        %459 = sbr.rel (%p456) target = $region68
      $region67: #{tpu_custom_call.1} parent=5 // pred_region
        %s460 = ssub.s32 %s29, 1
        %s461 = sand.u32 %s42, 1
        %s462 = scalar_lea.sflag [#allocation3], %s461
        %s463 = sand.u32 %s42, 1
        %s464 = scalar_lea.vmem [#allocation2], %s463
        // Predicated region
        $region69: #{tpu_custom_call.1} parent=67 // pred_check
          %p465 = pneg %p55
        $region70: #{tpu_custom_call.1} parent=67 // pred_check_branch
          %467 = sbr.rel (%p465) target = $region72
        $region71: #{tpu_custom_call.1} parent=67 // pred_region
          %468 = dma.done %s462, 16
        $region72: #{tpu_custom_call.1} parent=67 // pred_fallthru
          _
        %s469 = sand.u32 %s34, 1
        %s470 = scalar_lea.sflag [#allocation6], %s469
        %s471 = sand.u32 %s68, 1
        %s472 = smul.addr %s471, 16
        %s473 = scalar_lea.vmem [#allocation5], %s472
        // Predicated region
        $region73: #{tpu_custom_call.1} parent=67 // pred_check
          %p474 = pneg %p81
        $region74: #{tpu_custom_call.1} parent=67 // pred_check_branch
          %476 = sbr.rel (%p474) target = $region76
        $region75: #{tpu_custom_call.1} parent=67 // pred_region
          %477 = dma.done %s470, 256
        $region76: #{tpu_custom_call.1} parent=67 // pred_fallthru
          _
        // Predicated region
        $region77: #{tpu_custom_call.1} parent=67 // pred_check
          %p478 = pneg %p102
        $region78: #{tpu_custom_call.1} parent=67 // pred_check_branch
          %480 = sbr.rel (%p478) target = $region80
        $region79: #{tpu_custom_call.1} parent=67 // pred_region
          %481 = dma.done [#allocation6], 12288
        $region80: #{tpu_custom_call.1} parent=67 // pred_fallthru
          _
        // Predicated region
        $region81: #{tpu_custom_call.1} parent=67 // pred_check
          %p482 = pneg %p144
        $region82: #{tpu_custom_call.1} parent=67 // pred_check_branch
          %484 = sbr.rel (%p482) target = $region84
        $region83: #{tpu_custom_call.1} parent=67 // pred_region
          %485 = dma.done [#allocation9], 6144
        $region84: #{tpu_custom_call.1} parent=67 // pred_fallthru
          _
        // Predicated region
        $region85: #{tpu_custom_call.1} parent=67 // pred_check
          %p486 = pneg %p186
        $region86: #{tpu_custom_call.1} parent=67 // pred_check_branch
          %488 = sbr.rel (%p486) target = $region88
        $region87: #{tpu_custom_call.1} parent=67 // pred_region
          %489 = dma.done [#allocation9], 2048
        $region88: #{tpu_custom_call.1} parent=67 // pred_fallthru
          _
        // Predicated region
        $region89: #{tpu_custom_call.1} parent=67 // pred_check
          %p490 = pneg %p228
        $region90: #{tpu_custom_call.1} parent=67 // pred_check_branch
          %492 = sbr.rel (%p490) target = $region92
        $region91: #{tpu_custom_call.1} parent=67 // pred_region
          %493 = dma.done [#allocation12], 8192
        $region92: #{tpu_custom_call.1} parent=67 // pred_fallthru
          _
        // Predicated region
        $region93: #{tpu_custom_call.1} parent=67 // pred_check
          %p494 = pneg %p270
        $region94: #{tpu_custom_call.1} parent=67 // pred_check_branch
          %496 = sbr.rel (%p494) target = $region96
        $region95: #{tpu_custom_call.1} parent=67 // pred_region
          %497 = dma.done [#allocation12], 8192
        $region96: #{tpu_custom_call.1} parent=67 // pred_fallthru
          _
        %s498 = sand.u32 %s42, 1
        %s499 = scalar_lea.sflag [#allocation3], %s498
        %s500 = sand.u32 %s42, 1
        %s501 = scalar_lea.vmem [#allocation2], %s500
        %p502 = pneg %p55
        %p503 = pneg %p52
        %s504 = sand.u32 %s34, 1
        %s505 = scalar_lea.sflag [#allocation6], %s504
        %s506 = sand.u32 %s68, 1
        %s507 = smul.addr %s506, 16
        %s508 = scalar_lea.vmem [#allocation5], %s507
        %p509 = pneg %p81
        %p510 = pneg %p78
        %p511 = pneg %p102
        %p512 = pneg %p99
        %p513 = pneg %p123
        %p514 = pneg %p120
        %p515 = pneg %p144
        %p516 = pneg %p141
        %p517 = pneg %p165
        %p518 = pneg %p162
        %p519 = pneg %p186
        %p520 = pneg %p183
        %p521 = pneg %p207
        %p522 = pneg %p204
        %p523 = pneg %p228
        %p524 = pneg %p225
        %p525 = pneg %p249
        %p526 = pneg %p246
        %p527 = pneg %p270
        %p528 = pneg %p267
        %p529 = pneg %p291
        %p530 = pneg %p288
        %p531 = pneg %p317
        %p532 = pneg %p314
        %s533 = sand.u32 %s304, 1
        %s534 = scalar_lea.sflag [#allocation4], %s533
        %s535 = sand.u32 %s304, 1
        %s536 = smul.addr %s535, 16
        %s537 = scalar_lea.vmem [#allocation14], %s536
        %v538 = vld [vmem:[%s473] sm:$0xff]
        %v539 = vld [vmem:[%s473 + $0x8] sm:$0xff]
        %v540 = vld [vmem:[%s464] sm:$0x1]
        %v541 = vxor.u32 %v540, 2147483648
        %v542 = vmul.f32 %v541, 1.442695
        %v543 = vpow.pop %v542
        %v544 = vadd.f32 %v543, 1.0
        %v545 = vrcp.pop %v544
        %v546 = vmul.f32 1.0, %v545
        %v547 = vmul.f32 %v540, %v546
        %v548 = vld [vmem:[#allocation7] sm:$0xff]
        %v549 = vld [vmem:[#allocation7 + $0x8] sm:$0xff]
        %v550 = vld [vmem:[#allocation7 + $0x10] sm:$0xff]
        %v551 = vld [vmem:[#allocation7 + $0x18] sm:$0xff]
        %v552 = vld [vmem:[#allocation7 + $0x20] sm:$0xff]
        %v553 = vld [vmem:[#allocation7 + $0x28] sm:$0xff]
        %v554 = vld [vmem:[#allocation7 + $0x30] sm:$0xff]
        %v555 = vld [vmem:[#allocation7 + $0x38] sm:$0xff]
        %v556 = vld [vmem:[#allocation7 + $0x40] sm:$0xff]
        %v557 = vld [vmem:[#allocation7 + $0x48] sm:$0xff]
        %v558 = vld [vmem:[#allocation7 + $0x50] sm:$0xff]
        %v559 = vld [vmem:[#allocation7 + $0x58] sm:$0xff]
        %v560 = vld [vmem:[#allocation7 + $0x60] sm:$0xff]
        %v561 = vld [vmem:[#allocation7 + $0x68] sm:$0xff]
        %v562 = vld [vmem:[#allocation7 + $0x70] sm:$0xff]
        %v563 = vld [vmem:[#allocation7 + $0x78] sm:$0xff]
        %v564 = vld [vmem:[#allocation7 + $0x80] sm:$0xff]
        %v565 = vld [vmem:[#allocation7 + $0x88] sm:$0xff]
        %v566 = vld [vmem:[#allocation7 + $0x90] sm:$0xff]
        %v567 = vld [vmem:[#allocation7 + $0x98] sm:$0xff]
        %v568 = vld [vmem:[#allocation7 + $0xa0] sm:$0xff]
        %v569 = vld [vmem:[#allocation7 + $0xa8] sm:$0xff]
        %v570 = vld [vmem:[#allocation7 + $0xb0] sm:$0xff]
        %v571 = vld [vmem:[#allocation7 + $0xb8] sm:$0xff]
        %v572 = vld [vmem:[#allocation7 + $0xc0] sm:$0xff]
        %v573 = vld [vmem:[#allocation7 + $0xc8] sm:$0xff]
        %v574 = vld [vmem:[#allocation7 + $0xd0] sm:$0xff]
        %v575 = vld [vmem:[#allocation7 + $0xd8] sm:$0xff]
        %v576 = vld [vmem:[#allocation7 + $0xe0] sm:$0xff]
        %v577 = vld [vmem:[#allocation7 + $0xe8] sm:$0xff]
        %v578 = vld [vmem:[#allocation7 + $0xf0] sm:$0xff]
        %v579 = vld [vmem:[#allocation7 + $0xf8] sm:$0xff]
        %v580 = vld [vmem:[#allocation7 + $0x100] sm:$0xff]
        %v581 = vld [vmem:[#allocation7 + $0x108] sm:$0xff]
        %v582 = vld [vmem:[#allocation7 + $0x110] sm:$0xff]
        %v583 = vld [vmem:[#allocation7 + $0x118] sm:$0xff]
        %v584 = vld [vmem:[#allocation7 + $0x120] sm:$0xff]
        %v585 = vld [vmem:[#allocation7 + $0x128] sm:$0xff]
        %v586 = vld [vmem:[#allocation7 + $0x130] sm:$0xff]
        %v587 = vld [vmem:[#allocation7 + $0x138] sm:$0xff]
        %v588 = vld [vmem:[#allocation7 + $0x140] sm:$0xff]
        %v589 = vld [vmem:[#allocation7 + $0x148] sm:$0xff]
        %v590 = vld [vmem:[#allocation7 + $0x150] sm:$0xff]
        %v591 = vld [vmem:[#allocation7 + $0x158] sm:$0xff]
        %v592 = vld [vmem:[#allocation7 + $0x160] sm:$0xff]
        %v593 = vld [vmem:[#allocation7 + $0x168] sm:$0xff]
        %v594 = vld [vmem:[#allocation7 + $0x170] sm:$0xff]
        %v595 = vld [vmem:[#allocation7 + $0x178] sm:$0xff]
        %v596 = vld [vmem:[#allocation7 + $0x180] sm:$0xff]
        %v597 = vld [vmem:[#allocation7 + $0x188] sm:$0xff]
        %v598 = vld [vmem:[#allocation7 + $0x190] sm:$0xff]
        %v599 = vld [vmem:[#allocation7 + $0x198] sm:$0xff]
        %v600 = vld [vmem:[#allocation7 + $0x1a0] sm:$0xff]
        %v601 = vld [vmem:[#allocation7 + $0x1a8] sm:$0xff]
        %v602 = vld [vmem:[#allocation7 + $0x1b0] sm:$0xff]
        %v603 = vld [vmem:[#allocation7 + $0x1b8] sm:$0xff]
        %v604 = vld [vmem:[#allocation7 + $0x1c0] sm:$0xff]
        %v605 = vld [vmem:[#allocation7 + $0x1c8] sm:$0xff]
        %v606 = vld [vmem:[#allocation7 + $0x1d0] sm:$0xff]
        %v607 = vld [vmem:[#allocation7 + $0x1d8] sm:$0xff]
        %v608 = vld [vmem:[#allocation7 + $0x1e0] sm:$0xff]
        %v609 = vld [vmem:[#allocation7 + $0x1e8] sm:$0xff]
        %v610 = vld [vmem:[#allocation7 + $0x1f0] sm:$0xff]
        %v611 = vld [vmem:[#allocation7 + $0x1f8] sm:$0xff]
        %v612 = vld [vmem:[#allocation7 + $0x200] sm:$0xff]
        %v613 = vld [vmem:[#allocation7 + $0x208] sm:$0xff]
        %v614 = vld [vmem:[#allocation7 + $0x210] sm:$0xff]
        %v615 = vld [vmem:[#allocation7 + $0x218] sm:$0xff]
        %v616 = vld [vmem:[#allocation7 + $0x220] sm:$0xff]
        %v617 = vld [vmem:[#allocation7 + $0x228] sm:$0xff]
        %v618 = vld [vmem:[#allocation7 + $0x230] sm:$0xff]
        %v619 = vld [vmem:[#allocation7 + $0x238] sm:$0xff]
        %v620 = vld [vmem:[#allocation7 + $0x240] sm:$0xff]
        %v621 = vld [vmem:[#allocation7 + $0x248] sm:$0xff]
        %v622 = vld [vmem:[#allocation7 + $0x250] sm:$0xff]
        %v623 = vld [vmem:[#allocation7 + $0x258] sm:$0xff]
        %v624 = vld [vmem:[#allocation7 + $0x260] sm:$0xff]
        %v625 = vld [vmem:[#allocation7 + $0x268] sm:$0xff]
        %v626 = vld [vmem:[#allocation7 + $0x270] sm:$0xff]
        %v627 = vld [vmem:[#allocation7 + $0x278] sm:$0xff]
        %v628 = vld [vmem:[#allocation7 + $0x280] sm:$0xff]
        %v629 = vld [vmem:[#allocation7 + $0x288] sm:$0xff]
        %v630 = vld [vmem:[#allocation7 + $0x290] sm:$0xff]
        %v631 = vld [vmem:[#allocation7 + $0x298] sm:$0xff]
        %v632 = vld [vmem:[#allocation7 + $0x2a0] sm:$0xff]
        %v633 = vld [vmem:[#allocation7 + $0x2a8] sm:$0xff]
        %v634 = vld [vmem:[#allocation7 + $0x2b0] sm:$0xff]
        %v635 = vld [vmem:[#allocation7 + $0x2b8] sm:$0xff]
        %v636 = vld [vmem:[#allocation7 + $0x2c0] sm:$0xff]
        %v637 = vld [vmem:[#allocation7 + $0x2c8] sm:$0xff]
        %v638 = vld [vmem:[#allocation7 + $0x2d0] sm:$0xff]
        %v639 = vld [vmem:[#allocation7 + $0x2d8] sm:$0xff]
        %v640 = vld [vmem:[#allocation7 + $0x2e0] sm:$0xff]
        %v641 = vld [vmem:[#allocation7 + $0x2e8] sm:$0xff]
        %v642 = vld [vmem:[#allocation7 + $0x2f0] sm:$0xff]
        %v643 = vld [vmem:[#allocation7 + $0x2f8] sm:$0xff]
        %v644 = vld [vmem:[%s3] sm:$0x3f]
        %v646 = vlaneseq
        %v647 = vshrl.u32 %v646, 7
        %v648 = vsub.s32 0, %v647
        %v649 = vrot.slane %v644, %v648
        %v650 = vlaneseq
        %v651 = vshrl.u32 %v650, 7
        %v652 = vsub.s32 1, %v651
        %v653 = vrot.slane %v644, %v652
        %v654 = vlaneseq
        %v655 = vshrl.u32 %v654, 7
        %v656 = vsub.s32 2, %v655
        %v657 = vrot.slane %v644, %v656
        %v658 = vlaneseq
        %v659 = vshrl.u32 %v658, 7
        %v660 = vsub.s32 3, %v659
        %v661 = vrot.slane %v644, %v660
        %v662 = vlaneseq
        %v663 = vshrl.u32 %v662, 7
        %v664 = vsub.s32 4, %v663
        %v665 = vrot.slane %v644, %v664
        %v666 = vlaneseq
        %v667 = vshrl.u32 %v666, 7
        %v668 = vsub.s32 5, %v667
        %v669 = vrot.slane %v644, %v668
        %676 = vmatprep.subr.mxu0 %v549
        %677 = vmatpush1.msra.mxu0 %v548
        %678 = vmatprep.subr.mxu0 %v555
        %679 = vmatpush1.msra.mxu0 %v554
        %680 = vmatprep.subr.mxu0 %v561
        %681 = vmatpush1.msra.mxu0 %v560
        %682 = vmatprep.subr.mxu0 %v567
        %683 = vmatpush1.msra.mxu0 %v566
        %684 = vmatprep.subr.mxu0 %v573
        %685 = vmatpush1.msra.mxu0 %v572
        %686 = vmatprep.subr.mxu0 %v579
        %687 = vmatpush1.msra.mxu0 %v578
        %688 = vmatprep.subr.mxu0 %v585
        %689 = vmatpush1.msra.mxu0 %v584
        %690 = vmatprep.subr.mxu0 %v591
        %691 = vmatpush1.msra.mxu0 %v590
        %692 = vmatprep.subr.mxu0 %v597
        %693 = vmatpush1.msra.mxu0 %v596
        %694 = vmatprep.subr.mxu0 %v603
        %695 = vmatpush1.msra.mxu0 %v602
        %696 = vmatprep.subr.mxu0 %v609
        %697 = vmatpush1.msra.mxu0 %v608
        %698 = vmatprep.subr.mxu0 %v615
        %699 = vmatpush1.msra.mxu0 %v614
        %700 = vmatprep.subr.mxu0 %v621
        %701 = vmatpush1.msra.mxu0 %v620
        %702 = vmatprep.subr.mxu0 %v627
        %703 = vmatpush1.msra.mxu0 %v626
        %704 = vmatprep.subr.mxu0 %v633
        %705 = vmatpush1.msra.mxu0 %v632
        %706 = vmatprep.subr.mxu0 %v639
        %707 = vmatpush1.msra.mxu0 %v638
        %708 = vmatprep.subr.mxu0 0.0
        %709 = vmatpush1.msra.mxu0 0.0
        %710 = vmatprep.subr.mxu0 0.0
        %711 = vmatpush1.msra.mxu0 0.0
        %712 = vmatprep.subr.mxu0 0.0
        %713 = vmatpush1.msra.mxu0 0.0
        %714 = vmatprep.subr.mxu0 0.0
        %715 = vmatpush1.msra.mxu0 0.0
        %716 = vmatprep.subr.mxu0 0.0
        %717 = vmatpush1.msra.mxu0 0.0
        %718 = vmatprep.subr.mxu0 0.0
        %719 = vmatpush1.msra.mxu0 0.0
        %720 = vmatprep.subr.mxu0 0.0
        %721 = vmatpush1.msra.mxu0 0.0
        %722 = vmatprep.subr.mxu0 0.0
        %723 = vmatpush1.msra.mxu0 0.0
        %724 = vmatprep.subr.mxu0 0.0
        %725 = vmatpush1.msra.mxu0 0.0
        %726 = vmatprep.subr.mxu0 0.0
        %727 = vmatpush1.msra.mxu0 0.0
        %728 = vmatprep.subr.mxu0 0.0
        %729 = vmatpush1.msra.mxu0 0.0
        %730 = vmatprep.subr.mxu0 0.0
        %731 = vmatpush1.msra.mxu0 0.0
        %732 = vmatprep.subr.mxu0 0.0
        %733 = vmatpush1.msra.mxu0 0.0
        %734 = vmatprep.subr.mxu0 0.0
        %735 = vmatpush1.msra.mxu0 0.0
        %736 = vmatprep.subr.mxu0 0.0
        %737 = vmatpush1.msra.mxu0 0.0
        %738 = vmatprep.subr.mxu0 0.0
        %739 = vmatpush1.msra.mxu0 0.0
        %740 = vmatprep.mubr.f32.mxu0 0.0
        %741 = vmatmul.mubr.f32.gmra.mrb[0].mxu0 %v547
        %v742 = vpop.f32.mrb[0].mxu0
        %v743 = vadd.f32 %v649, %v742
        %v744 = vpop.f32.mrb[0].mxu0
        %v745 = vadd.f32 %v653, %v744
        %746 = vdwg.mxu0
        %747 = vmatprep.subr.mxu0 %v551
        %748 = vmatpush1.msra.mxu0 %v550
        %749 = vmatprep.subr.mxu0 %v557
        %750 = vmatpush1.msra.mxu0 %v556
        %751 = vmatprep.subr.mxu0 %v563
        %752 = vmatpush1.msra.mxu0 %v562
        %753 = vmatprep.subr.mxu0 %v569
        %754 = vmatpush1.msra.mxu0 %v568
        %755 = vmatprep.subr.mxu0 %v575
        %756 = vmatpush1.msra.mxu0 %v574
        %757 = vmatprep.subr.mxu0 %v581
        %758 = vmatpush1.msra.mxu0 %v580
        %759 = vmatprep.subr.mxu0 %v587
        %760 = vmatpush1.msra.mxu0 %v586
        %761 = vmatprep.subr.mxu0 %v593
        %762 = vmatpush1.msra.mxu0 %v592
        %763 = vmatprep.subr.mxu0 %v599
        %764 = vmatpush1.msra.mxu0 %v598
        %765 = vmatprep.subr.mxu0 %v605
        %766 = vmatpush1.msra.mxu0 %v604
        %767 = vmatprep.subr.mxu0 %v611
        %768 = vmatpush1.msra.mxu0 %v610
        %769 = vmatprep.subr.mxu0 %v617
        %770 = vmatpush1.msra.mxu0 %v616
        %771 = vmatprep.subr.mxu0 %v623
        %772 = vmatpush1.msra.mxu0 %v622
        %773 = vmatprep.subr.mxu0 %v629
        %774 = vmatpush1.msra.mxu0 %v628
        %775 = vmatprep.subr.mxu0 %v635
        %776 = vmatpush1.msra.mxu0 %v634
        %777 = vmatprep.subr.mxu0 %v641
        %778 = vmatpush1.msra.mxu0 %v640
        %779 = vmatprep.subr.mxu0 0.0
        %780 = vmatpush1.msra.mxu0 0.0
        %781 = vmatprep.subr.mxu0 0.0
        %782 = vmatpush1.msra.mxu0 0.0
        %783 = vmatprep.subr.mxu0 0.0
        %784 = vmatpush1.msra.mxu0 0.0
        %785 = vmatprep.subr.mxu0 0.0
        %786 = vmatpush1.msra.mxu0 0.0
        %787 = vmatprep.subr.mxu0 0.0
        %788 = vmatpush1.msra.mxu0 0.0
        %789 = vmatprep.subr.mxu0 0.0
        %790 = vmatpush1.msra.mxu0 0.0
        %791 = vmatprep.subr.mxu0 0.0
        %792 = vmatpush1.msra.mxu0 0.0
        %793 = vmatprep.subr.mxu0 0.0
        %794 = vmatpush1.msra.mxu0 0.0
        %795 = vmatprep.subr.mxu0 0.0
        %796 = vmatpush1.msra.mxu0 0.0
        %797 = vmatprep.subr.mxu0 0.0
        %798 = vmatpush1.msra.mxu0 0.0
        %799 = vmatprep.subr.mxu0 0.0
        %800 = vmatpush1.msra.mxu0 0.0
        %801 = vmatprep.subr.mxu0 0.0
        %802 = vmatpush1.msra.mxu0 0.0
        %803 = vmatprep.subr.mxu0 0.0
        %804 = vmatpush1.msra.mxu0 0.0
        %805 = vmatprep.subr.mxu0 0.0
        %806 = vmatpush1.msra.mxu0 0.0
        %807 = vmatprep.subr.mxu0 0.0
        %808 = vmatpush1.msra.mxu0 0.0
        %809 = vmatprep.subr.mxu0 0.0
        %810 = vmatpush1.msra.mxu0 0.0
        %811 = vmatprep.mubr.f32.mxu0 0.0
        %812 = vmatmul.mubr.f32.gmra.mrb[0].mxu0 %v547
        %v813 = vpop.f32.mrb[0].mxu0
        %v814 = vadd.f32 %v657, %v813
        %v815 = vpop.f32.mrb[0].mxu0
        %v816 = vadd.f32 %v661, %v815
        %817 = vdwg.mxu0
        %818 = vmatprep.subr.mxu0 %v553
        %819 = vmatpush1.msra.mxu0 %v552
        %820 = vmatprep.subr.mxu0 %v559
        %821 = vmatpush1.msra.mxu0 %v558
        %822 = vmatprep.subr.mxu0 %v565
        %823 = vmatpush1.msra.mxu0 %v564
        %824 = vmatprep.subr.mxu0 %v571
        %825 = vmatpush1.msra.mxu0 %v570
        %826 = vmatprep.subr.mxu0 %v577
        %827 = vmatpush1.msra.mxu0 %v576
        %828 = vmatprep.subr.mxu0 %v583
        %829 = vmatpush1.msra.mxu0 %v582
        %830 = vmatprep.subr.mxu0 %v589
        %831 = vmatpush1.msra.mxu0 %v588
        %832 = vmatprep.subr.mxu0 %v595
        %833 = vmatpush1.msra.mxu0 %v594
        %834 = vmatprep.subr.mxu0 %v601
        %835 = vmatpush1.msra.mxu0 %v600
        %836 = vmatprep.subr.mxu0 %v607
        %837 = vmatpush1.msra.mxu0 %v606
        %838 = vmatprep.subr.mxu0 %v613
        %839 = vmatpush1.msra.mxu0 %v612
        %840 = vmatprep.subr.mxu0 %v619
        %841 = vmatpush1.msra.mxu0 %v618
        %842 = vmatprep.subr.mxu0 %v625
        %843 = vmatpush1.msra.mxu0 %v624
        %844 = vmatprep.subr.mxu0 %v631
        %845 = vmatpush1.msra.mxu0 %v630
        %846 = vmatprep.subr.mxu0 %v637
        %847 = vmatpush1.msra.mxu0 %v636
        %848 = vmatprep.subr.mxu0 %v643
        %849 = vmatpush1.msra.mxu0 %v642
        %850 = vmatprep.subr.mxu0 0.0
        %851 = vmatpush1.msra.mxu0 0.0
        %852 = vmatprep.subr.mxu0 0.0
        %853 = vmatpush1.msra.mxu0 0.0
        %854 = vmatprep.subr.mxu0 0.0
        %855 = vmatpush1.msra.mxu0 0.0
        %856 = vmatprep.subr.mxu0 0.0
        %857 = vmatpush1.msra.mxu0 0.0
        %858 = vmatprep.subr.mxu0 0.0
        %859 = vmatpush1.msra.mxu0 0.0
        %860 = vmatprep.subr.mxu0 0.0
        %861 = vmatpush1.msra.mxu0 0.0
        %862 = vmatprep.subr.mxu0 0.0
        %863 = vmatpush1.msra.mxu0 0.0
        %864 = vmatprep.subr.mxu0 0.0
        %865 = vmatpush1.msra.mxu0 0.0
        %866 = vmatprep.subr.mxu0 0.0
        %867 = vmatpush1.msra.mxu0 0.0
        %868 = vmatprep.subr.mxu0 0.0
        %869 = vmatpush1.msra.mxu0 0.0
        %870 = vmatprep.subr.mxu0 0.0
        %871 = vmatpush1.msra.mxu0 0.0
        %872 = vmatprep.subr.mxu0 0.0
        %873 = vmatpush1.msra.mxu0 0.0
        %874 = vmatprep.subr.mxu0 0.0
        %875 = vmatpush1.msra.mxu0 0.0
        %876 = vmatprep.subr.mxu0 0.0
        %877 = vmatpush1.msra.mxu0 0.0
        %878 = vmatprep.subr.mxu0 0.0
        %879 = vmatpush1.msra.mxu0 0.0
        %880 = vmatprep.subr.mxu0 0.0
        %881 = vmatpush1.msra.mxu0 0.0
        %882 = vmatprep.mubr.f32.mxu0 0.0
        %883 = vmatmul.mubr.f32.gmra.mrb[0].mxu0 %v547
        %v884 = vpop.f32.mrb[0].mxu0
        %v885 = vadd.f32 %v665, %v884
        %v886 = vpop.f32.mrb[0].mxu0
        %v887 = vadd.f32 %v669, %v886
        %888 = vdwg.mxu0
        %889 = vadd.xlane.f32.xlu0 %v538
        %v890 = vpop.xlane.xlu0 %889
        %891 = vadd.xlane.f32.xlu0 %v539
        %v892 = vpop.xlane.xlu0 %891
        %v893 = vrcp.pop 128.0
        %v894 = vmul.f32 %v890, %v893
        %v895 = vmul.f32 %v892, %v893
        %v896 = vsub.f32 %v538, %v894
        %v897 = vsub.f32 %v539, %v895
        %v898 = vmul.f32 %v896, %v896
        %v899 = vmul.f32 %v897, %v897
        %900 = vadd.xlane.f32.xlu0 %v898
        %v901 = vpop.xlane.xlu0 %900
        %902 = vadd.xlane.f32.xlu0 %v899
        %v903 = vpop.xlane.xlu0 %902
        %v904 = vmul.f32 %v901, %v893
        %v905 = vmul.f32 %v903, %v893
        %v906 = vadd.f32 %v904, 1e-06
        %v907 = vadd.f32 %v905, 1e-06
        %v908 = vrsqrt.pop %v906
        %v909 = vrsqrt.pop %v907
        %v910 = vmul.f32 %v896, %v908
        %v911 = vmul.f32 %v897, %v909
        %v912 = vadd.f32 %v745, 1.0
        %v913 = vlaneseq
        %v914 = vshrl.u32 %v913, 7
        %v915 = vsub.s32 0, %v914
        %v916 = vrot.slane %v912, %v915
        %v917 = vmul.f32 %v910, %v916
        %v918 = vmul.f32 %v911, %v916
        %v919 = vlaneseq
        %v920 = vshrl.u32 %v919, 7
        %v921 = vsub.s32 0, %v920
        %v922 = vrot.slane %v743, %v921
        %v923 = vadd.f32 %v917, %v922
        %v924 = vadd.f32 %v918, %v922
        %v925 = vld [vmem:[#allocation8] sm:$0xff]
        %v926 = vld [vmem:[#allocation8 + $0x8] sm:$0xff]
        %v927 = vld [vmem:[#allocation8 + $0x10] sm:$0xff]
        %v928 = vld [vmem:[#allocation8 + $0x18] sm:$0xff]
        %v929 = vld [vmem:[#allocation8 + $0x20] sm:$0xff]
        %v930 = vld [vmem:[#allocation8 + $0x28] sm:$0xff]
        %v931 = vld [vmem:[#allocation8 + $0x30] sm:$0xff]
        %v932 = vld [vmem:[#allocation8 + $0x38] sm:$0xff]
        %v933 = vld [vmem:[#allocation8 + $0x40] sm:$0xff]
        %v934 = vld [vmem:[#allocation8 + $0x48] sm:$0xff]
        %v935 = vld [vmem:[#allocation8 + $0x50] sm:$0xff]
        %v936 = vld [vmem:[#allocation8 + $0x58] sm:$0xff]
        %v937 = vld [vmem:[#allocation8 + $0x60] sm:$0xff]
        %v938 = vld [vmem:[#allocation8 + $0x68] sm:$0xff]
        %v939 = vld [vmem:[#allocation8 + $0x70] sm:$0xff]
        %v940 = vld [vmem:[#allocation8 + $0x78] sm:$0xff]
        %v941 = vld [vmem:[#allocation8 + $0x80] sm:$0xff]
        %v942 = vld [vmem:[#allocation8 + $0x88] sm:$0xff]
        %v943 = vld [vmem:[#allocation8 + $0x90] sm:$0xff]
        %v944 = vld [vmem:[#allocation8 + $0x98] sm:$0xff]
        %v945 = vld [vmem:[#allocation8 + $0xa0] sm:$0xff]
        %v946 = vld [vmem:[#allocation8 + $0xa8] sm:$0xff]
        %v947 = vld [vmem:[#allocation8 + $0xb0] sm:$0xff]
        %v948 = vld [vmem:[#allocation8 + $0xb8] sm:$0xff]
        %v949 = vld [vmem:[#allocation8 + $0xc0] sm:$0xff]
        %v950 = vld [vmem:[#allocation8 + $0xc8] sm:$0xff]
        %v951 = vld [vmem:[#allocation8 + $0xd0] sm:$0xff]
        %v952 = vld [vmem:[#allocation8 + $0xd8] sm:$0xff]
        %v953 = vld [vmem:[#allocation8 + $0xe0] sm:$0xff]
        %v954 = vld [vmem:[#allocation8 + $0xe8] sm:$0xff]
        %v955 = vld [vmem:[#allocation8 + $0xf0] sm:$0xff]
        %v956 = vld [vmem:[#allocation8 + $0xf8] sm:$0xff]
        %v957 = vld [vmem:[#allocation8 + $0x100] sm:$0xff]
        %v958 = vld [vmem:[#allocation8 + $0x108] sm:$0xff]
        %v959 = vld [vmem:[#allocation8 + $0x110] sm:$0xff]
        %v960 = vld [vmem:[#allocation8 + $0x118] sm:$0xff]
        %v961 = vld [vmem:[#allocation8 + $0x120] sm:$0xff]
        %v962 = vld [vmem:[#allocation8 + $0x128] sm:$0xff]
        %v963 = vld [vmem:[#allocation8 + $0x130] sm:$0xff]
        %v964 = vld [vmem:[#allocation8 + $0x138] sm:$0xff]
        %v965 = vld [vmem:[#allocation8 + $0x140] sm:$0xff]
        %v966 = vld [vmem:[#allocation8 + $0x148] sm:$0xff]
        %v967 = vld [vmem:[#allocation8 + $0x150] sm:$0xff]
        %v968 = vld [vmem:[#allocation8 + $0x158] sm:$0xff]
        %v969 = vld [vmem:[#allocation8 + $0x160] sm:$0xff]
        %v970 = vld [vmem:[#allocation8 + $0x168] sm:$0xff]
        %v971 = vld [vmem:[#allocation8 + $0x170] sm:$0xff]
        %v972 = vld [vmem:[#allocation8 + $0x178] sm:$0xff]
        %v973 = vld [vmem:[%s5] sm:$0x7]
        %v975 = vlaneseq
        %v976 = vshrl.u32 %v975, 7
        %v977 = vsub.s32 0, %v976
        %v978 = vrot.slane %v973, %v977
        %v979 = vlaneseq
        %v980 = vshrl.u32 %v979, 7
        %v981 = vsub.s32 1, %v980
        %v982 = vrot.slane %v973, %v981
        %v983 = vlaneseq
        %v984 = vshrl.u32 %v983, 7
        %v985 = vsub.s32 2, %v984
        %v986 = vrot.slane %v973, %v985
        %990 = vmatprep.subr.mxu0 %v926
        %991 = vmatpush1.msra.mxu0 %v925
        %992 = vmatprep.subr.mxu0 %v929
        %993 = vmatpush1.msra.mxu0 %v928
        %994 = vmatprep.subr.mxu0 %v932
        %995 = vmatpush1.msra.mxu0 %v931
        %996 = vmatprep.subr.mxu0 %v935
        %997 = vmatpush1.msra.mxu0 %v934
        %998 = vmatprep.subr.mxu0 %v938
        %999 = vmatpush1.msra.mxu0 %v937
        %1000 = vmatprep.subr.mxu0 %v941
        %1001 = vmatpush1.msra.mxu0 %v940
        %1002 = vmatprep.subr.mxu0 %v944
        %1003 = vmatpush1.msra.mxu0 %v943
        %1004 = vmatprep.subr.mxu0 %v947
        %1005 = vmatpush1.msra.mxu0 %v946
        %1006 = vmatprep.subr.mxu0 %v950
        %1007 = vmatpush1.msra.mxu0 %v949
        %1008 = vmatprep.subr.mxu0 %v953
        %1009 = vmatpush1.msra.mxu0 %v952
        %1010 = vmatprep.subr.mxu0 %v956
        %1011 = vmatpush1.msra.mxu0 %v955
        %1012 = vmatprep.subr.mxu0 %v959
        %1013 = vmatpush1.msra.mxu0 %v958
        %1014 = vmatprep.subr.mxu0 %v962
        %1015 = vmatpush1.msra.mxu0 %v961
        %1016 = vmatprep.subr.mxu0 %v965
        %1017 = vmatpush1.msra.mxu0 %v964
        %1018 = vmatprep.subr.mxu0 %v968
        %1019 = vmatpush1.msra.mxu0 %v967
        %1020 = vmatprep.subr.mxu0 %v971
        %1021 = vmatpush1.msra.mxu0 %v970
        %1022 = vmatprep.subr.mxu0 0.0
        %1023 = vmatpush1.msra.mxu0 0.0
        %1024 = vmatprep.subr.mxu0 0.0
        %1025 = vmatpush1.msra.mxu0 0.0
        %1026 = vmatprep.subr.mxu0 0.0
        %1027 = vmatpush1.msra.mxu0 0.0
        %1028 = vmatprep.subr.mxu0 0.0
        %1029 = vmatpush1.msra.mxu0 0.0
        %1030 = vmatprep.subr.mxu0 0.0
        %1031 = vmatpush1.msra.mxu0 0.0
        %1032 = vmatprep.subr.mxu0 0.0
        %1033 = vmatpush1.msra.mxu0 0.0
        %1034 = vmatprep.subr.mxu0 0.0
        %1035 = vmatpush1.msra.mxu0 0.0
        %1036 = vmatprep.subr.mxu0 0.0
        %1037 = vmatpush1.msra.mxu0 0.0
        %1038 = vmatprep.subr.mxu0 0.0
        %1039 = vmatpush1.msra.mxu0 0.0
        %1040 = vmatprep.subr.mxu0 0.0
        %1041 = vmatpush1.msra.mxu0 0.0
        %1042 = vmatprep.subr.mxu0 0.0
        %1043 = vmatpush1.msra.mxu0 0.0
        %1044 = vmatprep.subr.mxu0 0.0
        %1045 = vmatpush1.msra.mxu0 0.0
        %1046 = vmatprep.subr.mxu0 0.0
        %1047 = vmatpush1.msra.mxu0 0.0
        %1048 = vmatprep.subr.mxu0 0.0
        %1049 = vmatpush1.msra.mxu0 0.0
        %1050 = vmatprep.subr.mxu0 0.0
        %1051 = vmatpush1.msra.mxu0 0.0
        %1052 = vmatprep.subr.mxu0 0.0
        %1053 = vmatpush1.msra.mxu0 0.0
        %1054 = vmatprep.mubr.f32.mxu0 0.0
        %1055 = vmatmul.mubr.f32.gmra.mrb[0].mxu0 %v923
        %v1056 = vpop.f32.mrb[0].mxu0
        %v1057 = vadd.f32 %v978, %v1056
        %v1058 = vpop.f32.mrb[0].mxu0
        %v1059 = vadd.f32 %v982, %v1058
        %1060 = vmatprep.mubr.f32.mxu0 0.0
        %1061 = vmatmul.mubr.f32.gmra.mrb[0].mxu0 %v924
        %v1062 = vpop.f32.mrb[0].mxu0
        %v1063 = vadd.f32 %v978, %v1062
        %v1064 = vpop.f32.mrb[0].mxu0
        %v1065 = vadd.f32 %v982, %v1064
        %1066 = vdwg.mxu0
        %1067 = vmatprep.subr.mxu0 0.0
        %1068 = vmatpush1.msra.mxu0 %v927
        %1069 = vmatprep.subr.mxu0 0.0
        %1070 = vmatpush1.msra.mxu0 %v930
        %1071 = vmatprep.subr.mxu0 0.0
        %1072 = vmatpush1.msra.mxu0 %v933
        %1073 = vmatprep.subr.mxu0 0.0
        %1074 = vmatpush1.msra.mxu0 %v936
        %1075 = vmatprep.subr.mxu0 0.0
        %1076 = vmatpush1.msra.mxu0 %v939
        %1077 = vmatprep.subr.mxu0 0.0
        %1078 = vmatpush1.msra.mxu0 %v942
        %1079 = vmatprep.subr.mxu0 0.0
        %1080 = vmatpush1.msra.mxu0 %v945
        %1081 = vmatprep.subr.mxu0 0.0
        %1082 = vmatpush1.msra.mxu0 %v948
        %1083 = vmatprep.subr.mxu0 0.0
        %1084 = vmatpush1.msra.mxu0 %v951
        %1085 = vmatprep.subr.mxu0 0.0
        %1086 = vmatpush1.msra.mxu0 %v954
        %1087 = vmatprep.subr.mxu0 0.0
        %1088 = vmatpush1.msra.mxu0 %v957
        %1089 = vmatprep.subr.mxu0 0.0
        %1090 = vmatpush1.msra.mxu0 %v960
        %1091 = vmatprep.subr.mxu0 0.0
        %1092 = vmatpush1.msra.mxu0 %v963
        %1093 = vmatprep.subr.mxu0 0.0
        %1094 = vmatpush1.msra.mxu0 %v966
        %1095 = vmatprep.subr.mxu0 0.0
        %1096 = vmatpush1.msra.mxu0 %v969
        %1097 = vmatprep.subr.mxu0 0.0
        %1098 = vmatpush1.msra.mxu0 %v972
        %1099 = vmatprep.subr.mxu0 0.0
        %1100 = vmatpush1.msra.mxu0 0.0
        %1101 = vmatprep.subr.mxu0 0.0
        %1102 = vmatpush1.msra.mxu0 0.0
        %1103 = vmatprep.subr.mxu0 0.0
        %1104 = vmatpush1.msra.mxu0 0.0
        %1105 = vmatprep.subr.mxu0 0.0
        %1106 = vmatpush1.msra.mxu0 0.0
        %1107 = vmatprep.subr.mxu0 0.0
        %1108 = vmatpush1.msra.mxu0 0.0
        %1109 = vmatprep.subr.mxu0 0.0
        %1110 = vmatpush1.msra.mxu0 0.0
        %1111 = vmatprep.subr.mxu0 0.0
        %1112 = vmatpush1.msra.mxu0 0.0
        %1113 = vmatprep.subr.mxu0 0.0
        %1114 = vmatpush1.msra.mxu0 0.0
        %1115 = vmatprep.subr.mxu0 0.0
        %1116 = vmatpush1.msra.mxu0 0.0
        %1117 = vmatprep.subr.mxu0 0.0
        %1118 = vmatpush1.msra.mxu0 0.0
        %1119 = vmatprep.subr.mxu0 0.0
        %1120 = vmatpush1.msra.mxu0 0.0
        %1121 = vmatprep.subr.mxu0 0.0
        %1122 = vmatpush1.msra.mxu0 0.0
        %1123 = vmatprep.subr.mxu0 0.0
        %1124 = vmatpush1.msra.mxu0 0.0
        %1125 = vmatprep.subr.mxu0 0.0
        %1126 = vmatpush1.msra.mxu0 0.0
        %1127 = vmatprep.subr.mxu0 0.0
        %1128 = vmatpush1.msra.mxu0 0.0
        %1129 = vmatprep.subr.mxu0 0.0
        %1130 = vmatpush1.msra.mxu0 0.0
        %1131 = vmatprep.mubr.f32.mxu0 0.0
        %1132 = vmatmul.mubr.f32.gmra.mrb[0].mxu0 %v923
        %v1133 = vpop.f32.mrb[0].mxu0
        %v1134 = vadd.f32 %v986, %v1133
        %v1135 = vpop.f32.mrb[0].mxu0
        %1136 = vmatprep.mubr.f32.mxu0 0.0
        %1137 = vmatmul.mubr.f32.gmra.mrb[0].mxu0 %v924
        %v1138 = vpop.f32.mrb[0].mxu0
        %v1139 = vadd.f32 %v986, %v1138
        %v1140 = vpop.f32.mrb[0].mxu0
        %1141 = vdwg.mxu0
        %v1142 = vmul.f32 %v1057, 0.17677669
        %v1143 = vmul.f32 %v1063, 0.17677669
        %vm1144 = vcmask 261120
        %v1146 = vsel %vm1144, %v1142, 0
        %v1149 = vsel %vm1144, %v1143, 0
        %v1152 = vsel %vm1144, %v1059, 0
        %v1155 = vsel %vm1144, %v1065, 0
        %1157 = vmatprep.subr.mxu0 0.0
        %1158 = vmatpush1.xpose.msra.mxu0 %v1152
        %1159 = vmatprep.subr.mxu0 0.0
        %1160 = vmatpush1.xpose.msra.mxu0 %v1155
        %1161 = vmatprep.subr.mxu0 0.0
        %1162 = vmatpush1.xpose.msra.mxu0 0.0
        %1163 = vmatprep.subr.mxu0 0.0
        %1164 = vmatpush1.xpose.msra.mxu0 0.0
        %1165 = vmatprep.subr.mxu0 0.0
        %1166 = vmatpush1.xpose.msra.mxu0 0.0
        %1167 = vmatprep.subr.mxu0 0.0
        %1168 = vmatpush1.xpose.msra.mxu0 0.0
        %1169 = vmatprep.subr.mxu0 0.0
        %1170 = vmatpush1.xpose.msra.mxu0 0.0
        %1171 = vmatprep.subr.mxu0 0.0
        %1172 = vmatpush1.xpose.msra.mxu0 0.0
        %1173 = vmatprep.subr.mxu0 0.0
        %1174 = vmatpush1.xpose.msra.mxu0 0.0
        %1175 = vmatprep.subr.mxu0 0.0
        %1176 = vmatpush1.xpose.msra.mxu0 0.0
        %1177 = vmatprep.subr.mxu0 0.0
        %1178 = vmatpush1.xpose.msra.mxu0 0.0
        %1179 = vmatprep.subr.mxu0 0.0
        %1180 = vmatpush1.xpose.msra.mxu0 0.0
        %1181 = vmatprep.subr.mxu0 0.0
        %1182 = vmatpush1.xpose.msra.mxu0 0.0
        %1183 = vmatprep.subr.mxu0 0.0
        %1184 = vmatpush1.xpose.msra.mxu0 0.0
        %1185 = vmatprep.subr.mxu0 0.0
        %1186 = vmatpush1.xpose.msra.mxu0 0.0
        %1187 = vmatprep.subr.mxu0 0.0
        %1188 = vmatpush1.xpose.msra.mxu0 0.0
        %1189 = vmatprep.subr.mxu0 0.0
        %1190 = vmatpush1.xpose.msra.mxu0 0.0
        %1191 = vmatprep.subr.mxu0 0.0
        %1192 = vmatpush1.xpose.msra.mxu0 0.0
        %1193 = vmatprep.subr.mxu0 0.0
        %1194 = vmatpush1.xpose.msra.mxu0 0.0
        %1195 = vmatprep.subr.mxu0 0.0
        %1196 = vmatpush1.xpose.msra.mxu0 0.0
        %1197 = vmatprep.subr.mxu0 0.0
        %1198 = vmatpush1.xpose.msra.mxu0 0.0
        %1199 = vmatprep.subr.mxu0 0.0
        %1200 = vmatpush1.xpose.msra.mxu0 0.0
        %1201 = vmatprep.subr.mxu0 0.0
        %1202 = vmatpush1.xpose.msra.mxu0 0.0
        %1203 = vmatprep.subr.mxu0 0.0
        %1204 = vmatpush1.xpose.msra.mxu0 0.0
        %1205 = vmatprep.subr.mxu0 0.0
        %1206 = vmatpush1.xpose.msra.mxu0 0.0
        %1207 = vmatprep.subr.mxu0 0.0
        %1208 = vmatpush1.xpose.msra.mxu0 0.0
        %1209 = vmatprep.subr.mxu0 0.0
        %1210 = vmatpush1.xpose.msra.mxu0 0.0
        %1211 = vmatprep.subr.mxu0 0.0
        %1212 = vmatpush1.xpose.msra.mxu0 0.0
        %1213 = vmatprep.subr.mxu0 0.0
        %1214 = vmatpush1.xpose.msra.mxu0 0.0
        %1215 = vmatprep.subr.mxu0 0.0
        %1216 = vmatpush1.xpose.msra.mxu0 0.0
        %1217 = vmatprep.subr.mxu0 0.0
        %1218 = vmatpush1.xpose.msra.mxu0 0.0
        %1219 = vmatprep.subr.mxu0 0.0
        %1220 = vmatpush1.xpose.msra.mxu0 0.0
        %1221 = vmatprep.mubr.f32.mxu0 0.0
        %1222 = vmatmul.mubr.f32.gmra.mrb[0].mxu0 %v1146
        %v1223 = vpop.f32.mrb[0].mxu0
        %v1224 = vadd.f32 0.0, %v1223
        %v1225 = vpop.f32.mrb[0].mxu0
        %1226 = vmatprep.mubr.f32.mxu0 0.0
        %1227 = vmatmul.mubr.f32.gmra.mrb[0].mxu0 %v1149
        %v1228 = vpop.f32.mrb[0].mxu0
        %v1229 = vadd.f32 0.0, %v1228
        %v1230 = vpop.f32.mrb[0].mxu0
        %1231 = vdwg.mxu0
        %vm1232 = vcmask 130048
        %v1233 = vsel %vm1232, %v1224, -inf
        %1234 = vmax.xlane.f32.xlu0 %v1233
        %v1235 = vpop.xlane.xlu0 %1234
        %v1236 = vsel %vm1232, %v1229, -inf
        %1237 = vmax.xlane.f32.xlu0 %v1236
        %v1238 = vpop.xlane.xlu0 %1237
        %v1239 = vsub.f32 %v1224, %v1235
        %v1240 = vsub.f32 %v1229, %v1238
        %v1241 = vmul.f32 %v1239, 1.442695
        %v1242 = vpow.pop %v1241
        %v1243 = vmul.f32 %v1240, 1.442695
        %v1244 = vpow.pop %v1243
        %v1245 = vsel %vm1232, %v1242, 0.0
        %1246 = vadd.xlane.f32.xlu0 %v1245
        %v1247 = vpop.xlane.xlu0 %1246
        %v1248 = vsel %vm1232, %v1244, 0.0
        %1249 = vadd.xlane.f32.xlu0 %v1248
        %v1250 = vpop.xlane.xlu0 %1249
        %v1251 = vrcp.pop %v1247
        %v1252 = vmul.f32 %v1242, %v1251
        %v1253 = vrcp.pop %v1250
        %v1254 = vmul.f32 %v1244, %v1253
        %v1256 = vsel %vm1232, %v1252, 0
        %v1259 = vsel %vm1232, %v1254, 0
        %1261 = vmatprep.subr.mxu0 0.0
        %1262 = vmatpush1.msra.mxu0 %v1134
        %1263 = vmatprep.subr.mxu0 0.0
        %1264 = vmatpush1.msra.mxu0 %v1139
        %1265 = vmatprep.subr.mxu0 0.0
        %1266 = vmatpush1.msra.mxu0 0.0
        %1267 = vmatprep.subr.mxu0 0.0
        %1268 = vmatpush1.msra.mxu0 0.0
        %1269 = vmatprep.subr.mxu0 0.0
        %1270 = vmatpush1.msra.mxu0 0.0
        %1271 = vmatprep.subr.mxu0 0.0
        %1272 = vmatpush1.msra.mxu0 0.0
        %1273 = vmatprep.subr.mxu0 0.0
        %1274 = vmatpush1.msra.mxu0 0.0
        %1275 = vmatprep.subr.mxu0 0.0
        %1276 = vmatpush1.msra.mxu0 0.0
        %1277 = vmatprep.subr.mxu0 0.0
        %1278 = vmatpush1.msra.mxu0 0.0
        %1279 = vmatprep.subr.mxu0 0.0
        %1280 = vmatpush1.msra.mxu0 0.0
        %1281 = vmatprep.subr.mxu0 0.0
        %1282 = vmatpush1.msra.mxu0 0.0
        %1283 = vmatprep.subr.mxu0 0.0
        %1284 = vmatpush1.msra.mxu0 0.0
        %1285 = vmatprep.subr.mxu0 0.0
        %1286 = vmatpush1.msra.mxu0 0.0
        %1287 = vmatprep.subr.mxu0 0.0
        %1288 = vmatpush1.msra.mxu0 0.0
        %1289 = vmatprep.subr.mxu0 0.0
        %1290 = vmatpush1.msra.mxu0 0.0
        %1291 = vmatprep.subr.mxu0 0.0
        %1292 = vmatpush1.msra.mxu0 0.0
        %1293 = vmatprep.subr.mxu0 0.0
        %1294 = vmatpush1.msra.mxu0 0.0
        %1295 = vmatprep.subr.mxu0 0.0
        %1296 = vmatpush1.msra.mxu0 0.0
        %1297 = vmatprep.subr.mxu0 0.0
        %1298 = vmatpush1.msra.mxu0 0.0
        %1299 = vmatprep.subr.mxu0 0.0
        %1300 = vmatpush1.msra.mxu0 0.0
        %1301 = vmatprep.subr.mxu0 0.0
        %1302 = vmatpush1.msra.mxu0 0.0
        %1303 = vmatprep.subr.mxu0 0.0
        %1304 = vmatpush1.msra.mxu0 0.0
        %1305 = vmatprep.subr.mxu0 0.0
        %1306 = vmatpush1.msra.mxu0 0.0
        %1307 = vmatprep.subr.mxu0 0.0
        %1308 = vmatpush1.msra.mxu0 0.0
        %1309 = vmatprep.subr.mxu0 0.0
        %1310 = vmatpush1.msra.mxu0 0.0
        %1311 = vmatprep.subr.mxu0 0.0
        %1312 = vmatpush1.msra.mxu0 0.0
        %1313 = vmatprep.subr.mxu0 0.0
        %1314 = vmatpush1.msra.mxu0 0.0
        %1315 = vmatprep.subr.mxu0 0.0
        %1316 = vmatpush1.msra.mxu0 0.0
        %1317 = vmatprep.subr.mxu0 0.0
        %1318 = vmatpush1.msra.mxu0 0.0
        %1319 = vmatprep.subr.mxu0 0.0
        %1320 = vmatpush1.msra.mxu0 0.0
        %1321 = vmatprep.subr.mxu0 0.0
        %1322 = vmatpush1.msra.mxu0 0.0
        %1323 = vmatprep.subr.mxu0 0.0
        %1324 = vmatpush1.msra.mxu0 0.0
        %1325 = vmatprep.mubr.f32.mxu0 0.0
        %1326 = vmatmul.mubr.f32.gmra.mrb[0].mxu0 %v1256
        %v1327 = vpop.f32.mrb[0].mxu0
        %v1328 = vadd.f32 0.0, %v1327
        %v1329 = vpop.f32.mrb[0].mxu0
        %1330 = vmatprep.mubr.f32.mxu0 0.0
        %1331 = vmatmul.mubr.f32.gmra.mrb[0].mxu0 %v1259
        %v1332 = vpop.f32.mrb[0].mxu0
        %v1333 = vadd.f32 0.0, %v1332
        %v1334 = vpop.f32.mrb[0].mxu0
        %1335 = vdwg.mxu0
        %v1336 = vld [vmem:[#allocation10] sm:$0xff]
        %v1337 = vld [vmem:[#allocation10 + $0x8] sm:$0xff]
        %v1338 = vld [vmem:[#allocation10 + $0x10] sm:$0xff]
        %v1339 = vld [vmem:[#allocation10 + $0x18] sm:$0xff]
        %1340 = vrot.lane.b32.xlu0 %v1142, 96
        %v1341 = vpop.permute.xlu0 %1340
        %1342 = vrot.lane.b32.xlu0 %v1143, 96
        %v1343 = vpop.permute.xlu0 %1342
        %1344 = vrot.lane.b32.xlu0 %v1059, 96
        %v1345 = vpop.permute.xlu0 %1344
        %1346 = vrot.lane.b32.xlu0 %v1065, 96
        %v1347 = vpop.permute.xlu0 %1346
        %v1348 = vsel %vm1144, %v1341, 0
        %v1350 = vsel %vm1144, %v1343, 0
        %v1352 = vsel %vm1144, %v1345, 0
        %v1354 = vsel %vm1144, %v1347, 0
        %1356 = vmatprep.subr.mxu0 0.0
        %1357 = vmatpush1.xpose.msra.mxu0 %v1352
        %1358 = vmatprep.subr.mxu0 0.0
        %1359 = vmatpush1.xpose.msra.mxu0 %v1354
        %1360 = vmatprep.subr.mxu0 0.0
        %1361 = vmatpush1.xpose.msra.mxu0 0.0
        %1362 = vmatprep.subr.mxu0 0.0
        %1363 = vmatpush1.xpose.msra.mxu0 0.0
        %1364 = vmatprep.subr.mxu0 0.0
        %1365 = vmatpush1.xpose.msra.mxu0 0.0
        %1366 = vmatprep.subr.mxu0 0.0
        %1367 = vmatpush1.xpose.msra.mxu0 0.0
        %1368 = vmatprep.subr.mxu0 0.0
        %1369 = vmatpush1.xpose.msra.mxu0 0.0
        %1370 = vmatprep.subr.mxu0 0.0
        %1371 = vmatpush1.xpose.msra.mxu0 0.0
        %1372 = vmatprep.subr.mxu0 0.0
        %1373 = vmatpush1.xpose.msra.mxu0 0.0
        %1374 = vmatprep.subr.mxu0 0.0
        %1375 = vmatpush1.xpose.msra.mxu0 0.0
        %1376 = vmatprep.subr.mxu0 0.0
        %1377 = vmatpush1.xpose.msra.mxu0 0.0
        %1378 = vmatprep.subr.mxu0 0.0
        %1379 = vmatpush1.xpose.msra.mxu0 0.0
        %1380 = vmatprep.subr.mxu0 0.0
        %1381 = vmatpush1.xpose.msra.mxu0 0.0
        %1382 = vmatprep.subr.mxu0 0.0
        %1383 = vmatpush1.xpose.msra.mxu0 0.0
        %1384 = vmatprep.subr.mxu0 0.0
        %1385 = vmatpush1.xpose.msra.mxu0 0.0
        %1386 = vmatprep.subr.mxu0 0.0
        %1387 = vmatpush1.xpose.msra.mxu0 0.0
        %1388 = vmatprep.subr.mxu0 0.0
        %1389 = vmatpush1.xpose.msra.mxu0 0.0
        %1390 = vmatprep.subr.mxu0 0.0
        %1391 = vmatpush1.xpose.msra.mxu0 0.0
        %1392 = vmatprep.subr.mxu0 0.0
        %1393 = vmatpush1.xpose.msra.mxu0 0.0
        %1394 = vmatprep.subr.mxu0 0.0
        %1395 = vmatpush1.xpose.msra.mxu0 0.0
        %1396 = vmatprep.subr.mxu0 0.0
        %1397 = vmatpush1.xpose.msra.mxu0 0.0
        %1398 = vmatprep.subr.mxu0 0.0
        %1399 = vmatpush1.xpose.msra.mxu0 0.0
        %1400 = vmatprep.subr.mxu0 0.0
        %1401 = vmatpush1.xpose.msra.mxu0 0.0
        %1402 = vmatprep.subr.mxu0 0.0
        %1403 = vmatpush1.xpose.msra.mxu0 0.0
        %1404 = vmatprep.subr.mxu0 0.0
        %1405 = vmatpush1.xpose.msra.mxu0 0.0
        %1406 = vmatprep.subr.mxu0 0.0
        %1407 = vmatpush1.xpose.msra.mxu0 0.0
        %1408 = vmatprep.subr.mxu0 0.0
        %1409 = vmatpush1.xpose.msra.mxu0 0.0
        %1410 = vmatprep.subr.mxu0 0.0
        %1411 = vmatpush1.xpose.msra.mxu0 0.0
        %1412 = vmatprep.subr.mxu0 0.0
        %1413 = vmatpush1.xpose.msra.mxu0 0.0
        %1414 = vmatprep.subr.mxu0 0.0
        %1415 = vmatpush1.xpose.msra.mxu0 0.0
        %1416 = vmatprep.subr.mxu0 0.0
        %1417 = vmatpush1.xpose.msra.mxu0 0.0
        %1418 = vmatprep.subr.mxu0 0.0
        %1419 = vmatpush1.xpose.msra.mxu0 0.0
        %1420 = vmatprep.mubr.f32.mxu0 0.0
        %1421 = vmatmul.mubr.f32.gmra.mrb[0].mxu0 %v1348
        %v1422 = vpop.f32.mrb[0].mxu0
        %v1423 = vadd.f32 0.0, %v1422
        %v1424 = vpop.f32.mrb[0].mxu0
        %1425 = vmatprep.mubr.f32.mxu0 0.0
        %1426 = vmatmul.mubr.f32.gmra.mrb[0].mxu0 %v1350
        %v1427 = vpop.f32.mrb[0].mxu0
        %v1428 = vadd.f32 0.0, %v1427
        %v1429 = vpop.f32.mrb[0].mxu0
        %1430 = vdwg.mxu0
        %v1431 = vsel %vm1232, %v1423, -inf
        %1432 = vmax.xlane.f32.xlu0 %v1431
        %v1433 = vpop.xlane.xlu0 %1432
        %v1434 = vsel %vm1232, %v1428, -inf
        %1435 = vmax.xlane.f32.xlu0 %v1434
        %v1436 = vpop.xlane.xlu0 %1435
        %v1437 = vsub.f32 %v1423, %v1433
        %v1438 = vsub.f32 %v1428, %v1436
        %v1439 = vmul.f32 %v1437, 1.442695
        %v1440 = vpow.pop %v1439
        %v1441 = vmul.f32 %v1438, 1.442695
        %v1442 = vpow.pop %v1441
        %v1443 = vsel %vm1232, %v1440, 0.0
        %1444 = vadd.xlane.f32.xlu0 %v1443
        %v1445 = vpop.xlane.xlu0 %1444
        %v1446 = vsel %vm1232, %v1442, 0.0
        %1447 = vadd.xlane.f32.xlu0 %v1446
        %v1448 = vpop.xlane.xlu0 %1447
        %v1449 = vrcp.pop %v1445
        %v1450 = vmul.f32 %v1440, %v1449
        %v1451 = vrcp.pop %v1448
        %v1452 = vmul.f32 %v1442, %v1451
        %1455 = vrot.lane.b32.xlu0 %v1134, 96
        %v1456 = vpop.permute.xlu0 %1455
        %1457 = vrot.lane.b32.xlu0 %v1139, 96
        %v1458 = vpop.permute.xlu0 %1457
        %v1462 = vsel %vm1232, %v1450, 0
        %v1465 = vsel %vm1232, %v1452, 0
        %1467 = vmatprep.subr.mxu0 0.0
        %1468 = vmatpush1.msra.mxu0 %v1456
        %1469 = vmatprep.subr.mxu0 0.0
        %1470 = vmatpush1.msra.mxu0 %v1458
        %1471 = vmatprep.subr.mxu0 0.0
        %1472 = vmatpush1.msra.mxu0 0.0
        %1473 = vmatprep.subr.mxu0 0.0
        %1474 = vmatpush1.msra.mxu0 0.0
        %1475 = vmatprep.subr.mxu0 0.0
        %1476 = vmatpush1.msra.mxu0 0.0
        %1477 = vmatprep.subr.mxu0 0.0
        %1478 = vmatpush1.msra.mxu0 0.0
        %1479 = vmatprep.subr.mxu0 0.0
        %1480 = vmatpush1.msra.mxu0 0.0
        %1481 = vmatprep.subr.mxu0 0.0
        %1482 = vmatpush1.msra.mxu0 0.0
        %1483 = vmatprep.subr.mxu0 0.0
        %1484 = vmatpush1.msra.mxu0 0.0
        %1485 = vmatprep.subr.mxu0 0.0
        %1486 = vmatpush1.msra.mxu0 0.0
        %1487 = vmatprep.subr.mxu0 0.0
        %1488 = vmatpush1.msra.mxu0 0.0
        %1489 = vmatprep.subr.mxu0 0.0
        %1490 = vmatpush1.msra.mxu0 0.0
        %1491 = vmatprep.subr.mxu0 0.0
        %1492 = vmatpush1.msra.mxu0 0.0
        %1493 = vmatprep.subr.mxu0 0.0
        %1494 = vmatpush1.msra.mxu0 0.0
        %1495 = vmatprep.subr.mxu0 0.0
        %1496 = vmatpush1.msra.mxu0 0.0
        %1497 = vmatprep.subr.mxu0 0.0
        %1498 = vmatpush1.msra.mxu0 0.0
        %1499 = vmatprep.subr.mxu0 0.0
        %1500 = vmatpush1.msra.mxu0 0.0
        %1501 = vmatprep.subr.mxu0 0.0
        %1502 = vmatpush1.msra.mxu0 0.0
        %1503 = vmatprep.subr.mxu0 0.0
        %1504 = vmatpush1.msra.mxu0 0.0
        %1505 = vmatprep.subr.mxu0 0.0
        %1506 = vmatpush1.msra.mxu0 0.0
        %1507 = vmatprep.subr.mxu0 0.0
        %1508 = vmatpush1.msra.mxu0 0.0
        %1509 = vmatprep.subr.mxu0 0.0
        %1510 = vmatpush1.msra.mxu0 0.0
        %1511 = vmatprep.subr.mxu0 0.0
        %1512 = vmatpush1.msra.mxu0 0.0
        %1513 = vmatprep.subr.mxu0 0.0
        %1514 = vmatpush1.msra.mxu0 0.0
        %1515 = vmatprep.subr.mxu0 0.0
        %1516 = vmatpush1.msra.mxu0 0.0
        %1517 = vmatprep.subr.mxu0 0.0
        %1518 = vmatpush1.msra.mxu0 0.0
        %1519 = vmatprep.subr.mxu0 0.0
        %1520 = vmatpush1.msra.mxu0 0.0
        %1521 = vmatprep.subr.mxu0 0.0
        %1522 = vmatpush1.msra.mxu0 0.0
        %1523 = vmatprep.subr.mxu0 0.0
        %1524 = vmatpush1.msra.mxu0 0.0
        %1525 = vmatprep.subr.mxu0 0.0
        %1526 = vmatpush1.msra.mxu0 0.0
        %1527 = vmatprep.subr.mxu0 0.0
        %1528 = vmatpush1.msra.mxu0 0.0
        %1529 = vmatprep.subr.mxu0 0.0
        %1530 = vmatpush1.msra.mxu0 0.0
        %1531 = vmatprep.mubr.f32.mxu0 0.0
        %1532 = vmatmul.mubr.f32.gmra.mrb[0].mxu0 %v1462
        %v1533 = vpop.f32.mrb[0].mxu0
        %v1534 = vadd.f32 0.0, %v1533
        %v1535 = vpop.f32.mrb[0].mxu0
        %1536 = vmatprep.mubr.f32.mxu0 0.0
        %1537 = vmatmul.mubr.f32.gmra.mrb[0].mxu0 %v1465
        %v1538 = vpop.f32.mrb[0].mxu0
        %v1539 = vadd.f32 0.0, %v1538
        %v1540 = vpop.f32.mrb[0].mxu0
        %1541 = vdwg.mxu0
        %v1542 = vld [vmem:[#allocation10 + $0x20] sm:$0xff]
        %v1543 = vld [vmem:[#allocation10 + $0x28] sm:$0xff]
        %v1544 = vld [vmem:[#allocation10 + $0x30] sm:$0xff]
        %v1545 = vld [vmem:[#allocation10 + $0x38] sm:$0xff]
        %v1547 = vsel %vm1144, %v1534, 0
        %v1550 = vsel %vm1144, %v1539, 0
        %1552 = vmatprep.subr.mxu0 0.0
        %1553 = vmatpush1.msra.mxu0 %v1542
        %1554 = vmatprep.subr.mxu0 0.0
        %1555 = vmatpush1.msra.mxu0 %v1543
        %1556 = vmatprep.subr.mxu0 0.0
        %1557 = vmatpush1.msra.mxu0 %v1544
        %1558 = vmatprep.subr.mxu0 0.0
        %1559 = vmatpush1.msra.mxu0 %v1545
        %1560 = vmatprep.subr.mxu0 0.0
        %1561 = vmatpush1.msra.mxu0 0.0
        %1562 = vmatprep.subr.mxu0 0.0
        %1563 = vmatpush1.msra.mxu0 0.0
        %1564 = vmatprep.subr.mxu0 0.0
        %1565 = vmatpush1.msra.mxu0 0.0
        %1566 = vmatprep.subr.mxu0 0.0
        %1567 = vmatpush1.msra.mxu0 0.0
        %1568 = vmatprep.subr.mxu0 0.0
        %1569 = vmatpush1.msra.mxu0 0.0
        %1570 = vmatprep.subr.mxu0 0.0
        %1571 = vmatpush1.msra.mxu0 0.0
        %1572 = vmatprep.subr.mxu0 0.0
        %1573 = vmatpush1.msra.mxu0 0.0
        %1574 = vmatprep.subr.mxu0 0.0
        %1575 = vmatpush1.msra.mxu0 0.0
        %1576 = vmatprep.subr.mxu0 0.0
        %1577 = vmatpush1.msra.mxu0 0.0
        %1578 = vmatprep.subr.mxu0 0.0
        %1579 = vmatpush1.msra.mxu0 0.0
        %1580 = vmatprep.subr.mxu0 0.0
        %1581 = vmatpush1.msra.mxu0 0.0
        %1582 = vmatprep.subr.mxu0 0.0
        %1583 = vmatpush1.msra.mxu0 0.0
        %1584 = vmatprep.subr.mxu0 0.0
        %1585 = vmatpush1.msra.mxu0 0.0
        %1586 = vmatprep.subr.mxu0 0.0
        %1587 = vmatpush1.msra.mxu0 0.0
        %1588 = vmatprep.subr.mxu0 0.0
        %1589 = vmatpush1.msra.mxu0 0.0
        %1590 = vmatprep.subr.mxu0 0.0
        %1591 = vmatpush1.msra.mxu0 0.0
        %1592 = vmatprep.subr.mxu0 0.0
        %1593 = vmatpush1.msra.mxu0 0.0
        %1594 = vmatprep.subr.mxu0 0.0
        %1595 = vmatpush1.msra.mxu0 0.0
        %1596 = vmatprep.subr.mxu0 0.0
        %1597 = vmatpush1.msra.mxu0 0.0
        %1598 = vmatprep.subr.mxu0 0.0
        %1599 = vmatpush1.msra.mxu0 0.0
        %1600 = vmatprep.subr.mxu0 0.0
        %1601 = vmatpush1.msra.mxu0 0.0
        %1602 = vmatprep.subr.mxu0 0.0
        %1603 = vmatpush1.msra.mxu0 0.0
        %1604 = vmatprep.subr.mxu0 0.0
        %1605 = vmatpush1.msra.mxu0 0.0
        %1606 = vmatprep.subr.mxu0 0.0
        %1607 = vmatpush1.msra.mxu0 0.0
        %1608 = vmatprep.subr.mxu0 0.0
        %1609 = vmatpush1.msra.mxu0 0.0
        %1610 = vmatprep.subr.mxu0 0.0
        %1611 = vmatpush1.msra.mxu0 0.0
        %1612 = vmatprep.subr.mxu0 0.0
        %1613 = vmatpush1.msra.mxu0 0.0
        %1614 = vmatprep.subr.mxu0 0.0
        %1615 = vmatpush1.msra.mxu0 0.0
        %1616 = vmatprep.mubr.f32.mxu0 0.0
        %1617 = vmatmul.mubr.f32.gmra.mrb[0].mxu0 %v1547
        %v1618 = vpop.f32.mrb[0].mxu0
        %v1619 = vadd.f32 0.0, %v1618
        %v1620 = vpop.f32.mrb[0].mxu0
        %1621 = vmatprep.mubr.f32.mxu0 0.0
        %1622 = vmatmul.mubr.f32.gmra.mrb[0].mxu0 %v1550
        %v1623 = vpop.f32.mrb[0].mxu0
        %v1624 = vadd.f32 0.0, %v1623
        %v1625 = vpop.f32.mrb[0].mxu0
        %1626 = vdwg.mxu0
        %v1628 = vsel %vm1144, %v1328, 0
        %v1631 = vsel %vm1144, %v1333, 0
        %1633 = vmatprep.subr.mxu0 0.0
        %1634 = vmatpush1.msra.mxu0 %v1336
        %1635 = vmatprep.subr.mxu0 0.0
        %1636 = vmatpush1.msra.mxu0 %v1337
        %1637 = vmatprep.subr.mxu0 0.0
        %1638 = vmatpush1.msra.mxu0 %v1338
        %1639 = vmatprep.subr.mxu0 0.0
        %1640 = vmatpush1.msra.mxu0 %v1339
        %1641 = vmatprep.subr.mxu0 0.0
        %1642 = vmatpush1.msra.mxu0 0.0
        %1643 = vmatprep.subr.mxu0 0.0
        %1644 = vmatpush1.msra.mxu0 0.0
        %1645 = vmatprep.subr.mxu0 0.0
        %1646 = vmatpush1.msra.mxu0 0.0
        %1647 = vmatprep.subr.mxu0 0.0
        %1648 = vmatpush1.msra.mxu0 0.0
        %1649 = vmatprep.subr.mxu0 0.0
        %1650 = vmatpush1.msra.mxu0 0.0
        %1651 = vmatprep.subr.mxu0 0.0
        %1652 = vmatpush1.msra.mxu0 0.0
        %1653 = vmatprep.subr.mxu0 0.0
        %1654 = vmatpush1.msra.mxu0 0.0
        %1655 = vmatprep.subr.mxu0 0.0
        %1656 = vmatpush1.msra.mxu0 0.0
        %1657 = vmatprep.subr.mxu0 0.0
        %1658 = vmatpush1.msra.mxu0 0.0
        %1659 = vmatprep.subr.mxu0 0.0
        %1660 = vmatpush1.msra.mxu0 0.0
        %1661 = vmatprep.subr.mxu0 0.0
        %1662 = vmatpush1.msra.mxu0 0.0
        %1663 = vmatprep.subr.mxu0 0.0
        %1664 = vmatpush1.msra.mxu0 0.0
        %1665 = vmatprep.subr.mxu0 0.0
        %1666 = vmatpush1.msra.mxu0 0.0
        %1667 = vmatprep.subr.mxu0 0.0
        %1668 = vmatpush1.msra.mxu0 0.0
        %1669 = vmatprep.subr.mxu0 0.0
        %1670 = vmatpush1.msra.mxu0 0.0
        %1671 = vmatprep.subr.mxu0 0.0
        %1672 = vmatpush1.msra.mxu0 0.0
        %1673 = vmatprep.subr.mxu0 0.0
        %1674 = vmatpush1.msra.mxu0 0.0
        %1675 = vmatprep.subr.mxu0 0.0
        %1676 = vmatpush1.msra.mxu0 0.0
        %1677 = vmatprep.subr.mxu0 0.0
        %1678 = vmatpush1.msra.mxu0 0.0
        %1679 = vmatprep.subr.mxu0 0.0
        %1680 = vmatpush1.msra.mxu0 0.0
        %1681 = vmatprep.subr.mxu0 0.0
        %1682 = vmatpush1.msra.mxu0 0.0
        %1683 = vmatprep.subr.mxu0 0.0
        %1684 = vmatpush1.msra.mxu0 0.0
        %1685 = vmatprep.subr.mxu0 0.0
        %1686 = vmatpush1.msra.mxu0 0.0
        %1687 = vmatprep.subr.mxu0 0.0
        %1688 = vmatpush1.msra.mxu0 0.0
        %1689 = vmatprep.subr.mxu0 0.0
        %1690 = vmatpush1.msra.mxu0 0.0
        %1691 = vmatprep.subr.mxu0 0.0
        %1692 = vmatpush1.msra.mxu0 0.0
        %1693 = vmatprep.subr.mxu0 0.0
        %1694 = vmatpush1.msra.mxu0 0.0
        %1695 = vmatprep.subr.mxu0 0.0
        %1696 = vmatpush1.msra.mxu0 0.0
        %1697 = vmatprep.mubr.f32.mxu0 0.0
        %1698 = vmatmul.mubr.f32.gmra.mrb[0].mxu0 %v1628
        %v1699 = vpop.f32.mrb[0].mxu0
        %v1700 = vadd.f32 %v1619, %v1699
        %v1701 = vpop.f32.mrb[0].mxu0
        %1702 = vmatprep.mubr.f32.mxu0 0.0
        %1703 = vmatmul.mubr.f32.gmra.mrb[0].mxu0 %v1631
        %v1704 = vpop.f32.mrb[0].mxu0
        %v1705 = vadd.f32 %v1624, %v1704
        %v1706 = vpop.f32.mrb[0].mxu0
        %1707 = vdwg.mxu0
        %1708 = vrot.lane.b32.xlu0 %v1142, 64
        %v1709 = vpop.permute.xlu0 %1708
        %1710 = vrot.lane.b32.xlu0 %v1143, 64
        %v1711 = vpop.permute.xlu0 %1710
        %1712 = vrot.lane.b32.xlu0 %v1059, 64
        %v1713 = vpop.permute.xlu0 %1712
        %1714 = vrot.lane.b32.xlu0 %v1065, 64
        %v1715 = vpop.permute.xlu0 %1714
        %v1716 = vsel %vm1144, %v1709, 0
        %v1718 = vsel %vm1144, %v1711, 0
        %v1720 = vsel %vm1144, %v1713, 0
        %v1722 = vsel %vm1144, %v1715, 0
        %1724 = vmatprep.subr.mxu0 0.0
        %1725 = vmatpush1.xpose.msra.mxu0 %v1720
        %1726 = vmatprep.subr.mxu0 0.0
        %1727 = vmatpush1.xpose.msra.mxu0 %v1722
        %1728 = vmatprep.subr.mxu0 0.0
        %1729 = vmatpush1.xpose.msra.mxu0 0.0
        %1730 = vmatprep.subr.mxu0 0.0
        %1731 = vmatpush1.xpose.msra.mxu0 0.0
        %1732 = vmatprep.subr.mxu0 0.0
        %1733 = vmatpush1.xpose.msra.mxu0 0.0
        %1734 = vmatprep.subr.mxu0 0.0
        %1735 = vmatpush1.xpose.msra.mxu0 0.0
        %1736 = vmatprep.subr.mxu0 0.0
        %1737 = vmatpush1.xpose.msra.mxu0 0.0
        %1738 = vmatprep.subr.mxu0 0.0
        %1739 = vmatpush1.xpose.msra.mxu0 0.0
        %1740 = vmatprep.subr.mxu0 0.0
        %1741 = vmatpush1.xpose.msra.mxu0 0.0
        %1742 = vmatprep.subr.mxu0 0.0
        %1743 = vmatpush1.xpose.msra.mxu0 0.0
        %1744 = vmatprep.subr.mxu0 0.0
        %1745 = vmatpush1.xpose.msra.mxu0 0.0
        %1746 = vmatprep.subr.mxu0 0.0
        %1747 = vmatpush1.xpose.msra.mxu0 0.0
        %1748 = vmatprep.subr.mxu0 0.0
        %1749 = vmatpush1.xpose.msra.mxu0 0.0
        %1750 = vmatprep.subr.mxu0 0.0
        %1751 = vmatpush1.xpose.msra.mxu0 0.0
        %1752 = vmatprep.subr.mxu0 0.0
        %1753 = vmatpush1.xpose.msra.mxu0 0.0
        %1754 = vmatprep.subr.mxu0 0.0
        %1755 = vmatpush1.xpose.msra.mxu0 0.0
        %1756 = vmatprep.subr.mxu0 0.0
        %1757 = vmatpush1.xpose.msra.mxu0 0.0
        %1758 = vmatprep.subr.mxu0 0.0
        %1759 = vmatpush1.xpose.msra.mxu0 0.0
        %1760 = vmatprep.subr.mxu0 0.0
        %1761 = vmatpush1.xpose.msra.mxu0 0.0
        %1762 = vmatprep.subr.mxu0 0.0
        %1763 = vmatpush1.xpose.msra.mxu0 0.0
        %1764 = vmatprep.subr.mxu0 0.0
        %1765 = vmatpush1.xpose.msra.mxu0 0.0
        %1766 = vmatprep.subr.mxu0 0.0
        %1767 = vmatpush1.xpose.msra.mxu0 0.0
        %1768 = vmatprep.subr.mxu0 0.0
        %1769 = vmatpush1.xpose.msra.mxu0 0.0
        %1770 = vmatprep.subr.mxu0 0.0
        %1771 = vmatpush1.xpose.msra.mxu0 0.0
        %1772 = vmatprep.subr.mxu0 0.0
        %1773 = vmatpush1.xpose.msra.mxu0 0.0
        %1774 = vmatprep.subr.mxu0 0.0
        %1775 = vmatpush1.xpose.msra.mxu0 0.0
        %1776 = vmatprep.subr.mxu0 0.0
        %1777 = vmatpush1.xpose.msra.mxu0 0.0
        %1778 = vmatprep.subr.mxu0 0.0
        %1779 = vmatpush1.xpose.msra.mxu0 0.0
        %1780 = vmatprep.subr.mxu0 0.0
        %1781 = vmatpush1.xpose.msra.mxu0 0.0
        %1782 = vmatprep.subr.mxu0 0.0
        %1783 = vmatpush1.xpose.msra.mxu0 0.0
        %1784 = vmatprep.subr.mxu0 0.0
        %1785 = vmatpush1.xpose.msra.mxu0 0.0
        %1786 = vmatprep.subr.mxu0 0.0
        %1787 = vmatpush1.xpose.msra.mxu0 0.0
        %1788 = vmatprep.mubr.f32.mxu0 0.0
        %1789 = vmatmul.mubr.f32.gmra.mrb[0].mxu0 %v1716
        %v1790 = vpop.f32.mrb[0].mxu0
        %v1791 = vadd.f32 0.0, %v1790
        %v1792 = vpop.f32.mrb[0].mxu0
        %1793 = vmatprep.mubr.f32.mxu0 0.0
        %1794 = vmatmul.mubr.f32.gmra.mrb[0].mxu0 %v1718
        %v1795 = vpop.f32.mrb[0].mxu0
        %v1796 = vadd.f32 0.0, %v1795
        %v1797 = vpop.f32.mrb[0].mxu0
        %1798 = vdwg.mxu0
        %v1799 = vsel %vm1232, %v1791, -inf
        %1800 = vmax.xlane.f32.xlu0 %v1799
        %v1801 = vpop.xlane.xlu0 %1800
        %v1802 = vsel %vm1232, %v1796, -inf
        %1803 = vmax.xlane.f32.xlu0 %v1802
        %v1804 = vpop.xlane.xlu0 %1803
        %v1805 = vsub.f32 %v1791, %v1801
        %v1806 = vsub.f32 %v1796, %v1804
        %v1807 = vmul.f32 %v1805, 1.442695
        %v1808 = vpow.pop %v1807
        %v1809 = vmul.f32 %v1806, 1.442695
        %v1810 = vpow.pop %v1809
        %v1811 = vsel %vm1232, %v1808, 0.0
        %1812 = vadd.xlane.f32.xlu0 %v1811
        %v1813 = vpop.xlane.xlu0 %1812
        %v1814 = vsel %vm1232, %v1810, 0.0
        %1815 = vadd.xlane.f32.xlu0 %v1814
        %v1816 = vpop.xlane.xlu0 %1815
        %v1817 = vrcp.pop %v1813
        %v1818 = vmul.f32 %v1808, %v1817
        %v1819 = vrcp.pop %v1816
        %v1820 = vmul.f32 %v1810, %v1819
        %1821 = vrot.lane.b32.xlu0 %v1134, 64
        %v1822 = vpop.permute.xlu0 %1821
        %1823 = vrot.lane.b32.xlu0 %v1139, 64
        %v1824 = vpop.permute.xlu0 %1823
        %v1828 = vsel %vm1232, %v1818, 0
        %v1831 = vsel %vm1232, %v1820, 0
        %1833 = vmatprep.subr.mxu0 0.0
        %1834 = vmatpush1.msra.mxu0 %v1822
        %1835 = vmatprep.subr.mxu0 0.0
        %1836 = vmatpush1.msra.mxu0 %v1824
        %1837 = vmatprep.subr.mxu0 0.0
        %1838 = vmatpush1.msra.mxu0 0.0
        %1839 = vmatprep.subr.mxu0 0.0
        %1840 = vmatpush1.msra.mxu0 0.0
        %1841 = vmatprep.subr.mxu0 0.0
        %1842 = vmatpush1.msra.mxu0 0.0
        %1843 = vmatprep.subr.mxu0 0.0
        %1844 = vmatpush1.msra.mxu0 0.0
        %1845 = vmatprep.subr.mxu0 0.0
        %1846 = vmatpush1.msra.mxu0 0.0
        %1847 = vmatprep.subr.mxu0 0.0
        %1848 = vmatpush1.msra.mxu0 0.0
        %1849 = vmatprep.subr.mxu0 0.0
        %1850 = vmatpush1.msra.mxu0 0.0
        %1851 = vmatprep.subr.mxu0 0.0
        %1852 = vmatpush1.msra.mxu0 0.0
        %1853 = vmatprep.subr.mxu0 0.0
        %1854 = vmatpush1.msra.mxu0 0.0
        %1855 = vmatprep.subr.mxu0 0.0
        %1856 = vmatpush1.msra.mxu0 0.0
        %1857 = vmatprep.subr.mxu0 0.0
        %1858 = vmatpush1.msra.mxu0 0.0
        %1859 = vmatprep.subr.mxu0 0.0
        %1860 = vmatpush1.msra.mxu0 0.0
        %1861 = vmatprep.subr.mxu0 0.0
        %1862 = vmatpush1.msra.mxu0 0.0
        %1863 = vmatprep.subr.mxu0 0.0
        %1864 = vmatpush1.msra.mxu0 0.0
        %1865 = vmatprep.subr.mxu0 0.0
        %1866 = vmatpush1.msra.mxu0 0.0
        %1867 = vmatprep.subr.mxu0 0.0
        %1868 = vmatpush1.msra.mxu0 0.0
        %1869 = vmatprep.subr.mxu0 0.0
        %1870 = vmatpush1.msra.mxu0 0.0
        %1871 = vmatprep.subr.mxu0 0.0
        %1872 = vmatpush1.msra.mxu0 0.0
        %1873 = vmatprep.subr.mxu0 0.0
        %1874 = vmatpush1.msra.mxu0 0.0
        %1875 = vmatprep.subr.mxu0 0.0
        %1876 = vmatpush1.msra.mxu0 0.0
        %1877 = vmatprep.subr.mxu0 0.0
        %1878 = vmatpush1.msra.mxu0 0.0
        %1879 = vmatprep.subr.mxu0 0.0
        %1880 = vmatpush1.msra.mxu0 0.0
        %1881 = vmatprep.subr.mxu0 0.0
        %1882 = vmatpush1.msra.mxu0 0.0
        %1883 = vmatprep.subr.mxu0 0.0
        %1884 = vmatpush1.msra.mxu0 0.0
        %1885 = vmatprep.subr.mxu0 0.0
        %1886 = vmatpush1.msra.mxu0 0.0
        %1887 = vmatprep.subr.mxu0 0.0
        %1888 = vmatpush1.msra.mxu0 0.0
        %1889 = vmatprep.subr.mxu0 0.0
        %1890 = vmatpush1.msra.mxu0 0.0
        %1891 = vmatprep.subr.mxu0 0.0
        %1892 = vmatpush1.msra.mxu0 0.0
        %1893 = vmatprep.subr.mxu0 0.0
        %1894 = vmatpush1.msra.mxu0 0.0
        %1895 = vmatprep.subr.mxu0 0.0
        %1896 = vmatpush1.msra.mxu0 0.0
        %1897 = vmatprep.mubr.f32.mxu0 0.0
        %1898 = vmatmul.mubr.f32.gmra.mrb[0].mxu0 %v1828
        %v1899 = vpop.f32.mrb[0].mxu0
        %v1900 = vadd.f32 0.0, %v1899
        %v1901 = vpop.f32.mrb[0].mxu0
        %1902 = vmatprep.mubr.f32.mxu0 0.0
        %1903 = vmatmul.mubr.f32.gmra.mrb[0].mxu0 %v1831
        %v1904 = vpop.f32.mrb[0].mxu0
        %v1905 = vadd.f32 0.0, %v1904
        %v1906 = vpop.f32.mrb[0].mxu0
        %1907 = vdwg.mxu0
        %v1908 = vld [vmem:[#allocation10 + $0x40] sm:$0xff]
        %v1909 = vld [vmem:[#allocation10 + $0x48] sm:$0xff]
        %v1910 = vld [vmem:[#allocation10 + $0x50] sm:$0xff]
        %v1911 = vld [vmem:[#allocation10 + $0x58] sm:$0xff]
        %v1913 = vsel %vm1144, %v1900, 0
        %v1916 = vsel %vm1144, %v1905, 0
        %1918 = vmatprep.subr.mxu0 0.0
        %1919 = vmatpush1.msra.mxu0 %v1908
        %1920 = vmatprep.subr.mxu0 0.0
        %1921 = vmatpush1.msra.mxu0 %v1909
        %1922 = vmatprep.subr.mxu0 0.0
        %1923 = vmatpush1.msra.mxu0 %v1910
        %1924 = vmatprep.subr.mxu0 0.0
        %1925 = vmatpush1.msra.mxu0 %v1911
        %1926 = vmatprep.subr.mxu0 0.0
        %1927 = vmatpush1.msra.mxu0 0.0
        %1928 = vmatprep.subr.mxu0 0.0
        %1929 = vmatpush1.msra.mxu0 0.0
        %1930 = vmatprep.subr.mxu0 0.0
        %1931 = vmatpush1.msra.mxu0 0.0
        %1932 = vmatprep.subr.mxu0 0.0
        %1933 = vmatpush1.msra.mxu0 0.0
        %1934 = vmatprep.subr.mxu0 0.0
        %1935 = vmatpush1.msra.mxu0 0.0
        %1936 = vmatprep.subr.mxu0 0.0
        %1937 = vmatpush1.msra.mxu0 0.0
        %1938 = vmatprep.subr.mxu0 0.0
        %1939 = vmatpush1.msra.mxu0 0.0
        %1940 = vmatprep.subr.mxu0 0.0
        %1941 = vmatpush1.msra.mxu0 0.0
        %1942 = vmatprep.subr.mxu0 0.0
        %1943 = vmatpush1.msra.mxu0 0.0
        %1944 = vmatprep.subr.mxu0 0.0
        %1945 = vmatpush1.msra.mxu0 0.0
        %1946 = vmatprep.subr.mxu0 0.0
        %1947 = vmatpush1.msra.mxu0 0.0
        %1948 = vmatprep.subr.mxu0 0.0
        %1949 = vmatpush1.msra.mxu0 0.0
        %1950 = vmatprep.subr.mxu0 0.0
        %1951 = vmatpush1.msra.mxu0 0.0
        %1952 = vmatprep.subr.mxu0 0.0
        %1953 = vmatpush1.msra.mxu0 0.0
        %1954 = vmatprep.subr.mxu0 0.0
        %1955 = vmatpush1.msra.mxu0 0.0
        %1956 = vmatprep.subr.mxu0 0.0
        %1957 = vmatpush1.msra.mxu0 0.0
        %1958 = vmatprep.subr.mxu0 0.0
        %1959 = vmatpush1.msra.mxu0 0.0
        %1960 = vmatprep.subr.mxu0 0.0
        %1961 = vmatpush1.msra.mxu0 0.0
        %1962 = vmatprep.subr.mxu0 0.0
        %1963 = vmatpush1.msra.mxu0 0.0
        %1964 = vmatprep.subr.mxu0 0.0
        %1965 = vmatpush1.msra.mxu0 0.0
        %1966 = vmatprep.subr.mxu0 0.0
        %1967 = vmatpush1.msra.mxu0 0.0
        %1968 = vmatprep.subr.mxu0 0.0
        %1969 = vmatpush1.msra.mxu0 0.0
        %1970 = vmatprep.subr.mxu0 0.0
        %1971 = vmatpush1.msra.mxu0 0.0
        %1972 = vmatprep.subr.mxu0 0.0
        %1973 = vmatpush1.msra.mxu0 0.0
        %1974 = vmatprep.subr.mxu0 0.0
        %1975 = vmatpush1.msra.mxu0 0.0
        %1976 = vmatprep.subr.mxu0 0.0
        %1977 = vmatpush1.msra.mxu0 0.0
        %1978 = vmatprep.subr.mxu0 0.0
        %1979 = vmatpush1.msra.mxu0 0.0
        %1980 = vmatprep.subr.mxu0 0.0
        %1981 = vmatpush1.msra.mxu0 0.0
        %1982 = vmatprep.mubr.f32.mxu0 0.0
        %1983 = vmatmul.mubr.f32.gmra.mrb[0].mxu0 %v1913
        %v1984 = vpop.f32.mrb[0].mxu0
        %v1985 = vadd.f32 0.0, %v1984
        %v1986 = vpop.f32.mrb[0].mxu0
        %1987 = vmatprep.mubr.f32.mxu0 0.0
        %1988 = vmatmul.mubr.f32.gmra.mrb[0].mxu0 %v1916
        %v1989 = vpop.f32.mrb[0].mxu0
        %v1990 = vadd.f32 0.0, %v1989
        %v1991 = vpop.f32.mrb[0].mxu0
        %1992 = vdwg.mxu0
        %v1993 = vadd.f32 %v1700, %v1985
        %v1994 = vadd.f32 %v1705, %v1990
        %1995 = vrot.lane.b32.xlu0 %v1142, 32
        %v1996 = vpop.permute.xlu0 %1995
        %1997 = vrot.lane.b32.xlu0 %v1143, 32
        %v1998 = vpop.permute.xlu0 %1997
        %1999 = vrot.lane.b32.xlu0 %v1059, 32
        %v2000 = vpop.permute.xlu0 %1999
        %2001 = vrot.lane.b32.xlu0 %v1065, 32
        %v2002 = vpop.permute.xlu0 %2001
        %v2003 = vsel %vm1144, %v1996, 0
        %v2005 = vsel %vm1144, %v1998, 0
        %v2007 = vsel %vm1144, %v2000, 0
        %v2009 = vsel %vm1144, %v2002, 0
        %2011 = vmatprep.subr.mxu0 0.0
        %2012 = vmatpush1.xpose.msra.mxu0 %v2007
        %2013 = vmatprep.subr.mxu0 0.0
        %2014 = vmatpush1.xpose.msra.mxu0 %v2009
        %2015 = vmatprep.subr.mxu0 0.0
        %2016 = vmatpush1.xpose.msra.mxu0 0.0
        %2017 = vmatprep.subr.mxu0 0.0
        %2018 = vmatpush1.xpose.msra.mxu0 0.0
        %2019 = vmatprep.subr.mxu0 0.0
        %2020 = vmatpush1.xpose.msra.mxu0 0.0
        %2021 = vmatprep.subr.mxu0 0.0
        %2022 = vmatpush1.xpose.msra.mxu0 0.0
        %2023 = vmatprep.subr.mxu0 0.0
        %2024 = vmatpush1.xpose.msra.mxu0 0.0
        %2025 = vmatprep.subr.mxu0 0.0
        %2026 = vmatpush1.xpose.msra.mxu0 0.0
        %2027 = vmatprep.subr.mxu0 0.0
        %2028 = vmatpush1.xpose.msra.mxu0 0.0
        %2029 = vmatprep.subr.mxu0 0.0
        %2030 = vmatpush1.xpose.msra.mxu0 0.0
        %2031 = vmatprep.subr.mxu0 0.0
        %2032 = vmatpush1.xpose.msra.mxu0 0.0
        %2033 = vmatprep.subr.mxu0 0.0
        %2034 = vmatpush1.xpose.msra.mxu0 0.0
        %2035 = vmatprep.subr.mxu0 0.0
        %2036 = vmatpush1.xpose.msra.mxu0 0.0
        %2037 = vmatprep.subr.mxu0 0.0
        %2038 = vmatpush1.xpose.msra.mxu0 0.0
        %2039 = vmatprep.subr.mxu0 0.0
        %2040 = vmatpush1.xpose.msra.mxu0 0.0
        %2041 = vmatprep.subr.mxu0 0.0
        %2042 = vmatpush1.xpose.msra.mxu0 0.0
        %2043 = vmatprep.subr.mxu0 0.0
        %2044 = vmatpush1.xpose.msra.mxu0 0.0
        %2045 = vmatprep.subr.mxu0 0.0
        %2046 = vmatpush1.xpose.msra.mxu0 0.0
        %2047 = vmatprep.subr.mxu0 0.0
        %2048 = vmatpush1.xpose.msra.mxu0 0.0
        %2049 = vmatprep.subr.mxu0 0.0
        %2050 = vmatpush1.xpose.msra.mxu0 0.0
        %2051 = vmatprep.subr.mxu0 0.0
        %2052 = vmatpush1.xpose.msra.mxu0 0.0
        %2053 = vmatprep.subr.mxu0 0.0
        %2054 = vmatpush1.xpose.msra.mxu0 0.0
        %2055 = vmatprep.subr.mxu0 0.0
        %2056 = vmatpush1.xpose.msra.mxu0 0.0
        %2057 = vmatprep.subr.mxu0 0.0
        %2058 = vmatpush1.xpose.msra.mxu0 0.0
        %2059 = vmatprep.subr.mxu0 0.0
        %2060 = vmatpush1.xpose.msra.mxu0 0.0
        %2061 = vmatprep.subr.mxu0 0.0
        %2062 = vmatpush1.xpose.msra.mxu0 0.0
        %2063 = vmatprep.subr.mxu0 0.0
        %2064 = vmatpush1.xpose.msra.mxu0 0.0
        %2065 = vmatprep.subr.mxu0 0.0
        %2066 = vmatpush1.xpose.msra.mxu0 0.0
        %2067 = vmatprep.subr.mxu0 0.0
        %2068 = vmatpush1.xpose.msra.mxu0 0.0
        %2069 = vmatprep.subr.mxu0 0.0
        %2070 = vmatpush1.xpose.msra.mxu0 0.0
        %2071 = vmatprep.subr.mxu0 0.0
        %2072 = vmatpush1.xpose.msra.mxu0 0.0
        %2073 = vmatprep.subr.mxu0 0.0
        %2074 = vmatpush1.xpose.msra.mxu0 0.0
        %2075 = vmatprep.mubr.f32.mxu0 0.0
        %2076 = vmatmul.mubr.f32.gmra.mrb[0].mxu0 %v2003
        %v2077 = vpop.f32.mrb[0].mxu0
        %v2078 = vadd.f32 0.0, %v2077
        %v2079 = vpop.f32.mrb[0].mxu0
        %2080 = vmatprep.mubr.f32.mxu0 0.0
        %2081 = vmatmul.mubr.f32.gmra.mrb[0].mxu0 %v2005
        %v2082 = vpop.f32.mrb[0].mxu0
        %v2083 = vadd.f32 0.0, %v2082
        %v2084 = vpop.f32.mrb[0].mxu0
        %2085 = vdwg.mxu0
        %v2086 = vsel %vm1232, %v2078, -inf
        %2087 = vmax.xlane.f32.xlu0 %v2086
        %v2088 = vpop.xlane.xlu0 %2087
        %v2089 = vsel %vm1232, %v2083, -inf
        %2090 = vmax.xlane.f32.xlu0 %v2089
        %v2091 = vpop.xlane.xlu0 %2090
        %v2092 = vsub.f32 %v2078, %v2088
        %v2093 = vsub.f32 %v2083, %v2091
        %v2094 = vmul.f32 %v2092, 1.442695
        %v2095 = vpow.pop %v2094
        %v2096 = vmul.f32 %v2093, 1.442695
        %v2097 = vpow.pop %v2096
        %v2098 = vsel %vm1232, %v2095, 0.0
        %2099 = vadd.xlane.f32.xlu0 %v2098
        %v2100 = vpop.xlane.xlu0 %2099
        %v2101 = vsel %vm1232, %v2097, 0.0
        %2102 = vadd.xlane.f32.xlu0 %v2101
        %v2103 = vpop.xlane.xlu0 %2102
        %v2104 = vrcp.pop %v2100
        %v2105 = vmul.f32 %v2095, %v2104
        %v2106 = vrcp.pop %v2103
        %v2107 = vmul.f32 %v2097, %v2106
        %2108 = vrot.lane.b32.xlu0 %v1134, 32
        %v2109 = vpop.permute.xlu0 %2108
        %2110 = vrot.lane.b32.xlu0 %v1139, 32
        %v2111 = vpop.permute.xlu0 %2110
        %v2115 = vsel %vm1232, %v2105, 0
        %v2118 = vsel %vm1232, %v2107, 0
        %2120 = vmatprep.subr.mxu0 0.0
        %2121 = vmatpush1.msra.mxu0 %v2109
        %2122 = vmatprep.subr.mxu0 0.0
        %2123 = vmatpush1.msra.mxu0 %v2111
        %2124 = vmatprep.subr.mxu0 0.0
        %2125 = vmatpush1.msra.mxu0 0.0
        %2126 = vmatprep.subr.mxu0 0.0
        %2127 = vmatpush1.msra.mxu0 0.0
        %2128 = vmatprep.subr.mxu0 0.0
        %2129 = vmatpush1.msra.mxu0 0.0
        %2130 = vmatprep.subr.mxu0 0.0
        %2131 = vmatpush1.msra.mxu0 0.0
        %2132 = vmatprep.subr.mxu0 0.0
        %2133 = vmatpush1.msra.mxu0 0.0
        %2134 = vmatprep.subr.mxu0 0.0
        %2135 = vmatpush1.msra.mxu0 0.0
        %2136 = vmatprep.subr.mxu0 0.0
        %2137 = vmatpush1.msra.mxu0 0.0
        %2138 = vmatprep.subr.mxu0 0.0
        %2139 = vmatpush1.msra.mxu0 0.0
        %2140 = vmatprep.subr.mxu0 0.0
        %2141 = vmatpush1.msra.mxu0 0.0
        %2142 = vmatprep.subr.mxu0 0.0
        %2143 = vmatpush1.msra.mxu0 0.0
        %2144 = vmatprep.subr.mxu0 0.0
        %2145 = vmatpush1.msra.mxu0 0.0
        %2146 = vmatprep.subr.mxu0 0.0
        %2147 = vmatpush1.msra.mxu0 0.0
        %2148 = vmatprep.subr.mxu0 0.0
        %2149 = vmatpush1.msra.mxu0 0.0
        %2150 = vmatprep.subr.mxu0 0.0
        %2151 = vmatpush1.msra.mxu0 0.0
        %2152 = vmatprep.subr.mxu0 0.0
        %2153 = vmatpush1.msra.mxu0 0.0
        %2154 = vmatprep.subr.mxu0 0.0
        %2155 = vmatpush1.msra.mxu0 0.0
        %2156 = vmatprep.subr.mxu0 0.0
        %2157 = vmatpush1.msra.mxu0 0.0
        %2158 = vmatprep.subr.mxu0 0.0
        %2159 = vmatpush1.msra.mxu0 0.0
        %2160 = vmatprep.subr.mxu0 0.0
        %2161 = vmatpush1.msra.mxu0 0.0
        %2162 = vmatprep.subr.mxu0 0.0
        %2163 = vmatpush1.msra.mxu0 0.0
        %2164 = vmatprep.subr.mxu0 0.0
        %2165 = vmatpush1.msra.mxu0 0.0
        %2166 = vmatprep.subr.mxu0 0.0
        %2167 = vmatpush1.msra.mxu0 0.0
        %2168 = vmatprep.subr.mxu0 0.0
        %2169 = vmatpush1.msra.mxu0 0.0
        %2170 = vmatprep.subr.mxu0 0.0
        %2171 = vmatpush1.msra.mxu0 0.0
        %2172 = vmatprep.subr.mxu0 0.0
        %2173 = vmatpush1.msra.mxu0 0.0
        %2174 = vmatprep.subr.mxu0 0.0
        %2175 = vmatpush1.msra.mxu0 0.0
        %2176 = vmatprep.subr.mxu0 0.0
        %2177 = vmatpush1.msra.mxu0 0.0
        %2178 = vmatprep.subr.mxu0 0.0
        %2179 = vmatpush1.msra.mxu0 0.0
        %2180 = vmatprep.subr.mxu0 0.0
        %2181 = vmatpush1.msra.mxu0 0.0
        %2182 = vmatprep.subr.mxu0 0.0
        %2183 = vmatpush1.msra.mxu0 0.0
        %2184 = vmatprep.mubr.f32.mxu0 0.0
        %2185 = vmatmul.mubr.f32.gmra.mrb[0].mxu0 %v2115
        %v2186 = vpop.f32.mrb[0].mxu0
        %v2187 = vadd.f32 0.0, %v2186
        %v2188 = vpop.f32.mrb[0].mxu0
        %2189 = vmatprep.mubr.f32.mxu0 0.0
        %2190 = vmatmul.mubr.f32.gmra.mrb[0].mxu0 %v2118
        %v2191 = vpop.f32.mrb[0].mxu0
        %v2192 = vadd.f32 0.0, %v2191
        %v2193 = vpop.f32.mrb[0].mxu0
        %2194 = vdwg.mxu0
        %v2195 = vld [vmem:[#allocation10 + $0x60] sm:$0xff]
        %v2196 = vld [vmem:[#allocation10 + $0x68] sm:$0xff]
        %v2197 = vld [vmem:[#allocation10 + $0x70] sm:$0xff]
        %v2198 = vld [vmem:[#allocation10 + $0x78] sm:$0xff]
        %v2200 = vsel %vm1144, %v2187, 0
        %v2203 = vsel %vm1144, %v2192, 0
        %2205 = vmatprep.subr.mxu0 0.0
        %2206 = vmatpush1.msra.mxu0 %v2195
        %2207 = vmatprep.subr.mxu0 0.0
        %2208 = vmatpush1.msra.mxu0 %v2196
        %2209 = vmatprep.subr.mxu0 0.0
        %2210 = vmatpush1.msra.mxu0 %v2197
        %2211 = vmatprep.subr.mxu0 0.0
        %2212 = vmatpush1.msra.mxu0 %v2198
        %2213 = vmatprep.subr.mxu0 0.0
        %2214 = vmatpush1.msra.mxu0 0.0
        %2215 = vmatprep.subr.mxu0 0.0
        %2216 = vmatpush1.msra.mxu0 0.0
        %2217 = vmatprep.subr.mxu0 0.0
        %2218 = vmatpush1.msra.mxu0 0.0
        %2219 = vmatprep.subr.mxu0 0.0
        %2220 = vmatpush1.msra.mxu0 0.0
        %2221 = vmatprep.subr.mxu0 0.0
        %2222 = vmatpush1.msra.mxu0 0.0
        %2223 = vmatprep.subr.mxu0 0.0
        %2224 = vmatpush1.msra.mxu0 0.0
        %2225 = vmatprep.subr.mxu0 0.0
        %2226 = vmatpush1.msra.mxu0 0.0
        %2227 = vmatprep.subr.mxu0 0.0
        %2228 = vmatpush1.msra.mxu0 0.0
        %2229 = vmatprep.subr.mxu0 0.0
        %2230 = vmatpush1.msra.mxu0 0.0
        %2231 = vmatprep.subr.mxu0 0.0
        %2232 = vmatpush1.msra.mxu0 0.0
        %2233 = vmatprep.subr.mxu0 0.0
        %2234 = vmatpush1.msra.mxu0 0.0
        %2235 = vmatprep.subr.mxu0 0.0
        %2236 = vmatpush1.msra.mxu0 0.0
        %2237 = vmatprep.subr.mxu0 0.0
        %2238 = vmatpush1.msra.mxu0 0.0
        %2239 = vmatprep.subr.mxu0 0.0
        %2240 = vmatpush1.msra.mxu0 0.0
        %2241 = vmatprep.subr.mxu0 0.0
        %2242 = vmatpush1.msra.mxu0 0.0
        %2243 = vmatprep.subr.mxu0 0.0
        %2244 = vmatpush1.msra.mxu0 0.0
        %2245 = vmatprep.subr.mxu0 0.0
        %2246 = vmatpush1.msra.mxu0 0.0
        %2247 = vmatprep.subr.mxu0 0.0
        %2248 = vmatpush1.msra.mxu0 0.0
        %2249 = vmatprep.subr.mxu0 0.0
        %2250 = vmatpush1.msra.mxu0 0.0
        %2251 = vmatprep.subr.mxu0 0.0
        %2252 = vmatpush1.msra.mxu0 0.0
        %2253 = vmatprep.subr.mxu0 0.0
        %2254 = vmatpush1.msra.mxu0 0.0
        %2255 = vmatprep.subr.mxu0 0.0
        %2256 = vmatpush1.msra.mxu0 0.0
        %2257 = vmatprep.subr.mxu0 0.0
        %2258 = vmatpush1.msra.mxu0 0.0
        %2259 = vmatprep.subr.mxu0 0.0
        %2260 = vmatpush1.msra.mxu0 0.0
        %2261 = vmatprep.subr.mxu0 0.0
        %2262 = vmatpush1.msra.mxu0 0.0
        %2263 = vmatprep.subr.mxu0 0.0
        %2264 = vmatpush1.msra.mxu0 0.0
        %2265 = vmatprep.subr.mxu0 0.0
        %2266 = vmatpush1.msra.mxu0 0.0
        %2267 = vmatprep.subr.mxu0 0.0
        %2268 = vmatpush1.msra.mxu0 0.0
        %2269 = vmatprep.mubr.f32.mxu0 0.0
        %2270 = vmatmul.mubr.f32.gmra.mrb[0].mxu0 %v2200
        %v2271 = vpop.f32.mrb[0].mxu0
        %v2272 = vadd.f32 0.0, %v2271
        %v2273 = vpop.f32.mrb[0].mxu0
        %2274 = vmatprep.mubr.f32.mxu0 0.0
        %2275 = vmatmul.mubr.f32.gmra.mrb[0].mxu0 %v2203
        %v2276 = vpop.f32.mrb[0].mxu0
        %v2277 = vadd.f32 0.0, %v2276
        %v2278 = vpop.f32.mrb[0].mxu0
        %2279 = vdwg.mxu0
        %v2280 = vadd.f32 %v1993, %v2272
        %v2281 = vadd.f32 %v1994, %v2277
        %v2282 = vld [vmem:[%s7] sm:$0x1]
        %v2284 = vlaneseq
        %v2285 = vshrl.u32 %v2284, 7
        %v2286 = vsub.s32 0, %v2285
        %v2287 = vrot.slane %v2282, %v2286
        %v2289 = vadd.f32 %v2280, %v2287
        %v2290 = vadd.f32 %v2281, %v2287
        %v2291 = vlaneseq
        %v2292 = vshrl.u32 %v2291, 7
        %v2293 = vsub.s32 0, %v2292
        %v2294 = vrot.slane %v814, %v2293
        %v2295 = vmul.f32 %v2294, %v2289
        %v2296 = vmul.f32 %v2294, %v2290
        %v2297 = vadd.f32 %v538, %v2295
        %v2298 = vadd.f32 %v539, %v2296
        %2299 = vadd.xlane.f32.xlu0 %v2297
        %v2300 = vpop.xlane.xlu0 %2299
        %2301 = vadd.xlane.f32.xlu0 %v2298
        %v2302 = vpop.xlane.xlu0 %2301
        %v2303 = vmul.f32 %v2300, %v893
        %v2304 = vmul.f32 %v2302, %v893
        %v2305 = vsub.f32 %v2297, %v2303
        %v2306 = vsub.f32 %v2298, %v2304
        %v2307 = vmul.f32 %v2305, %v2305
        %v2308 = vmul.f32 %v2306, %v2306
        %2309 = vadd.xlane.f32.xlu0 %v2307
        %v2310 = vpop.xlane.xlu0 %2309
        %2311 = vadd.xlane.f32.xlu0 %v2308
        %v2312 = vpop.xlane.xlu0 %2311
        %v2313 = vmul.f32 %v2310, %v893
        %v2314 = vmul.f32 %v2312, %v893
        %v2315 = vadd.f32 %v2313, 1e-06
        %v2316 = vadd.f32 %v2314, 1e-06
        %v2317 = vrsqrt.pop %v2315
        %v2318 = vrsqrt.pop %v2316
        %v2319 = vmul.f32 %v2305, %v2317
        %v2320 = vmul.f32 %v2306, %v2318
        %v2321 = vadd.f32 %v885, 1.0
        %v2322 = vlaneseq
        %v2323 = vshrl.u32 %v2322, 7
        %v2324 = vsub.s32 0, %v2323
        %v2325 = vrot.slane %v2321, %v2324
        %v2326 = vmul.f32 %v2319, %v2325
        %v2327 = vmul.f32 %v2320, %v2325
        %v2328 = vlaneseq
        %v2329 = vshrl.u32 %v2328, 7
        %v2330 = vsub.s32 0, %v2329
        %v2331 = vrot.slane %v816, %v2330
        %v2332 = vadd.f32 %v2326, %v2331
        %v2333 = vadd.f32 %v2327, %v2331
        %v2334 = vld [vmem:[#allocation11] sm:$0xff]
        %v2335 = vld [vmem:[#allocation11 + $0x8] sm:$0xff]
        %v2336 = vld [vmem:[#allocation11 + $0x10] sm:$0xff]
        %v2337 = vld [vmem:[#allocation11 + $0x18] sm:$0xff]
        %v2338 = vld [vmem:[#allocation11 + $0x20] sm:$0xff]
        %v2339 = vld [vmem:[#allocation11 + $0x28] sm:$0xff]
        %v2340 = vld [vmem:[#allocation11 + $0x30] sm:$0xff]
        %v2341 = vld [vmem:[#allocation11 + $0x38] sm:$0xff]
        %v2342 = vld [vmem:[#allocation11 + $0x40] sm:$0xff]
        %v2343 = vld [vmem:[#allocation11 + $0x48] sm:$0xff]
        %v2344 = vld [vmem:[#allocation11 + $0x50] sm:$0xff]
        %v2345 = vld [vmem:[#allocation11 + $0x58] sm:$0xff]
        %v2346 = vld [vmem:[#allocation11 + $0x60] sm:$0xff]
        %v2347 = vld [vmem:[#allocation11 + $0x68] sm:$0xff]
        %v2348 = vld [vmem:[#allocation11 + $0x70] sm:$0xff]
        %v2349 = vld [vmem:[#allocation11 + $0x78] sm:$0xff]
        %v2350 = vld [vmem:[#allocation11 + $0x80] sm:$0xff]
        %v2351 = vld [vmem:[#allocation11 + $0x88] sm:$0xff]
        %v2352 = vld [vmem:[#allocation11 + $0x90] sm:$0xff]
        %v2353 = vld [vmem:[#allocation11 + $0x98] sm:$0xff]
        %v2354 = vld [vmem:[#allocation11 + $0xa0] sm:$0xff]
        %v2355 = vld [vmem:[#allocation11 + $0xa8] sm:$0xff]
        %v2356 = vld [vmem:[#allocation11 + $0xb0] sm:$0xff]
        %v2357 = vld [vmem:[#allocation11 + $0xb8] sm:$0xff]
        %v2358 = vld [vmem:[#allocation11 + $0xc0] sm:$0xff]
        %v2359 = vld [vmem:[#allocation11 + $0xc8] sm:$0xff]
        %v2360 = vld [vmem:[#allocation11 + $0xd0] sm:$0xff]
        %v2361 = vld [vmem:[#allocation11 + $0xd8] sm:$0xff]
        %v2362 = vld [vmem:[#allocation11 + $0xe0] sm:$0xff]
        %v2363 = vld [vmem:[#allocation11 + $0xe8] sm:$0xff]
        %v2364 = vld [vmem:[#allocation11 + $0xf0] sm:$0xff]
        %v2365 = vld [vmem:[#allocation11 + $0xf8] sm:$0xff]
        %v2366 = vld [vmem:[#allocation11 + $0x100] sm:$0xff]
        %v2367 = vld [vmem:[#allocation11 + $0x108] sm:$0xff]
        %v2368 = vld [vmem:[#allocation11 + $0x110] sm:$0xff]
        %v2369 = vld [vmem:[#allocation11 + $0x118] sm:$0xff]
        %v2370 = vld [vmem:[#allocation11 + $0x120] sm:$0xff]
        %v2371 = vld [vmem:[#allocation11 + $0x128] sm:$0xff]
        %v2372 = vld [vmem:[#allocation11 + $0x130] sm:$0xff]
        %v2373 = vld [vmem:[#allocation11 + $0x138] sm:$0xff]
        %v2374 = vld [vmem:[#allocation11 + $0x140] sm:$0xff]
        %v2375 = vld [vmem:[#allocation11 + $0x148] sm:$0xff]
        %v2376 = vld [vmem:[#allocation11 + $0x150] sm:$0xff]
        %v2377 = vld [vmem:[#allocation11 + $0x158] sm:$0xff]
        %v2378 = vld [vmem:[#allocation11 + $0x160] sm:$0xff]
        %v2379 = vld [vmem:[#allocation11 + $0x168] sm:$0xff]
        %v2380 = vld [vmem:[#allocation11 + $0x170] sm:$0xff]
        %v2381 = vld [vmem:[#allocation11 + $0x178] sm:$0xff]
        %v2382 = vld [vmem:[#allocation11 + $0x180] sm:$0xff]
        %v2383 = vld [vmem:[#allocation11 + $0x188] sm:$0xff]
        %v2384 = vld [vmem:[#allocation11 + $0x190] sm:$0xff]
        %v2385 = vld [vmem:[#allocation11 + $0x198] sm:$0xff]
        %v2386 = vld [vmem:[#allocation11 + $0x1a0] sm:$0xff]
        %v2387 = vld [vmem:[#allocation11 + $0x1a8] sm:$0xff]
        %v2388 = vld [vmem:[#allocation11 + $0x1b0] sm:$0xff]
        %v2389 = vld [vmem:[#allocation11 + $0x1b8] sm:$0xff]
        %v2390 = vld [vmem:[#allocation11 + $0x1c0] sm:$0xff]
        %v2391 = vld [vmem:[#allocation11 + $0x1c8] sm:$0xff]
        %v2392 = vld [vmem:[#allocation11 + $0x1d0] sm:$0xff]
        %v2393 = vld [vmem:[#allocation11 + $0x1d8] sm:$0xff]
        %v2394 = vld [vmem:[#allocation11 + $0x1e0] sm:$0xff]
        %v2395 = vld [vmem:[#allocation11 + $0x1e8] sm:$0xff]
        %v2396 = vld [vmem:[#allocation11 + $0x1f0] sm:$0xff]
        %v2397 = vld [vmem:[#allocation11 + $0x1f8] sm:$0xff]
        %v2398 = vld [vmem:[%s9] sm:$0xf]
        %v2400 = vlaneseq
        %v2401 = vshrl.u32 %v2400, 7
        %v2402 = vsub.s32 0, %v2401
        %v2403 = vrot.slane %v2398, %v2402
        %v2404 = vlaneseq
        %v2405 = vshrl.u32 %v2404, 7
        %v2406 = vsub.s32 1, %v2405
        %v2407 = vrot.slane %v2398, %v2406
        %v2408 = vlaneseq
        %v2409 = vshrl.u32 %v2408, 7
        %v2410 = vsub.s32 2, %v2409
        %v2411 = vrot.slane %v2398, %v2410
        %v2412 = vlaneseq
        %v2413 = vshrl.u32 %v2412, 7
        %v2414 = vsub.s32 3, %v2413
        %v2415 = vrot.slane %v2398, %v2414
        %2420 = vmatprep.subr.mxu0 %v2335
        %2421 = vmatpush1.msra.mxu0 %v2334
        %2422 = vmatprep.subr.mxu0 %v2339
        %2423 = vmatpush1.msra.mxu0 %v2338
        %2424 = vmatprep.subr.mxu0 %v2343
        %2425 = vmatpush1.msra.mxu0 %v2342
        %2426 = vmatprep.subr.mxu0 %v2347
        %2427 = vmatpush1.msra.mxu0 %v2346
        %2428 = vmatprep.subr.mxu0 %v2351
        %2429 = vmatpush1.msra.mxu0 %v2350
        %2430 = vmatprep.subr.mxu0 %v2355
        %2431 = vmatpush1.msra.mxu0 %v2354
        %2432 = vmatprep.subr.mxu0 %v2359
        %2433 = vmatpush1.msra.mxu0 %v2358
        %2434 = vmatprep.subr.mxu0 %v2363
        %2435 = vmatpush1.msra.mxu0 %v2362
        %2436 = vmatprep.subr.mxu0 %v2367
        %2437 = vmatpush1.msra.mxu0 %v2366
        %2438 = vmatprep.subr.mxu0 %v2371
        %2439 = vmatpush1.msra.mxu0 %v2370
        %2440 = vmatprep.subr.mxu0 %v2375
        %2441 = vmatpush1.msra.mxu0 %v2374
        %2442 = vmatprep.subr.mxu0 %v2379
        %2443 = vmatpush1.msra.mxu0 %v2378
        %2444 = vmatprep.subr.mxu0 %v2383
        %2445 = vmatpush1.msra.mxu0 %v2382
        %2446 = vmatprep.subr.mxu0 %v2387
        %2447 = vmatpush1.msra.mxu0 %v2386
        %2448 = vmatprep.subr.mxu0 %v2391
        %2449 = vmatpush1.msra.mxu0 %v2390
        %2450 = vmatprep.subr.mxu0 %v2395
        %2451 = vmatpush1.msra.mxu0 %v2394
        %2452 = vmatprep.subr.mxu0 0.0
        %2453 = vmatpush1.msra.mxu0 0.0
        %2454 = vmatprep.subr.mxu0 0.0
        %2455 = vmatpush1.msra.mxu0 0.0
        %2456 = vmatprep.subr.mxu0 0.0
        %2457 = vmatpush1.msra.mxu0 0.0
        %2458 = vmatprep.subr.mxu0 0.0
        %2459 = vmatpush1.msra.mxu0 0.0
        %2460 = vmatprep.subr.mxu0 0.0
        %2461 = vmatpush1.msra.mxu0 0.0
        %2462 = vmatprep.subr.mxu0 0.0
        %2463 = vmatpush1.msra.mxu0 0.0
        %2464 = vmatprep.subr.mxu0 0.0
        %2465 = vmatpush1.msra.mxu0 0.0
        %2466 = vmatprep.subr.mxu0 0.0
        %2467 = vmatpush1.msra.mxu0 0.0
        %2468 = vmatprep.subr.mxu0 0.0
        %2469 = vmatpush1.msra.mxu0 0.0
        %2470 = vmatprep.subr.mxu0 0.0
        %2471 = vmatpush1.msra.mxu0 0.0
        %2472 = vmatprep.subr.mxu0 0.0
        %2473 = vmatpush1.msra.mxu0 0.0
        %2474 = vmatprep.subr.mxu0 0.0
        %2475 = vmatpush1.msra.mxu0 0.0
        %2476 = vmatprep.subr.mxu0 0.0
        %2477 = vmatpush1.msra.mxu0 0.0
        %2478 = vmatprep.subr.mxu0 0.0
        %2479 = vmatpush1.msra.mxu0 0.0
        %2480 = vmatprep.subr.mxu0 0.0
        %2481 = vmatpush1.msra.mxu0 0.0
        %2482 = vmatprep.subr.mxu0 0.0
        %2483 = vmatpush1.msra.mxu0 0.0
        %2484 = vmatprep.mubr.f32.mxu0 0.0
        %2485 = vmatmul.mubr.f32.gmra.mrb[0].mxu0 %v2332
        %v2486 = vpop.f32.mrb[0].mxu0
        %v2487 = vadd.f32 %v2403, %v2486
        %v2488 = vpop.f32.mrb[0].mxu0
        %v2489 = vadd.f32 %v2407, %v2488
        %2490 = vmatprep.mubr.f32.mxu0 0.0
        %2491 = vmatmul.mubr.f32.gmra.mrb[0].mxu0 %v2333
        %v2492 = vpop.f32.mrb[0].mxu0
        %v2493 = vadd.f32 %v2403, %v2492
        %v2494 = vpop.f32.mrb[0].mxu0
        %v2495 = vadd.f32 %v2407, %v2494
        %2496 = vdwg.mxu0
        %2497 = vmatprep.subr.mxu0 %v2337
        %2498 = vmatpush1.msra.mxu0 %v2336
        %2499 = vmatprep.subr.mxu0 %v2341
        %2500 = vmatpush1.msra.mxu0 %v2340
        %2501 = vmatprep.subr.mxu0 %v2345
        %2502 = vmatpush1.msra.mxu0 %v2344
        %2503 = vmatprep.subr.mxu0 %v2349
        %2504 = vmatpush1.msra.mxu0 %v2348
        %2505 = vmatprep.subr.mxu0 %v2353
        %2506 = vmatpush1.msra.mxu0 %v2352
        %2507 = vmatprep.subr.mxu0 %v2357
        %2508 = vmatpush1.msra.mxu0 %v2356
        %2509 = vmatprep.subr.mxu0 %v2361
        %2510 = vmatpush1.msra.mxu0 %v2360
        %2511 = vmatprep.subr.mxu0 %v2365
        %2512 = vmatpush1.msra.mxu0 %v2364
        %2513 = vmatprep.subr.mxu0 %v2369
        %2514 = vmatpush1.msra.mxu0 %v2368
        %2515 = vmatprep.subr.mxu0 %v2373
        %2516 = vmatpush1.msra.mxu0 %v2372
        %2517 = vmatprep.subr.mxu0 %v2377
        %2518 = vmatpush1.msra.mxu0 %v2376
        %2519 = vmatprep.subr.mxu0 %v2381
        %2520 = vmatpush1.msra.mxu0 %v2380
        %2521 = vmatprep.subr.mxu0 %v2385
        %2522 = vmatpush1.msra.mxu0 %v2384
        %2523 = vmatprep.subr.mxu0 %v2389
        %2524 = vmatpush1.msra.mxu0 %v2388
        %2525 = vmatprep.subr.mxu0 %v2393
        %2526 = vmatpush1.msra.mxu0 %v2392
        %2527 = vmatprep.subr.mxu0 %v2397
        %2528 = vmatpush1.msra.mxu0 %v2396
        %2529 = vmatprep.subr.mxu0 0.0
        %2530 = vmatpush1.msra.mxu0 0.0
        %2531 = vmatprep.subr.mxu0 0.0
        %2532 = vmatpush1.msra.mxu0 0.0
        %2533 = vmatprep.subr.mxu0 0.0
        %2534 = vmatpush1.msra.mxu0 0.0
        %2535 = vmatprep.subr.mxu0 0.0
        %2536 = vmatpush1.msra.mxu0 0.0
        %2537 = vmatprep.subr.mxu0 0.0
        %2538 = vmatpush1.msra.mxu0 0.0
        %2539 = vmatprep.subr.mxu0 0.0
        %2540 = vmatpush1.msra.mxu0 0.0
        %2541 = vmatprep.subr.mxu0 0.0
        %2542 = vmatpush1.msra.mxu0 0.0
        %2543 = vmatprep.subr.mxu0 0.0
        %2544 = vmatpush1.msra.mxu0 0.0
        %2545 = vmatprep.subr.mxu0 0.0
        %2546 = vmatpush1.msra.mxu0 0.0
        %2547 = vmatprep.subr.mxu0 0.0
        %2548 = vmatpush1.msra.mxu0 0.0
        %2549 = vmatprep.subr.mxu0 0.0
        %2550 = vmatpush1.msra.mxu0 0.0
        %2551 = vmatprep.subr.mxu0 0.0
        %2552 = vmatpush1.msra.mxu0 0.0
        %2553 = vmatprep.subr.mxu0 0.0
        %2554 = vmatpush1.msra.mxu0 0.0
        %2555 = vmatprep.subr.mxu0 0.0
        %2556 = vmatpush1.msra.mxu0 0.0
        %2557 = vmatprep.subr.mxu0 0.0
        %2558 = vmatpush1.msra.mxu0 0.0
        %2559 = vmatprep.subr.mxu0 0.0
        %2560 = vmatpush1.msra.mxu0 0.0
        %2561 = vmatprep.mubr.f32.mxu0 0.0
        %2562 = vmatmul.mubr.f32.gmra.mrb[0].mxu0 %v2332
        %v2563 = vpop.f32.mrb[0].mxu0
        %v2564 = vadd.f32 %v2411, %v2563
        %v2565 = vpop.f32.mrb[0].mxu0
        %v2566 = vadd.f32 %v2415, %v2565
        %2567 = vmatprep.mubr.f32.mxu0 0.0
        %2568 = vmatmul.mubr.f32.gmra.mrb[0].mxu0 %v2333
        %v2569 = vpop.f32.mrb[0].mxu0
        %v2570 = vadd.f32 %v2411, %v2569
        %v2571 = vpop.f32.mrb[0].mxu0
        %v2572 = vadd.f32 %v2415, %v2571
        %2573 = vdwg.mxu0
        %v2574 = vmul.f32 %v2487, 0.5
        %v2575 = vmul.f32 %v2489, 0.5
        %v2576 = vmul.f32 %v2564, 0.5
        %v2577 = vmul.f32 %v2566, 0.5
        %v2578 = vmul.f32 %v2493, 0.5
        %v2579 = vmul.f32 %v2495, 0.5
        %v2580 = vmul.f32 %v2570, 0.5
        %v2581 = vmul.f32 %v2572, 0.5
        %v2582 = vmul.f32 %v2487, 0.044715
        %v2583 = vmul.f32 %v2489, 0.044715
        %v2584 = vmul.f32 %v2564, 0.044715
        %v2585 = vmul.f32 %v2566, 0.044715
        %v2586 = vmul.f32 %v2493, 0.044715
        %v2587 = vmul.f32 %v2495, 0.044715
        %v2588 = vmul.f32 %v2570, 0.044715
        %v2589 = vmul.f32 %v2572, 0.044715
        %v2590 = vmul.f32 %v2582, %v2487
        %v2591 = vmul.f32 %v2583, %v2489
        %v2592 = vmul.f32 %v2584, %v2564
        %v2593 = vmul.f32 %v2585, %v2566
        %v2594 = vmul.f32 %v2586, %v2493
        %v2595 = vmul.f32 %v2587, %v2495
        %v2596 = vmul.f32 %v2588, %v2570
        %v2597 = vmul.f32 %v2589, %v2572
        %v2598 = vmul.f32 %v2590, %v2487
        %v2599 = vmul.f32 %v2591, %v2489
        %v2600 = vmul.f32 %v2592, %v2564
        %v2601 = vmul.f32 %v2593, %v2566
        %v2602 = vmul.f32 %v2594, %v2493
        %v2603 = vmul.f32 %v2595, %v2495
        %v2604 = vmul.f32 %v2596, %v2570
        %v2605 = vmul.f32 %v2597, %v2572
        %v2606 = vadd.f32 %v2487, %v2598
        %v2607 = vadd.f32 %v2489, %v2599
        %v2608 = vadd.f32 %v2564, %v2600
        %v2609 = vadd.f32 %v2566, %v2601
        %v2610 = vadd.f32 %v2493, %v2602
        %v2611 = vadd.f32 %v2495, %v2603
        %v2612 = vadd.f32 %v2570, %v2604
        %v2613 = vadd.f32 %v2572, %v2605
        %v2614 = vmul.f32 %v2606, 0.7978846
        %v2615 = vmul.f32 %v2607, 0.7978846
        %v2616 = vmul.f32 %v2608, 0.7978846
        %v2617 = vmul.f32 %v2609, 0.7978846
        %v2618 = vmul.f32 %v2610, 0.7978846
        %v2619 = vmul.f32 %v2611, 0.7978846
        %v2620 = vmul.f32 %v2612, 0.7978846
        %v2621 = vmul.f32 %v2613, 0.7978846
        %v2622 = vtanh.pop %v2614
        %v2623 = vtanh.pop %v2615
        %v2624 = vtanh.pop %v2616
        %v2625 = vtanh.pop %v2617
        %v2626 = vtanh.pop %v2618
        %v2627 = vtanh.pop %v2619
        %v2628 = vtanh.pop %v2620
        %v2629 = vtanh.pop %v2621
        %v2630 = vadd.f32 %v2622, 1.0
        %v2631 = vadd.f32 %v2623, 1.0
        %v2632 = vadd.f32 %v2624, 1.0
        %v2633 = vadd.f32 %v2625, 1.0
        %v2634 = vadd.f32 %v2626, 1.0
        %v2635 = vadd.f32 %v2627, 1.0
        %v2636 = vadd.f32 %v2628, 1.0
        %v2637 = vadd.f32 %v2629, 1.0
        %v2638 = vmul.f32 %v2574, %v2630
        %v2639 = vmul.f32 %v2575, %v2631
        %v2640 = vmul.f32 %v2576, %v2632
        %v2641 = vmul.f32 %v2577, %v2633
        %v2642 = vmul.f32 %v2578, %v2634
        %v2643 = vmul.f32 %v2579, %v2635
        %v2644 = vmul.f32 %v2580, %v2636
        %v2645 = vmul.f32 %v2581, %v2637
        %v2646 = vld [vmem:[#allocation13] sm:$0xff]
        %v2647 = vld [vmem:[#allocation13 + $0x8] sm:$0xff]
        %v2648 = vld [vmem:[#allocation13 + $0x10] sm:$0xff]
        %v2649 = vld [vmem:[#allocation13 + $0x18] sm:$0xff]
        %v2650 = vld [vmem:[#allocation13 + $0x20] sm:$0xff]
        %v2651 = vld [vmem:[#allocation13 + $0x28] sm:$0xff]
        %v2652 = vld [vmem:[#allocation13 + $0x30] sm:$0xff]
        %v2653 = vld [vmem:[#allocation13 + $0x38] sm:$0xff]
        %v2654 = vld [vmem:[#allocation13 + $0x40] sm:$0xff]
        %v2655 = vld [vmem:[#allocation13 + $0x48] sm:$0xff]
        %v2656 = vld [vmem:[#allocation13 + $0x50] sm:$0xff]
        %v2657 = vld [vmem:[#allocation13 + $0x58] sm:$0xff]
        %v2658 = vld [vmem:[#allocation13 + $0x60] sm:$0xff]
        %v2659 = vld [vmem:[#allocation13 + $0x68] sm:$0xff]
        %v2660 = vld [vmem:[#allocation13 + $0x70] sm:$0xff]
        %v2661 = vld [vmem:[#allocation13 + $0x78] sm:$0xff]
        %v2662 = vld [vmem:[#allocation13 + $0x80] sm:$0xff]
        %v2663 = vld [vmem:[#allocation13 + $0x88] sm:$0xff]
        %v2664 = vld [vmem:[#allocation13 + $0x90] sm:$0xff]
        %v2665 = vld [vmem:[#allocation13 + $0x98] sm:$0xff]
        %v2666 = vld [vmem:[#allocation13 + $0xa0] sm:$0xff]
        %v2667 = vld [vmem:[#allocation13 + $0xa8] sm:$0xff]
        %v2668 = vld [vmem:[#allocation13 + $0xb0] sm:$0xff]
        %v2669 = vld [vmem:[#allocation13 + $0xb8] sm:$0xff]
        %v2670 = vld [vmem:[#allocation13 + $0xc0] sm:$0xff]
        %v2671 = vld [vmem:[#allocation13 + $0xc8] sm:$0xff]
        %v2672 = vld [vmem:[#allocation13 + $0xd0] sm:$0xff]
        %v2673 = vld [vmem:[#allocation13 + $0xd8] sm:$0xff]
        %v2674 = vld [vmem:[#allocation13 + $0xe0] sm:$0xff]
        %v2675 = vld [vmem:[#allocation13 + $0xe8] sm:$0xff]
        %v2676 = vld [vmem:[#allocation13 + $0xf0] sm:$0xff]
        %v2677 = vld [vmem:[#allocation13 + $0xf8] sm:$0xff]
        %v2678 = vld [vmem:[#allocation13 + $0x100] sm:$0xff]
        %v2679 = vld [vmem:[#allocation13 + $0x108] sm:$0xff]
        %v2680 = vld [vmem:[#allocation13 + $0x110] sm:$0xff]
        %v2681 = vld [vmem:[#allocation13 + $0x118] sm:$0xff]
        %v2682 = vld [vmem:[#allocation13 + $0x120] sm:$0xff]
        %v2683 = vld [vmem:[#allocation13 + $0x128] sm:$0xff]
        %v2684 = vld [vmem:[#allocation13 + $0x130] sm:$0xff]
        %v2685 = vld [vmem:[#allocation13 + $0x138] sm:$0xff]
        %v2686 = vld [vmem:[#allocation13 + $0x140] sm:$0xff]
        %v2687 = vld [vmem:[#allocation13 + $0x148] sm:$0xff]
        %v2688 = vld [vmem:[#allocation13 + $0x150] sm:$0xff]
        %v2689 = vld [vmem:[#allocation13 + $0x158] sm:$0xff]
        %v2690 = vld [vmem:[#allocation13 + $0x160] sm:$0xff]
        %v2691 = vld [vmem:[#allocation13 + $0x168] sm:$0xff]
        %v2692 = vld [vmem:[#allocation13 + $0x170] sm:$0xff]
        %v2693 = vld [vmem:[#allocation13 + $0x178] sm:$0xff]
        %v2694 = vld [vmem:[#allocation13 + $0x180] sm:$0xff]
        %v2695 = vld [vmem:[#allocation13 + $0x188] sm:$0xff]
        %v2696 = vld [vmem:[#allocation13 + $0x190] sm:$0xff]
        %v2697 = vld [vmem:[#allocation13 + $0x198] sm:$0xff]
        %v2698 = vld [vmem:[#allocation13 + $0x1a0] sm:$0xff]
        %v2699 = vld [vmem:[#allocation13 + $0x1a8] sm:$0xff]
        %v2700 = vld [vmem:[#allocation13 + $0x1b0] sm:$0xff]
        %v2701 = vld [vmem:[#allocation13 + $0x1b8] sm:$0xff]
        %v2702 = vld [vmem:[#allocation13 + $0x1c0] sm:$0xff]
        %v2703 = vld [vmem:[#allocation13 + $0x1c8] sm:$0xff]
        %v2704 = vld [vmem:[#allocation13 + $0x1d0] sm:$0xff]
        %v2705 = vld [vmem:[#allocation13 + $0x1d8] sm:$0xff]
        %v2706 = vld [vmem:[#allocation13 + $0x1e0] sm:$0xff]
        %v2707 = vld [vmem:[#allocation13 + $0x1e8] sm:$0xff]
        %v2708 = vld [vmem:[#allocation13 + $0x1f0] sm:$0xff]
        %v2709 = vld [vmem:[#allocation13 + $0x1f8] sm:$0xff]
        %v2710 = vld [vmem:[%s11] sm:$0x1]
        %v2712 = vlaneseq
        %v2713 = vshrl.u32 %v2712, 7
        %v2714 = vsub.s32 0, %v2713
        %v2715 = vrot.slane %v2710, %v2714
        %2717 = vmatprep.subr.mxu0 0.0
        %2718 = vmatpush1.msra.mxu0 %v2646
        %2719 = vmatprep.subr.mxu0 0.0
        %2720 = vmatpush1.msra.mxu0 %v2647
        %2721 = vmatprep.subr.mxu0 0.0
        %2722 = vmatpush1.msra.mxu0 %v2648
        %2723 = vmatprep.subr.mxu0 0.0
        %2724 = vmatpush1.msra.mxu0 %v2649
        %2725 = vmatprep.subr.mxu0 0.0
        %2726 = vmatpush1.msra.mxu0 %v2650
        %2727 = vmatprep.subr.mxu0 0.0
        %2728 = vmatpush1.msra.mxu0 %v2651
        %2729 = vmatprep.subr.mxu0 0.0
        %2730 = vmatpush1.msra.mxu0 %v2652
        %2731 = vmatprep.subr.mxu0 0.0
        %2732 = vmatpush1.msra.mxu0 %v2653
        %2733 = vmatprep.subr.mxu0 0.0
        %2734 = vmatpush1.msra.mxu0 %v2654
        %2735 = vmatprep.subr.mxu0 0.0
        %2736 = vmatpush1.msra.mxu0 %v2655
        %2737 = vmatprep.subr.mxu0 0.0
        %2738 = vmatpush1.msra.mxu0 %v2656
        %2739 = vmatprep.subr.mxu0 0.0
        %2740 = vmatpush1.msra.mxu0 %v2657
        %2741 = vmatprep.subr.mxu0 0.0
        %2742 = vmatpush1.msra.mxu0 %v2658
        %2743 = vmatprep.subr.mxu0 0.0
        %2744 = vmatpush1.msra.mxu0 %v2659
        %2745 = vmatprep.subr.mxu0 0.0
        %2746 = vmatpush1.msra.mxu0 %v2660
        %2747 = vmatprep.subr.mxu0 0.0
        %2748 = vmatpush1.msra.mxu0 %v2661
        %2749 = vmatprep.subr.mxu0 0.0
        %2750 = vmatpush1.msra.mxu0 %v2662
        %2751 = vmatprep.subr.mxu0 0.0
        %2752 = vmatpush1.msra.mxu0 %v2663
        %2753 = vmatprep.subr.mxu0 0.0
        %2754 = vmatpush1.msra.mxu0 %v2664
        %2755 = vmatprep.subr.mxu0 0.0
        %2756 = vmatpush1.msra.mxu0 %v2665
        %2757 = vmatprep.subr.mxu0 0.0
        %2758 = vmatpush1.msra.mxu0 %v2666
        %2759 = vmatprep.subr.mxu0 0.0
        %2760 = vmatpush1.msra.mxu0 %v2667
        %2761 = vmatprep.subr.mxu0 0.0
        %2762 = vmatpush1.msra.mxu0 %v2668
        %2763 = vmatprep.subr.mxu0 0.0
        %2764 = vmatpush1.msra.mxu0 %v2669
        %2765 = vmatprep.subr.mxu0 0.0
        %2766 = vmatpush1.msra.mxu0 %v2670
        %2767 = vmatprep.subr.mxu0 0.0
        %2768 = vmatpush1.msra.mxu0 %v2671
        %2769 = vmatprep.subr.mxu0 0.0
        %2770 = vmatpush1.msra.mxu0 %v2672
        %2771 = vmatprep.subr.mxu0 0.0
        %2772 = vmatpush1.msra.mxu0 %v2673
        %2773 = vmatprep.subr.mxu0 0.0
        %2774 = vmatpush1.msra.mxu0 %v2674
        %2775 = vmatprep.subr.mxu0 0.0
        %2776 = vmatpush1.msra.mxu0 %v2675
        %2777 = vmatprep.subr.mxu0 0.0
        %2778 = vmatpush1.msra.mxu0 %v2676
        %2779 = vmatprep.subr.mxu0 0.0
        %2780 = vmatpush1.msra.mxu0 %v2677
        %2781 = vmatprep.mubr.f32.mxu0 %v2639
        %2782 = vmatmul.mubr.f32.gmra.mrb[0].mxu0 %v2638
        %v2783 = vpop.f32.mrb[0].mxu0
        %v2784 = vadd.f32 %v2715, %v2783
        %v2785 = vpop.f32.mrb[0].mxu0
        %2786 = vmatprep.mubr.f32.mxu0 %v2643
        %2787 = vmatmul.mubr.f32.gmra.mrb[0].mxu0 %v2642
        %v2788 = vpop.f32.mrb[0].mxu0
        %v2789 = vadd.f32 %v2715, %v2788
        %v2790 = vpop.f32.mrb[0].mxu0
        %2791 = vdwg.mxu0
        %2792 = vmatprep.subr.mxu0 0.0
        %2793 = vmatpush1.msra.mxu0 %v2678
        %2794 = vmatprep.subr.mxu0 0.0
        %2795 = vmatpush1.msra.mxu0 %v2679
        %2796 = vmatprep.subr.mxu0 0.0
        %2797 = vmatpush1.msra.mxu0 %v2680
        %2798 = vmatprep.subr.mxu0 0.0
        %2799 = vmatpush1.msra.mxu0 %v2681
        %2800 = vmatprep.subr.mxu0 0.0
        %2801 = vmatpush1.msra.mxu0 %v2682
        %2802 = vmatprep.subr.mxu0 0.0
        %2803 = vmatpush1.msra.mxu0 %v2683
        %2804 = vmatprep.subr.mxu0 0.0
        %2805 = vmatpush1.msra.mxu0 %v2684
        %2806 = vmatprep.subr.mxu0 0.0
        %2807 = vmatpush1.msra.mxu0 %v2685
        %2808 = vmatprep.subr.mxu0 0.0
        %2809 = vmatpush1.msra.mxu0 %v2686
        %2810 = vmatprep.subr.mxu0 0.0
        %2811 = vmatpush1.msra.mxu0 %v2687
        %2812 = vmatprep.subr.mxu0 0.0
        %2813 = vmatpush1.msra.mxu0 %v2688
        %2814 = vmatprep.subr.mxu0 0.0
        %2815 = vmatpush1.msra.mxu0 %v2689
        %2816 = vmatprep.subr.mxu0 0.0
        %2817 = vmatpush1.msra.mxu0 %v2690
        %2818 = vmatprep.subr.mxu0 0.0
        %2819 = vmatpush1.msra.mxu0 %v2691
        %2820 = vmatprep.subr.mxu0 0.0
        %2821 = vmatpush1.msra.mxu0 %v2692
        %2822 = vmatprep.subr.mxu0 0.0
        %2823 = vmatpush1.msra.mxu0 %v2693
        %2824 = vmatprep.subr.mxu0 0.0
        %2825 = vmatpush1.msra.mxu0 %v2694
        %2826 = vmatprep.subr.mxu0 0.0
        %2827 = vmatpush1.msra.mxu0 %v2695
        %2828 = vmatprep.subr.mxu0 0.0
        %2829 = vmatpush1.msra.mxu0 %v2696
        %2830 = vmatprep.subr.mxu0 0.0
        %2831 = vmatpush1.msra.mxu0 %v2697
        %2832 = vmatprep.subr.mxu0 0.0
        %2833 = vmatpush1.msra.mxu0 %v2698
        %2834 = vmatprep.subr.mxu0 0.0
        %2835 = vmatpush1.msra.mxu0 %v2699
        %2836 = vmatprep.subr.mxu0 0.0
        %2837 = vmatpush1.msra.mxu0 %v2700
        %2838 = vmatprep.subr.mxu0 0.0
        %2839 = vmatpush1.msra.mxu0 %v2701
        %2840 = vmatprep.subr.mxu0 0.0
        %2841 = vmatpush1.msra.mxu0 %v2702
        %2842 = vmatprep.subr.mxu0 0.0
        %2843 = vmatpush1.msra.mxu0 %v2703
        %2844 = vmatprep.subr.mxu0 0.0
        %2845 = vmatpush1.msra.mxu0 %v2704
        %2846 = vmatprep.subr.mxu0 0.0
        %2847 = vmatpush1.msra.mxu0 %v2705
        %2848 = vmatprep.subr.mxu0 0.0
        %2849 = vmatpush1.msra.mxu0 %v2706
        %2850 = vmatprep.subr.mxu0 0.0
        %2851 = vmatpush1.msra.mxu0 %v2707
        %2852 = vmatprep.subr.mxu0 0.0
        %2853 = vmatpush1.msra.mxu0 %v2708
        %2854 = vmatprep.subr.mxu0 0.0
        %2855 = vmatpush1.msra.mxu0 %v2709
        %2856 = vmatprep.mubr.f32.mxu0 %v2641
        %2857 = vmatmul.mubr.f32.gmra.mrb[0].mxu0 %v2640
        %v2858 = vpop.f32.mrb[0].mxu0
        %v2859 = vadd.f32 %v2784, %v2858
        %v2860 = vpop.f32.mrb[0].mxu0
        %2861 = vmatprep.mubr.f32.mxu0 %v2645
        %2862 = vmatmul.mubr.f32.gmra.mrb[0].mxu0 %v2644
        %v2863 = vpop.f32.mrb[0].mxu0
        %v2864 = vadd.f32 %v2789, %v2863
        %v2865 = vpop.f32.mrb[0].mxu0
        %2866 = vdwg.mxu0
        %v2867 = vlaneseq
        %v2868 = vshrl.u32 %v2867, 7
        %v2869 = vsub.s32 0, %v2868
        %v2870 = vrot.slane %v887, %v2869
        %v2871 = vmul.f32 %v2870, %v2859
        %v2872 = vmul.f32 %v2870, %v2864
        %v2873 = vadd.f32 %v2297, %v2871
        %v2874 = vadd.f32 %v2298, %v2872
        %2875 = vst [vmem:[%s537] sm:$0xff] %v2873
        %2876 = vst [vmem:[%s537 + $0x8] sm:$0xff] %v2874
        %s2877 = sand.u32 %s304, 1
        %s2878 = scalar_lea.sflag [#allocation4], %s2877
        %s2879 = sand.u32 %s304, 1
        %s2880 = smul.addr %s2879, 16
        %s2881 = scalar_lea.vmem [#allocation14], %s2880
        // Predicated region
        $region97: #{tpu_custom_call.1} parent=67 // pred_check
          %p2882 = pneg %p314
        $region98: #{tpu_custom_call.1} parent=67 // pred_check_branch
          %2884 = sbr.rel (%p2882) target = $region100
        $region99: #{tpu_custom_call.1} parent=67 // pred_region
          %s2886 = ssub.s32 256, 256
          %2887 = vsyncadd %s2878, %s2886
          %s2888 = smul.addr %s34, 2
          %s2889 = smul.addr %s2888, 128
          %s2890 = scalar_lea.hbm %s12, %s2889
          %s2891 = sshll.u32 %s2881, 4
          %s2892 = int_to_ptr.vmem [resolvable:$true] %s2891
          %2897 = dma.vmem_to_hbm [thread:$0]  %s2892, 256, %s2890, %s2878, 128, 128, 8
        $region100: #{tpu_custom_call.1} parent=67 // pred_fallthru
          _
      $region68: #{tpu_custom_call.1} parent=5 // pred_fallthru
        _
      %p2898 = scmp.le.s32.totalorder 2, %s29
      // Predicated region
      $region101: #{tpu_custom_call.1} parent=5 // pred_check
        %p2899 = pneg %p2898
      $region102: #{tpu_custom_call.1} parent=5 // pred_check_branch
        %2901 = sbr.rel (%p2899) target = $region104
      $region103: #{tpu_custom_call.1} parent=5 // pred_region
        %s2902 = ssub.s32 %s29, 2
        // Predicated region
        $region105: #{tpu_custom_call.1} parent=103 // pred_check
          %p2903 = pneg %p320
        $region106: #{tpu_custom_call.1} parent=103 // pred_check_branch
          %2905 = sbr.rel (%p2903) target = $region108
        $region107: #{tpu_custom_call.1} parent=103 // pred_region
          %s2906 = sand.u32 %s305, 1
          %s2907 = scalar_lea.sflag [#allocation4], %s2906
          %s2908 = sand.u32 %s305, 1
          %s2909 = smul.addr %s2908, 16
          %s2910 = scalar_lea.vmem [#allocation14], %s2909
          %2911 = dma.done %s2907, 256
        $region108: #{tpu_custom_call.1} parent=103 // pred_fallthru
          _
      $region104: #{tpu_custom_call.1} parent=5 // pred_fallthru
        _
    $region6: #{tpu_custom_call.1} parent=1 // loop_footer
      %s33 = sadd.s32 1, %s29
    $region7: #{tpu_custom_call.1} parent=1 // loop_footer_branch
      %28 = sbr.rel target = $region3
    $region8: #{tpu_custom_call.1} parent=1 // loop_exit
      _
    %2912 = vsyncpa [#allocation3], 1
    %s2913 = scalar_lea.sflag [#allocation3], 1
    %2914 = vsyncpa %s2913, 1
    %2915 = vsyncpa [#allocation6], 1
    %s2916 = scalar_lea.sflag [#allocation6], 1
    %2917 = vsyncpa %s2916, 1
    %2918 = vsyncpa [#allocation9], 1
    %2919 = vsyncpa [#allocation12], 1
    %2920 = vsyncpa [#allocation4], 1
    %s2921 = scalar_lea.sflag [#allocation4], 1
    %2922 = vsyncpa %s2921, 1

</llo_original>
